<compile_context>
chip_gen: v7x
topology: tpu7x:2x2x1
jax: 0.10.0
libtpu: 0.0.40
codegen_flags: <defaults>
</compile_context>

<pallas_src>
import functools
import math

import jax
import jax.numpy as jnp
from jax.experimental import pallas as pl
from jax.experimental.pallas import tpu as pltpu


def _round_up(x, m):
    return -(-x // m) * m


# ----------------------------------------------------------------------------
# Pallas kernels
# ----------------------------------------------------------------------------

def _conv3x3_kernel(x_ref, w_ref, b_ref, y_ref, stat_ref, a_ref, *, wo, cp, hc, n_hc):
    """One image: 3x3 conv + bias + ReLU + per-image BN partial sums.

    x_ref:    (1, Hp, Wp, Cp)    spatially padded input, bf16
    w_ref:    (3, 3*Cp, CoutP)   H-tap major, W-taps folded into K, bf16
    b_ref:    (1, CoutP)         f32 bias
    y_ref:    (1, Ho*Wo, CoutP)  conv + bias + ReLU output (lane-dense CoutP)
    stat_ref: (1, 8, CoutP)      rows 0/1 = per-image sum / sum-of-squares (f32)
    a_ref:    (Hp, Wo, 3*Cp)     scratch: W-shifted, K-folded input slab
    """
    # Hoist the three W shifts once per image (the misaligned sublane slices
    # happen exactly once here, not inside the GEMM loop) and fold them into K.
    for j in range(3):
        a_ref[:, :, j * cp:(j + 1) * cp] = x_ref[0, :, j:j + wo, :]

    b = b_ref[...]
    coutp = b.shape[-1]
    kf = 3 * cp
    ssum = jnp.zeros((1, coutp), jnp.float32)
    ssq = jnp.zeros((1, coutp), jnp.float32)

    for c in range(n_hc):                       # bounded-M GEMM chunks (vreg pressure)
        r0 = c * hc
        acc = jnp.dot(a_ref[r0:r0 + hc].reshape(hc * wo, kf), w_ref[0],
                      preferred_element_type=jnp.float32)
        acc = acc + jnp.dot(a_ref[r0 + 1:r0 + 1 + hc].reshape(hc * wo, kf), w_ref[1],
                            preferred_element_type=jnp.float32)
        acc = acc + jnp.dot(a_ref[r0 + 2:r0 + 2 + hc].reshape(hc * wo, kf), w_ref[2],
                            preferred_element_type=jnp.float32)
        y = jnp.maximum(acc + b, 0.0)           # bias + ReLU epilogue, f32
        y_ref[:, r0 * wo:(r0 + hc) * wo, :] = y[None].astype(y_ref.dtype)
        # fused BatchNorm partial statistics from the exact f32 values
        ssum = ssum + jnp.sum(y, axis=0, keepdims=True)
        ssq = ssq + jnp.sum(y * y, axis=0, keepdims=True)

    stat_ref[...] = jnp.concatenate(
        [ssum, ssq, jnp.zeros((6, coutp), jnp.float32)], axis=0)[None]


def _bn_norm_kernel(x_ref, s_ref, o_ref):
    """Elementwise (x - mean) * rsqrt(var + eps); stats in rows 0/1 of s_ref."""
    s = s_ref[...]
    o_ref[...] = (x_ref[...].astype(jnp.float32) - s[0:1]) * s[1:2]


# ----------------------------------------------------------------------------
# op wrappers (called inside the single whole-forward jit)
# ----------------------------------------------------------------------------

def conv3x3_fused(x, w_fold, b, *, padding, out_dtype):
    """x: (N, H, W, Cp) NHWC, channel dim already padded to Cp = Kfold // 3.
    Returns (y (N, Ho*Wo, CoutP), stats (N, 8, CoutP), (Ho, Wo))."""
    n, h, w_in, cp = x.shape
    three, kf, coutp = w_fold.shape
    if kf != 3 * cp:
        raise ValueError("weight K-fold does not match input channel padding")

    p = 1 if padding else 0
    ho, wo = h + 2 * p - 2, w_in + 2 * p - 2
    hp, wp = h + 2 * p, w_in + 2 * p

    # spatial pad + bf16 cast (one fused XLA pass; also fuses the caller's
    # channel pad / BN normalize of the previous layer).
    xp = jnp.pad(x, ((0, 0), (p, p), (p, p), (0, 0))).astype(jnp.bfloat16)

    # rows per GEMM chunk: cap the live f32 accumulator at <= 512 x CoutP.
    hc = 1
    for d in range(ho, 0, -1):
        if ho % d == 0 and d * wo <= max(wo, 512):
            hc = d
            break
    n_hc = ho // hc

    kernel = functools.partial(_conv3x3_kernel, wo=wo, cp=cp, hc=hc, n_hc=n_hc)
    y, st = pl.pallas_call(
        kernel,
        out_shape=(jax.ShapeDtypeStruct((n, ho * wo, coutp), out_dtype),
                   jax.ShapeDtypeStruct((n, 8, coutp), jnp.float32)),
        grid_spec=pltpu.PrefetchScalarGridSpec(
            num_scalar_prefetch=0,
            grid=(n,),                                       # one image per step
            in_specs=[
                pl.BlockSpec((1, hp, wp, cp), lambda i: (i, 0, 0, 0)),
                pl.BlockSpec((3, kf, coutp), lambda i: (0, 0, 0)),   # resident weights
                pl.BlockSpec((1, coutp), lambda i: (0, 0)),
            ],
            out_specs=(
                pl.BlockSpec((1, ho * wo, coutp), lambda i: (i, 0, 0)),
                pl.BlockSpec((1, 8, coutp), lambda i: (i, 0, 0)),
            ),
            scratch_shapes=[pltpu.VMEM((hp, wo, kf), jnp.bfloat16)],
        ),
        compiler_params=pltpu.CompilerParams(
            dimension_semantics=("parallel",),               # images across cores (v7x)
            vmem_limit_bytes=32 * 1024 * 1024),
    )(xp, w_fold, b)
    return y, st, (ho, wo)


def _bn_finalize(partial_stats, count, eps=1e-5):
    """Combine per-image (8, C) partials -> per-channel mean and rsqrt(var+eps)."""
    s = jnp.sum(partial_stats, axis=0)             # (8, C)
    mean = s[0] / count
    var = s[1] / count - mean * mean               # biased variance (as torch BN)
    inv = jax.lax.rsqrt(jnp.maximum(var, 0.0) + eps)
    return mean, inv


def bn_normalize(r_flat, stats):
    """r_flat: (M, C) (bf16 or f32).  stats: (2, C) f32 [mean; rsqrt(var+eps)]."""
    m, c = r_flat.shape
    tb = m if m <= 1024 else 512                   # fixed tile, cdiv grid (no tiny tiles)
    return pl.pallas_call(
        _bn_norm_kernel,
        out_shape=jax.ShapeDtypeStruct((m, c), jnp.float32),
        grid_spec=pltpu.PrefetchScalarGridSpec(
            num_scalar_prefetch=0,
            grid=(pl.cdiv(m, tb),),
            in_specs=[pl.BlockSpec((tb, c), lambda i: (i, 0)),
                      pl.BlockSpec((2, c), lambda i: (0, 0))],
            out_specs=pl.BlockSpec((tb, c), lambda i: (i, 0)),
        ),
        compiler_params=pltpu.CompilerParams(
            dimension_semantics=("parallel",),
            vmem_limit_bytes=32 * 1024 * 1024),
    )(r_flat, stats)


# ----------------------------------------------------------------------------
# parameters (pre-transposed / pre-padded / pre-folded / pre-cast once)
# ----------------------------------------------------------------------------

def _prep_weight(w, cin_p, cout_p):
    """torch (Cout,Cin,3,3) f32 -> (3, 3*Cin_p, Cout_p) bf16, W-tap folded into K."""
    cout, cin, _, _ = w.shape
    wt = jnp.transpose(w, (2, 3, 1, 0))                              # (3,3,Cin,Cout)
    wt = jnp.pad(wt, ((0, 0), (0, 0), (0, cin_p - cin), (0, cout_p - cout)))
    return wt.reshape(3, 3 * cin_p, cout_p).astype(jnp.bfloat16)


def _prep_bias(b, cout_p):
    return jnp.pad(b, (0, cout_p - b.shape[0])).reshape(1, cout_p).astype(jnp.float32)


def make_params(key, in_chans, out_chans):
    k1, k2, k3, k4 = jax.random.split(key, 4)

    def conv_w(k, cout, cin):
        return jax.random.normal(k, (cout, cin, 3, 3), jnp.float32) / math.sqrt(cin * 9)

    w1 = conv_w(k1, out_chans, in_chans)
    w2 = conv_w(k2, out_chans, out_chans)
    b1 = 0.05 * jax.random.normal(k3, (out_chans,), jnp.float32)
    b2 = 0.05 * jax.random.normal(k4, (out_chans,), jnp.float32)

    cin_p = _round_up(in_chans, 128)      # lane-dense channels everywhere
    cout_p = _round_up(out_chans, 128)
    params = {"w1": _prep_weight(w1, cin_p, cout_p), "b1": _prep_bias(b1, cout_p),
              "w2": _prep_weight(w2, cout_p, cout_p), "b2": _prep_bias(b2, cout_p)}
    ref_params = {"w1": w1, "b1": b1, "w2": w2, "b2": b2}
    return params, ref_params


# ----------------------------------------------------------------------------
# whole forward (single jit)
# ----------------------------------------------------------------------------

@functools.partial(jax.jit, static_argnames=("out_chans", "padding", "batch_norm"))
def unet_conv_block(x_nchw, params, *, out_chans, padding=True, batch_norm=True):
    """Conv3x3 -> ReLU -> [BN] -> Conv3x3 -> ReLU -> [BN]; NCHW in / NCHW out."""
    eps = 1e-5
    x = jnp.transpose(x_nchw, (0, 2, 3, 1)).astype(jnp.float32)      # NCHW -> NHWC
    n, h, w, cin = x.shape
    cin_p = params["w1"].shape[1] // 3
    cout_p = params["w1"].shape[2]

    # ---- conv1 + bias + ReLU + fused BN partial stats ----
    x1 = jnp.pad(x, ((0, 0), (0, 0), (0, 0), (0, cin_p - cin)))
    r1, st1, (h1, w1d) = conv3x3_fused(x1, params["w1"], params["b1"],
                                       padding=padding, out_dtype=jnp.bfloat16)
    if batch_norm:
        mean1, inv1 = _bn_finalize(st1, n * h1 * w1d, eps)
        y1 = (r1.astype(jnp.float32) - mean1) * inv1   # folded into conv2 prep by XLA
    else:
        y1 = r1.astype(jnp.float32)
    y1 = y1.reshape(n, h1, w1d, cout_p)

    # ---- conv2 + bias + ReLU + fused BN partial stats ----
    r2, st2, (h2, w2d) = conv3x3_fused(
        y1, params["w2"], params["b2"], padding=padding,
        out_dtype=jnp.bfloat16 if batch_norm else jnp.float32)
    if batch_norm:
        mean2, inv2 = _bn_finalize(st2, n * h2 * w2d, eps)
        stats2 = jnp.stack([mean2, inv2], axis=0)                    # (2, CoutP)
        out_flat = bn_normalize(r2.reshape(n * h2 * w2d, cout_p), stats2)
    else:
        out_flat = r2.reshape(n * h2 * w2d, cout_p).astype(jnp.float32)

    out = out_flat[:, :out_chans].reshape(n, h2, w2d, out_chans)
    return jnp.transpose(out, (0, 3, 1, 2))                          # NHWC -> NCHW


# ----------------------------------------------------------------------------
# pure-JAX reference (f32) for a sanity check
# ----------------------------------------------------------------------------

def _reference(x_nchw, ref_params, padding=True, batch_norm=True, eps=1e-5):
    x = jnp.transpose(x_nchw, (0, 2, 3, 1)).astype(jnp.float32)
    pad = [(1, 1), (1, 1)] if padding else [(0, 0), (0, 0)]

    def conv_relu(t, w, b):
        y = jax.lax.conv_general_dilated(
            t, jnp.transpose(w, (2, 3, 1, 0)), (1, 1), pad,
            dimension_numbers=("NHWC", "HWIO", "NHWC"))
        return jnp.maximum(y + b, 0.0)

    def bn(t):
        mean = t.mean(axis=(0, 1, 2), keepdims=True)
        var = t.var(axis=(0, 1, 2), keepdims=True)
        return (t - mean) * jax.lax.rsqrt(var + eps)

    y = conv_relu(x, ref_params["w1"], ref_params["b1"])
    if batch_norm:
        y = bn(y)
    y = conv_relu(y, ref_params["w2"], ref_params["b2"])
    if batch_norm:
        y = bn(y)
    return jnp.transpose(y, (0, 3, 1, 2))


# ----------------------------------------------------------------------------

if __name__ == "__main__":
    key = jax.random.PRNGKey(0)
    kx, kp = jax.random.split(key)
    N, CIN, COUT, H, W = 2, 4, 16, 16, 16
    COUT = 32
    x = jax.random.normal(kx, (N, CIN, H, W), jnp.float32)
    params, ref_params = make_params(kp, CIN, COUT)

    out = jax.block_until_ready(
        unet_conv_block(x, params, out_chans=COUT, padding=True, batch_norm=True))
    assert out.shape == (N, COUT, H, W), out.shape
    assert out.dtype == jnp.float32
    assert bool(jnp.all(jnp.isfinite(out)))

    ref = _reference(x, ref_params, padding=True, batch_norm=True)
    err = float(jnp.max(jnp.abs(out - ref)))
    assert err < 0.25, f"max abs diff vs f32 reference too large: {err}"
    print("KERNEL_OK")
</pallas_src>

<mosaic_0001>
module attributes {stable_mosaic.version = 11 : i64} {
  func.func @_conv3x3_kernel(%arg0: i32, %arg1: memref<1x18x18x128xbf16, #tpu.memory_space<vmem>>, %arg2: memref<3x384x128xbf16, #tpu.memory_space<vmem>>, %arg3: memref<1x128xf32, #tpu.memory_space<vmem>>, %arg4: memref<1x256x128xbf16, #tpu.memory_space<vmem>>, %arg5: memref<1x8x128xf32, #tpu.memory_space<vmem>>, %arg6: memref<18x16x384xbf16, #tpu.memory_space<vmem>>) attributes {dimension_semantics = [#tpu.dimension_semantics<parallel>], iteration_bounds = array<i64: 2>, scalar_prefetch = 0 : i64, scratch_operands = 1 : i64, tpu.core_type = #tpu.core_type<tc>, window_params = [{transform_indices = @transform_0, window_bounds = array<i64: 1, 18, 18, 128>}, {pipeline_mode = #tpu.pipeline_mode<synchronous>, transform_indices = @transform_1, window_bounds = array<i64: 3, 384, 128>}, {pipeline_mode = #tpu.pipeline_mode<synchronous>, transform_indices = @transform_2, window_bounds = array<i64: 1, 128>}, {transform_indices = @transform_3, window_bounds = array<i64: 1, 256, 128>}, {transform_indices = @transform_4, window_bounds = array<i64: 1, 8, 128>}]} {
    %c0 = arith.constant 0 : index
    %c0_0 = arith.constant 0 : index
    %c0_1 = arith.constant 0 : index
    %c0_2 = arith.constant 0 : index
    %0 = vector.load %arg1[%c0, %c0_0, %c0_1, %c0_2] : memref<1x18x18x128xbf16, #tpu.memory_space<vmem>>, vector<1x18x16x128xbf16>
    %1 = vector.shape_cast %0 : vector<1x18x16x128xbf16> to vector<18x16x128xbf16>
    %c0_3 = arith.constant 0 : index
    %c0_4 = arith.constant 0 : index
    %c0_5 = arith.constant 0 : index
    %2 = vector.load %arg6[%c0_3, %c0_4, %c0_5] : memref<18x16x384xbf16, #tpu.memory_space<vmem>>, vector<18x16x128xbf16>
    tpu.vector_store %arg6[%c0_3, %c0_4, %c0_5], %1 {strides = array<i32>} : memref<18x16x384xbf16, #tpu.memory_space<vmem>>, vector<18x16x128xbf16>,
    %c0_6 = arith.constant 0 : index
    %c0_7 = arith.constant 0 : index
    %c1 = arith.constant 1 : index
    %c0_8 = arith.constant 0 : index
    %3 = vector.load %arg1[%c0_6, %c0_7, %c1, %c0_8] : memref<1x18x18x128xbf16, #tpu.memory_space<vmem>>, vector<1x18x16x128xbf16>
    %4 = vector.shape_cast %3 : vector<1x18x16x128xbf16> to vector<18x16x128xbf16>
    %c0_9 = arith.constant 0 : index
    %c0_10 = arith.constant 0 : index
    %c128 = arith.constant 128 : index
    %5 = vector.load %arg6[%c0_9, %c0_10, %c128] : memref<18x16x384xbf16, #tpu.memory_space<vmem>>, vector<18x16x128xbf16>
    tpu.vector_store %arg6[%c0_9, %c0_10, %c128], %4 {strides = array<i32>} : memref<18x16x384xbf16, #tpu.memory_space<vmem>>, vector<18x16x128xbf16>,
    %c0_11 = arith.constant 0 : index
    %c0_12 = arith.constant 0 : index
    %c2 = arith.constant 2 : index
    %c0_13 = arith.constant 0 : index
    %6 = vector.load %arg1[%c0_11, %c0_12, %c2, %c0_13] : memref<1x18x18x128xbf16, #tpu.memory_space<vmem>>, vector<1x18x16x128xbf16>
    %7 = vector.shape_cast %6 : vector<1x18x16x128xbf16> to vector<18x16x128xbf16>
    %c0_14 = arith.constant 0 : index
    %c0_15 = arith.constant 0 : index
    %c256 = arith.constant 256 : index
    %8 = vector.load %arg6[%c0_14, %c0_15, %c256] : memref<18x16x384xbf16, #tpu.memory_space<vmem>>, vector<18x16x128xbf16>
    tpu.vector_store %arg6[%c0_14, %c0_15, %c256], %7 {strides = array<i32>} : memref<18x16x384xbf16, #tpu.memory_space<vmem>>, vector<18x16x128xbf16>,
    %c0_16 = arith.constant 0 : index
    %c0_17 = arith.constant 0 : index
    %9 = vector.load %arg3[%c0_16, %c0_17] : memref<1x128xf32, #tpu.memory_space<vmem>>, vector<1x128xf32>
    %cst = arith.constant 0.000000e+00 : f32
    %10 = vector.broadcast %cst : f32 to vector<1x128xf32>
    %cst_18 = arith.constant 0.000000e+00 : f32
    %11 = vector.broadcast %cst_18 : f32 to vector<1x128xf32>
    %c0_19 = arith.constant 0 : index
    %c0_20 = arith.constant 0 : index
    %c0_21 = arith.constant 0 : index
    %12 = vector.load %arg6[%c0_19, %c0_20, %c0_21] : memref<18x16x384xbf16, #tpu.memory_space<vmem>>, vector<16x16x384xbf16>
    %13 = vector.shape_cast %12 : vector<16x16x384xbf16> to vector<256x384xbf16>
    %c0_22 = arith.constant 0 : index
    %c0_23 = arith.constant 0 : index
    %c0_24 = arith.constant 0 : index
    %14 = vector.load %arg2[%c0_22, %c0_23, %c0_24] : memref<3x384x128xbf16, #tpu.memory_space<vmem>>, vector<1x384x128xbf16>
    %15 = vector.shape_cast %14 : vector<1x384x128xbf16> to vector<384x128xbf16>
    %cst_25 = arith.constant dense<0.000000e+00> : vector<256x128xf32>
    %16 = tpu.matmul %13, %15, %cst_25 {dimension_numbers = #tpu.dot_dimension_numbers<[1], [0], [0], [1], [0, 0, 1, 1], [], []>} : vector<256x384xbf16>, vector<384x128xbf16>, vector<256x128xf32> -> vector<256x128xf32>
    %c1_26 = arith.constant 1 : index
    %c0_27 = arith.constant 0 : index
    %c0_28 = arith.constant 0 : index
    %17 = vector.load %arg6[%c1_26, %c0_27, %c0_28] : memref<18x16x384xbf16, #tpu.memory_space<vmem>>, vector<16x16x384xbf16>
    %18 = vector.shape_cast %17 : vector<16x16x384xbf16> to vector<256x384xbf16>
    %c1_29 = arith.constant 1 : index
    %c0_30 = arith.constant 0 : index
    %c0_31 = arith.constant 0 : index
    %19 = vector.load %arg2[%c1_29, %c0_30, %c0_31] : memref<3x384x128xbf16, #tpu.memory_space<vmem>>, vector<1x384x128xbf16>
    %20 = vector.shape_cast %19 : vector<1x384x128xbf16> to vector<384x128xbf16>
    %cst_32 = arith.constant dense<0.000000e+00> : vector<256x128xf32>
    %21 = tpu.matmul %18, %20, %cst_32 {dimension_numbers = #tpu.dot_dimension_numbers<[1], [0], [0], [1], [0, 0, 1, 1], [], []>} : vector<256x384xbf16>, vector<384x128xbf16>, vector<256x128xf32> -> vector<256x128xf32>
    %22 = arith.addf %16, %21 : vector<256x128xf32>
    %c2_33 = arith.constant 2 : index
    %c0_34 = arith.constant 0 : index
    %c0_35 = arith.constant 0 : index
    %23 = vector.load %arg6[%c2_33, %c0_34, %c0_35] : memref<18x16x384xbf16, #tpu.memory_space<vmem>>, vector<16x16x384xbf16>
    %24 = vector.shape_cast %23 : vector<16x16x384xbf16> to vector<256x384xbf16>
    %c2_36 = arith.constant 2 : index
    %c0_37 = arith.constant 0 : index
    %c0_38 = arith.constant 0 : index
    %25 = vector.load %arg2[%c2_36, %c0_37, %c0_38] : memref<3x384x128xbf16, #tpu.memory_space<vmem>>, vector<1x384x128xbf16>
    %26 = vector.shape_cast %25 : vector<1x384x128xbf16> to vector<384x128xbf16>
    %cst_39 = arith.constant dense<0.000000e+00> : vector<256x128xf32>
    %27 = tpu.matmul %24, %26, %cst_39 {dimension_numbers = #tpu.dot_dimension_numbers<[1], [0], [0], [1], [0, 0, 1, 1], [], []>} : vector<256x384xbf16>, vector<384x128xbf16>, vector<256x128xf32> -> vector<256x128xf32>
    %28 = arith.addf %22, %27 : vector<256x128xf32>
    %29 = vector.broadcast %9 : vector<1x128xf32> to vector<256x128xf32>
    %30 = arith.addf %28, %29 : vector<256x128xf32>
    %cst_40 = arith.constant 0.000000e+00 : f32
    %31 = vector.broadcast %cst_40 : f32 to vector<256x128xf32>
    %32 = arith.maximumf %30, %31 : vector<256x128xf32>
    %33 = vector.shape_cast %32 : vector<256x128xf32> to vector<1x256x128xf32>
    %34 = arith.truncf %33 : vector<1x256x128xf32> to vector<1x256x128xbf16>
    %c0_41 = arith.constant 0 : index
    %c0_42 = arith.constant 0 : index
    %c0_43 = arith.constant 0 : index
    %35 = vector.load %arg4[%c0_41, %c0_42, %c0_43] : memref<1x256x128xbf16, #tpu.memory_space<vmem>>, vector<1x256x128xbf16>
    tpu.vector_store %arg4[%c0_41, %c0_42, %c0_43], %34 {strides = array<i32>} : memref<1x256x128xbf16, #tpu.memory_space<vmem>>, vector<1x256x128xbf16>,
    %cst_44 = arith.constant dense<0.000000e+00> : vector<128xf32>
    %36 = vector.multi_reduction <add>, %32, %cst_44 [0] : vector<256x128xf32> to vector<128xf32>
    %37 = vector.shape_cast %36 : vector<128xf32> to vector<1x128xf32>
    %38 = arith.addf %10, %37 : vector<1x128xf32>
    %39 = arith.mulf %32, %32 : vector<256x128xf32>
    %cst_45 = arith.constant dense<0.000000e+00> : vector<128xf32>
    %40 = vector.multi_reduction <add>, %39, %cst_45 [0] : vector<256x128xf32> to vector<128xf32>
    %41 = vector.shape_cast %40 : vector<128xf32> to vector<1x128xf32>
    %42 = arith.addf %11, %41 : vector<1x128xf32>
    %cst_46 = arith.constant 0.000000e+00 : f32
    %43 = vector.broadcast %cst_46 : f32 to vector<6x128xf32>
    %44 = tpu.concatenate %38, %42, %43 in 0 : vector<1x128xf32>, vector<1x128xf32>, vector<6x128xf32> -> vector<8x128xf32>
    %45 = vector.shape_cast %44 : vector<8x128xf32> to vector<1x8x128xf32>
    %c0_47 = arith.constant 0 : index
    %c0_48 = arith.constant 0 : index
    %c0_49 = arith.constant 0 : index
    %46 = vector.load %arg5[%c0_47, %c0_48, %c0_49] : memref<1x8x128xf32, #tpu.memory_space<vmem>>, vector<1x8x128xf32>
    tpu.vector_store %arg5[%c0_47, %c0_48, %c0_49], %45 {strides = array<i32>} : memref<1x8x128xf32, #tpu.memory_space<vmem>>, vector<1x8x128xf32>,
    return
  }
  func.func @transform_0(%arg0: i32) -> (i32, i32, i32, i32) {
    %c0_i32 = arith.constant 0 : i32
    %c0_i32_0 = arith.constant 0 : i32
    %c0_i32_1 = arith.constant 0 : i32
    %c0_i32_2 = arith.constant 0 : i32
    return %arg0, %c0_i32, %c0_i32_0, %c0_i32_1 : i32, i32, i32, i32
  }
  func.func @transform_1(%arg0: i32) -> (i32, i32, i32) {
    %c0_i32 = arith.constant 0 : i32
    %c0_i32_0 = arith.constant 0 : i32
    %c0_i32_1 = arith.constant 0 : i32
    %c0_i32_2 = arith.constant 0 : i32
    return %c0_i32, %c0_i32_0, %c0_i32_1 : i32, i32, i32
  }
  func.func @transform_2(%arg0: i32) -> (i32, i32) {
    %c0_i32 = arith.constant 0 : i32
    %c0_i32_0 = arith.constant 0 : i32
    %c0_i32_1 = arith.constant 0 : i32
    return %c0_i32, %c0_i32_0 : i32, i32
  }
  func.func @transform_3(%arg0: i32) -> (i32, i32, i32) {
    %c0_i32 = arith.constant 0 : i32
    %c0_i32_0 = arith.constant 0 : i32
    %c0_i32_1 = arith.constant 0 : i32
    return %arg0, %c0_i32, %c0_i32_0 : i32, i32, i32
  }
  func.func @transform_4(%arg0: i32) -> (i32, i32, i32) {
    %c0_i32 = arith.constant 0 : i32
    %c0_i32_0 = arith.constant 0 : i32
    %c0_i32_1 = arith.constant 0 : i32
    return %arg0, %c0_i32, %c0_i32_0 : i32, i32, i32
  }
}

module attributes {stable_mosaic.version = 11 : i64} {
  func.func @_bn_norm_kernel(%arg0: i32, %arg1: memref<512x128xbf16, #tpu.memory_space<vmem>>, %arg2: memref<2x128xf32, #tpu.memory_space<vmem>>, %arg3: memref<512x128xf32, #tpu.memory_space<vmem>>) attributes {dimension_semantics = [#tpu.dimension_semantics<parallel>], iteration_bounds = array<i64: 1>, scalar_prefetch = 0 : i64, scratch_operands = 0 : i64, tpu.core_type = #tpu.core_type<tc>, window_params = [{transform_indices = @transform_0, window_bounds = array<i64: 512, 128>}, {pipeline_mode = #tpu.pipeline_mode<synchronous>, transform_indices = @transform_1, window_bounds = array<i64: 2, 128>}, {transform_indices = @transform_2, window_bounds = array<i64: 512, 128>}]} {
    %c0 = arith.constant 0 : index
    %c0_0 = arith.constant 0 : index
    %0 = vector.load %arg2[%c0, %c0_0] : memref<2x128xf32, #tpu.memory_space<vmem>>, vector<2x128xf32>
    %c0_1 = arith.constant 0 : index
    %c0_2 = arith.constant 0 : index
    %1 = vector.load %arg1[%c0_1, %c0_2] : memref<512x128xbf16, #tpu.memory_space<vmem>>, vector<512x128xbf16>
    %2 = arith.extf %1 : vector<512x128xbf16> to vector<512x128xf32>
    %3 = vector.extract_strided_slice %0 {offsets = [0, 0], sizes = [1, 128], strides = [1, 1]} : vector<2x128xf32> to vector<1x128xf32>
    %4 = vector.broadcast %3 : vector<1x128xf32> to vector<512x128xf32>
    %5 = arith.subf %2, %4 : vector<512x128xf32>
    %6 = vector.extract_strided_slice %0 {offsets = [1, 0], sizes = [1, 128], strides = [1, 1]} : vector<2x128xf32> to vector<1x128xf32>
    %7 = vector.broadcast %6 : vector<1x128xf32> to vector<512x128xf32>
    %8 = arith.mulf %5, %7 : vector<512x128xf32>
    %c0_3 = arith.constant 0 : index
    %c0_4 = arith.constant 0 : index
    %9 = vector.load %arg3[%c0_3, %c0_4] : memref<512x128xf32, #tpu.memory_space<vmem>>, vector<512x128xf32>
    tpu.vector_store %arg3[%c0_3, %c0_4], %8 {strides = array<i32>} : memref<512x128xf32, #tpu.memory_space<vmem>>, vector<512x128xf32>,
    return
  }
  func.func @transform_0(%arg0: i32) -> (i32, i32) {
    %c0_i32 = arith.constant 0 : i32
    %c0_i32_0 = arith.constant 0 : i32
    return %arg0, %c0_i32 : i32, i32
  }
  func.func @transform_1(%arg0: i32) -> (i32, i32) {
    %c0_i32 = arith.constant 0 : i32
    %c0_i32_0 = arith.constant 0 : i32
    %c0_i32_1 = arith.constant 0 : i32
    return %c0_i32, %c0_i32_0 : i32, i32
  }
  func.func @transform_2(%arg0: i32) -> (i32, i32) {
    %c0_i32 = arith.constant 0 : i32
    %c0_i32_0 = arith.constant 0 : i32
    return %arg0, %c0_i32 : i32, i32
  }
}

</mosaic_0001>

<llo_original>
// kernel: unet_conv_block.5
$region0: #{unet_conv_block.5}
  #allocation0 [shape = 'u32[]', space=smem, size = 0x4, offset = 0x4, fixed_abs, tag = 'smem constant byte address 0x4 - core index']
  #allocation1 [shape = 'u32[144,128]{1,0:T(1,128)}', space=vmem, size = 0x12000, scoped, tag = 'internal scratch']
  %s0 = inlined_call_operand.vmem [shape: bf16[512,128], index: 0, kind: input, shape index: {}]
  %s1 = inlined_call_operand.vmem [shape: f32[2,128], index: 1, kind: input, shape index: {}]
  %s2 = inlined_call_operand.hbm [shape: f32[512,128], index: 2, kind: output, shape index: {}]
  %s3 = sld [smem:[#allocation0]]
  $region18: #{unet_conv_block.5} parent=0
    _
  %s5 = ssub.s32 1, %s3
  %s6 = scalar_select 0, %s5, %s3
  $region1: #{unet_conv_block.5} parent=0
    #allocation2 [shape = 'u8[262144]{0}', space=vmem, size = 0x40000, scoped, tag = 'output window, operand 0, single buffered']
    #allocation3 [shape = 's32[1]{0}', space=sflag, size = 0x4, scoped, tag = 'scoped memory for unet_conv_block.5']
    %7 = vsyncpa [#allocation3], 0
    // Predicated region
    $region2: #{unet_conv_block.5} parent=1 // pred_check
      _
    $region3: #{unet_conv_block.5} parent=1 // pred_check_branch
      %9 = sbr.rel (0) target = $region5
    $region4: #{unet_conv_block.5} parent=1 // pred_region
      _
    $region5: #{unet_conv_block.5} parent=1 // pred_fallthru
      _
    // Predicated region
    $region6: #{unet_conv_block.5} parent=1 // pred_check
      _
    $region7: #{unet_conv_block.5} parent=1 // pred_check_branch
      %11 = sbr.rel (0) target = $region9
    $region8: #{unet_conv_block.5} parent=1 // pred_region
      _
    $region9: #{unet_conv_block.5} parent=1 // pred_fallthru
      _
    %v12 = vld [vmem:[%s1] sm:$0x3]
    %v13 = vld [vmem:[%s0] sm:$0xf]
    %v14 = vld [vmem:[%s0 + $0x4] sm:$0xf]
    %v15 = vld [vmem:[%s0 + $0x8] sm:$0xf]
    %v16 = vld [vmem:[%s0 + $0xc] sm:$0xf]
    %v17 = vld [vmem:[%s0 + $0x10] sm:$0xf]
    %v18 = vld [vmem:[%s0 + $0x14] sm:$0xf]
    %v19 = vld [vmem:[%s0 + $0x18] sm:$0xf]
    %v20 = vld [vmem:[%s0 + $0x1c] sm:$0xf]
    %v21 = vld [vmem:[%s0 + $0x20] sm:$0xf]
    %v22 = vld [vmem:[%s0 + $0x24] sm:$0xf]
    %v23 = vld [vmem:[%s0 + $0x28] sm:$0xf]
    %v24 = vld [vmem:[%s0 + $0x2c] sm:$0xf]
    %v25 = vld [vmem:[%s0 + $0x30] sm:$0xf]
    %v26 = vld [vmem:[%s0 + $0x34] sm:$0xf]
    %v27 = vld [vmem:[%s0 + $0x38] sm:$0xf]
    %v28 = vld [vmem:[%s0 + $0x3c] sm:$0xf]
    %v29 = vld [vmem:[%s0 + $0x40] sm:$0xf]
    %v30 = vld [vmem:[%s0 + $0x44] sm:$0xf]
    %v31 = vld [vmem:[%s0 + $0x48] sm:$0xf]
    %v32 = vld [vmem:[%s0 + $0x4c] sm:$0xf]
    %v33 = vld [vmem:[%s0 + $0x50] sm:$0xf]
    %v34 = vld [vmem:[%s0 + $0x54] sm:$0xf]
    %v35 = vld [vmem:[%s0 + $0x58] sm:$0xf]
    %v36 = vld [vmem:[%s0 + $0x5c] sm:$0xf]
    %v37 = vld [vmem:[%s0 + $0x60] sm:$0xf]
    %v38 = vld [vmem:[%s0 + $0x64] sm:$0xf]
    %v39 = vld [vmem:[%s0 + $0x68] sm:$0xf]
    %v40 = vld [vmem:[%s0 + $0x6c] sm:$0xf]
    %v41 = vld [vmem:[%s0 + $0x70] sm:$0xf]
    %v42 = vld [vmem:[%s0 + $0x74] sm:$0xf]
    %v43 = vld [vmem:[%s0 + $0x78] sm:$0xf]
    %v44 = vld [vmem:[%s0 + $0x7c] sm:$0xf]
    %v45 = vld [vmem:[%s0 + $0x80] sm:$0xf]
    %v46 = vld [vmem:[%s0 + $0x84] sm:$0xf]
    %v47 = vld [vmem:[%s0 + $0x88] sm:$0xf]
    %v48 = vld [vmem:[%s0 + $0x8c] sm:$0xf]
    %v49 = vld [vmem:[%s0 + $0x90] sm:$0xf]
    %v50 = vld [vmem:[%s0 + $0x94] sm:$0xf]
    %v51 = vld [vmem:[%s0 + $0x98] sm:$0xf]
    %v52 = vld [vmem:[%s0 + $0x9c] sm:$0xf]
    %v53 = vld [vmem:[%s0 + $0xa0] sm:$0xf]
    %v54 = vld [vmem:[%s0 + $0xa4] sm:$0xf]
    %v55 = vld [vmem:[%s0 + $0xa8] sm:$0xf]
    %v56 = vld [vmem:[%s0 + $0xac] sm:$0xf]
    %v57 = vld [vmem:[%s0 + $0xb0] sm:$0xf]
    %v58 = vld [vmem:[%s0 + $0xb4] sm:$0xf]
    %v59 = vld [vmem:[%s0 + $0xb8] sm:$0xf]
    %v60 = vld [vmem:[%s0 + $0xbc] sm:$0xf]
    %v61 = vld [vmem:[%s0 + $0xc0] sm:$0xf]
    %v62 = vld [vmem:[%s0 + $0xc4] sm:$0xf]
    %v63 = vld [vmem:[%s0 + $0xc8] sm:$0xf]
    %v64 = vld [vmem:[%s0 + $0xcc] sm:$0xf]
    %v65 = vld [vmem:[%s0 + $0xd0] sm:$0xf]
    %v66 = vld [vmem:[%s0 + $0xd4] sm:$0xf]
    %v67 = vld [vmem:[%s0 + $0xd8] sm:$0xf]
    %v68 = vld [vmem:[%s0 + $0xdc] sm:$0xf]
    %v69 = vld [vmem:[%s0 + $0xe0] sm:$0xf]
    %v70 = vld [vmem:[%s0 + $0xe4] sm:$0xf]
    %v71 = vld [vmem:[%s0 + $0xe8] sm:$0xf]
    %v72 = vld [vmem:[%s0 + $0xec] sm:$0xf]
    %v73 = vld [vmem:[%s0 + $0xf0] sm:$0xf]
    %v74 = vld [vmem:[%s0 + $0xf4] sm:$0xf]
    %v75 = vld [vmem:[%s0 + $0xf8] sm:$0xf]
    %v76 = vld [vmem:[%s0 + $0xfc] sm:$0xf]
    %v77 = vunpack.c.l.bf16 %v13
    %v78 = vunpack.c.l.bf16 %v14
    %v79 = vunpack.c.l.bf16 %v15
    %v80 = vunpack.c.l.bf16 %v16
    %v81 = vunpack.c.l.bf16 %v17
    %v82 = vunpack.c.l.bf16 %v18
    %v83 = vunpack.c.l.bf16 %v19
    %v84 = vunpack.c.l.bf16 %v20
    %v85 = vunpack.c.l.bf16 %v21
    %v86 = vunpack.c.l.bf16 %v22
    %v87 = vunpack.c.l.bf16 %v23
    %v88 = vunpack.c.l.bf16 %v24
    %v89 = vunpack.c.l.bf16 %v25
    %v90 = vunpack.c.l.bf16 %v26
    %v91 = vunpack.c.l.bf16 %v27
    %v92 = vunpack.c.l.bf16 %v28
    %v93 = vunpack.c.l.bf16 %v29
    %v94 = vunpack.c.l.bf16 %v30
    %v95 = vunpack.c.l.bf16 %v31
    %v96 = vunpack.c.l.bf16 %v32
    %v97 = vunpack.c.l.bf16 %v33
    %v98 = vunpack.c.l.bf16 %v34
    %v99 = vunpack.c.l.bf16 %v35
    %v100 = vunpack.c.l.bf16 %v36
    %v101 = vunpack.c.l.bf16 %v37
    %v102 = vunpack.c.l.bf16 %v38
    %v103 = vunpack.c.l.bf16 %v39
    %v104 = vunpack.c.l.bf16 %v40
    %v105 = vunpack.c.l.bf16 %v41
    %v106 = vunpack.c.l.bf16 %v42
    %v107 = vunpack.c.l.bf16 %v43
    %v108 = vunpack.c.l.bf16 %v44
    %v109 = vunpack.c.l.bf16 %v45
    %v110 = vunpack.c.l.bf16 %v46
    %v111 = vunpack.c.l.bf16 %v47
    %v112 = vunpack.c.l.bf16 %v48
    %v113 = vunpack.c.l.bf16 %v49
    %v114 = vunpack.c.l.bf16 %v50
    %v115 = vunpack.c.l.bf16 %v51
    %v116 = vunpack.c.l.bf16 %v52
    %v117 = vunpack.c.l.bf16 %v53
    %v118 = vunpack.c.l.bf16 %v54
    %v119 = vunpack.c.l.bf16 %v55
    %v120 = vunpack.c.l.bf16 %v56
    %v121 = vunpack.c.l.bf16 %v57
    %v122 = vunpack.c.l.bf16 %v58
    %v123 = vunpack.c.l.bf16 %v59
    %v124 = vunpack.c.l.bf16 %v60
    %v125 = vunpack.c.l.bf16 %v61
    %v126 = vunpack.c.l.bf16 %v62
    %v127 = vunpack.c.l.bf16 %v63
    %v128 = vunpack.c.l.bf16 %v64
    %v129 = vunpack.c.l.bf16 %v65
    %v130 = vunpack.c.l.bf16 %v66
    %v131 = vunpack.c.l.bf16 %v67
    %v132 = vunpack.c.l.bf16 %v68
    %v133 = vunpack.c.l.bf16 %v69
    %v134 = vunpack.c.l.bf16 %v70
    %v135 = vunpack.c.l.bf16 %v71
    %v136 = vunpack.c.l.bf16 %v72
    %v137 = vunpack.c.l.bf16 %v73
    %v138 = vunpack.c.l.bf16 %v74
    %v139 = vunpack.c.l.bf16 %v75
    %v140 = vunpack.c.l.bf16 %v76
    %v141 = vlaneseq
    %v142 = vshrl.u32 %v141, 7
    %v143 = vsub.s32 0, %v142
    %v144 = vrot.slane %v12, %v143
    %v145 = vsub.f32 %v77, %v144
    %v146 = vsub.f32 %v78, %v144
    %v147 = vsub.f32 %v79, %v144
    %v148 = vsub.f32 %v80, %v144
    %v149 = vsub.f32 %v81, %v144
    %v150 = vsub.f32 %v82, %v144
    %v151 = vsub.f32 %v83, %v144
    %v152 = vsub.f32 %v84, %v144
    %v153 = vsub.f32 %v85, %v144
    %v154 = vsub.f32 %v86, %v144
    %v155 = vsub.f32 %v87, %v144
    %v156 = vsub.f32 %v88, %v144
    %v157 = vsub.f32 %v89, %v144
    %v158 = vsub.f32 %v90, %v144
    %v159 = vsub.f32 %v91, %v144
    %v160 = vsub.f32 %v92, %v144
    %v161 = vsub.f32 %v93, %v144
    %v162 = vsub.f32 %v94, %v144
    %v163 = vsub.f32 %v95, %v144
    %v164 = vsub.f32 %v96, %v144
    %v165 = vsub.f32 %v97, %v144
    %v166 = vsub.f32 %v98, %v144
    %v167 = vsub.f32 %v99, %v144
    %v168 = vsub.f32 %v100, %v144
    %v169 = vsub.f32 %v101, %v144
    %v170 = vsub.f32 %v102, %v144
    %v171 = vsub.f32 %v103, %v144
    %v172 = vsub.f32 %v104, %v144
    %v173 = vsub.f32 %v105, %v144
    %v174 = vsub.f32 %v106, %v144
    %v175 = vsub.f32 %v107, %v144
    %v176 = vsub.f32 %v108, %v144
    %v177 = vsub.f32 %v109, %v144
    %v178 = vsub.f32 %v110, %v144
    %v179 = vsub.f32 %v111, %v144
    %v180 = vsub.f32 %v112, %v144
    %v181 = vsub.f32 %v113, %v144
    %v182 = vsub.f32 %v114, %v144
    %v183 = vsub.f32 %v115, %v144
    %v184 = vsub.f32 %v116, %v144
    %v185 = vsub.f32 %v117, %v144
    %v186 = vsub.f32 %v118, %v144
    %v187 = vsub.f32 %v119, %v144
    %v188 = vsub.f32 %v120, %v144
    %v189 = vsub.f32 %v121, %v144
    %v190 = vsub.f32 %v122, %v144
    %v191 = vsub.f32 %v123, %v144
    %v192 = vsub.f32 %v124, %v144
    %v193 = vsub.f32 %v125, %v144
    %v194 = vsub.f32 %v126, %v144
    %v195 = vsub.f32 %v127, %v144
    %v196 = vsub.f32 %v128, %v144
    %v197 = vsub.f32 %v129, %v144
    %v198 = vsub.f32 %v130, %v144
    %v199 = vsub.f32 %v131, %v144
    %v200 = vsub.f32 %v132, %v144
    %v201 = vsub.f32 %v133, %v144
    %v202 = vsub.f32 %v134, %v144
    %v203 = vsub.f32 %v135, %v144
    %v204 = vsub.f32 %v136, %v144
    %v205 = vsub.f32 %v137, %v144
    %v206 = vsub.f32 %v138, %v144
    %v207 = vsub.f32 %v139, %v144
    %v208 = vsub.f32 %v140, %v144
    %v209 = vlaneseq
    %v210 = vshrl.u32 %v209, 7
    %v211 = vsub.s32 1, %v210
    %v212 = vrot.slane %v12, %v211
    %v213 = vmul.f32 %v145, %v212
    %v214 = vmul.f32 %v146, %v212
    %v215 = vmul.f32 %v147, %v212
    %v216 = vmul.f32 %v148, %v212
    %v217 = vmul.f32 %v149, %v212
    %v218 = vmul.f32 %v150, %v212
    %v219 = vmul.f32 %v151, %v212
    %v220 = vmul.f32 %v152, %v212
    %v221 = vmul.f32 %v153, %v212
    %v222 = vmul.f32 %v154, %v212
    %v223 = vmul.f32 %v155, %v212
    %v224 = vmul.f32 %v156, %v212
    %v225 = vmul.f32 %v157, %v212
    %v226 = vmul.f32 %v158, %v212
    %v227 = vmul.f32 %v159, %v212
    %v228 = vmul.f32 %v160, %v212
    %v229 = vmul.f32 %v161, %v212
    %v230 = vmul.f32 %v162, %v212
    %v231 = vmul.f32 %v163, %v212
    %v232 = vmul.f32 %v164, %v212
    %v233 = vmul.f32 %v165, %v212
    %v234 = vmul.f32 %v166, %v212
    %v235 = vmul.f32 %v167, %v212
    %v236 = vmul.f32 %v168, %v212
    %v237 = vmul.f32 %v169, %v212
    %v238 = vmul.f32 %v170, %v212
    %v239 = vmul.f32 %v171, %v212
    %v240 = vmul.f32 %v172, %v212
    %v241 = vmul.f32 %v173, %v212
    %v242 = vmul.f32 %v174, %v212
    %v243 = vmul.f32 %v175, %v212
    %v244 = vmul.f32 %v176, %v212
    %v245 = vmul.f32 %v177, %v212
    %v246 = vmul.f32 %v178, %v212
    %v247 = vmul.f32 %v179, %v212
    %v248 = vmul.f32 %v180, %v212
    %v249 = vmul.f32 %v181, %v212
    %v250 = vmul.f32 %v182, %v212
    %v251 = vmul.f32 %v183, %v212
    %v252 = vmul.f32 %v184, %v212
    %v253 = vmul.f32 %v185, %v212
    %v254 = vmul.f32 %v186, %v212
    %v255 = vmul.f32 %v187, %v212
    %v256 = vmul.f32 %v188, %v212
    %v257 = vmul.f32 %v189, %v212
    %v258 = vmul.f32 %v190, %v212
    %v259 = vmul.f32 %v191, %v212
    %v260 = vmul.f32 %v192, %v212
    %v261 = vmul.f32 %v193, %v212
    %v262 = vmul.f32 %v194, %v212
    %v263 = vmul.f32 %v195, %v212
    %v264 = vmul.f32 %v196, %v212
    %v265 = vmul.f32 %v197, %v212
    %v266 = vmul.f32 %v198, %v212
    %v267 = vmul.f32 %v199, %v212
    %v268 = vmul.f32 %v200, %v212
    %v269 = vmul.f32 %v201, %v212
    %v270 = vmul.f32 %v202, %v212
    %v271 = vmul.f32 %v203, %v212
    %v272 = vmul.f32 %v204, %v212
    %v273 = vmul.f32 %v205, %v212
    %v274 = vmul.f32 %v206, %v212
    %v275 = vmul.f32 %v207, %v212
    %v276 = vmul.f32 %v208, %v212
    %277 = vst [vmem:[#allocation2] sm:$0xff] %v213
    %278 = vst [vmem:[#allocation2 + $0x8] sm:$0xff] %v214
    %279 = vst [vmem:[#allocation2 + $0x10] sm:$0xff] %v215
    %280 = vst [vmem:[#allocation2 + $0x18] sm:$0xff] %v216
    %281 = vst [vmem:[#allocation2 + $0x20] sm:$0xff] %v217
    %282 = vst [vmem:[#allocation2 + $0x28] sm:$0xff] %v218
    %283 = vst [vmem:[#allocation2 + $0x30] sm:$0xff] %v219
    %284 = vst [vmem:[#allocation2 + $0x38] sm:$0xff] %v220
    %285 = vst [vmem:[#allocation2 + $0x40] sm:$0xff] %v221
    %286 = vst [vmem:[#allocation2 + $0x48] sm:$0xff] %v222
    %287 = vst [vmem:[#allocation2 + $0x50] sm:$0xff] %v223
    %288 = vst [vmem:[#allocation2 + $0x58] sm:$0xff] %v224
    %289 = vst [vmem:[#allocation2 + $0x60] sm:$0xff] %v225
    %290 = vst [vmem:[#allocation2 + $0x68] sm:$0xff] %v226
    %291 = vst [vmem:[#allocation2 + $0x70] sm:$0xff] %v227
    %292 = vst [vmem:[#allocation2 + $0x78] sm:$0xff] %v228
    %293 = vst [vmem:[#allocation2 + $0x80] sm:$0xff] %v229
    %294 = vst [vmem:[#allocation2 + $0x88] sm:$0xff] %v230
    %295 = vst [vmem:[#allocation2 + $0x90] sm:$0xff] %v231
    %296 = vst [vmem:[#allocation2 + $0x98] sm:$0xff] %v232
    %297 = vst [vmem:[#allocation2 + $0xa0] sm:$0xff] %v233
    %298 = vst [vmem:[#allocation2 + $0xa8] sm:$0xff] %v234
    %299 = vst [vmem:[#allocation2 + $0xb0] sm:$0xff] %v235
    %300 = vst [vmem:[#allocation2 + $0xb8] sm:$0xff] %v236
    %301 = vst [vmem:[#allocation2 + $0xc0] sm:$0xff] %v237
    %302 = vst [vmem:[#allocation2 + $0xc8] sm:$0xff] %v238
    %303 = vst [vmem:[#allocation2 + $0xd0] sm:$0xff] %v239
    %304 = vst [vmem:[#allocation2 + $0xd8] sm:$0xff] %v240
    %305 = vst [vmem:[#allocation2 + $0xe0] sm:$0xff] %v241
    %306 = vst [vmem:[#allocation2 + $0xe8] sm:$0xff] %v242
    %307 = vst [vmem:[#allocation2 + $0xf0] sm:$0xff] %v243
    %308 = vst [vmem:[#allocation2 + $0xf8] sm:$0xff] %v244
    %309 = vst [vmem:[#allocation2 + $0x100] sm:$0xff] %v245
    %310 = vst [vmem:[#allocation2 + $0x108] sm:$0xff] %v246
    %311 = vst [vmem:[#allocation2 + $0x110] sm:$0xff] %v247
    %312 = vst [vmem:[#allocation2 + $0x118] sm:$0xff] %v248
    %313 = vst [vmem:[#allocation2 + $0x120] sm:$0xff] %v249
    %314 = vst [vmem:[#allocation2 + $0x128] sm:$0xff] %v250
    %315 = vst [vmem:[#allocation2 + $0x130] sm:$0xff] %v251
    %316 = vst [vmem:[#allocation2 + $0x138] sm:$0xff] %v252
    %317 = vst [vmem:[#allocation2 + $0x140] sm:$0xff] %v253
    %318 = vst [vmem:[#allocation2 + $0x148] sm:$0xff] %v254
    %319 = vst [vmem:[#allocation2 + $0x150] sm:$0xff] %v255
    %320 = vst [vmem:[#allocation2 + $0x158] sm:$0xff] %v256
    %321 = vst [vmem:[#allocation2 + $0x160] sm:$0xff] %v257
    %322 = vst [vmem:[#allocation2 + $0x168] sm:$0xff] %v258
    %323 = vst [vmem:[#allocation2 + $0x170] sm:$0xff] %v259
    %324 = vst [vmem:[#allocation2 + $0x178] sm:$0xff] %v260
    %325 = vst [vmem:[#allocation2 + $0x180] sm:$0xff] %v261
    %326 = vst [vmem:[#allocation2 + $0x188] sm:$0xff] %v262
    %327 = vst [vmem:[#allocation2 + $0x190] sm:$0xff] %v263
    %328 = vst [vmem:[#allocation2 + $0x198] sm:$0xff] %v264
    %329 = vst [vmem:[#allocation2 + $0x1a0] sm:$0xff] %v265
    %330 = vst [vmem:[#allocation2 + $0x1a8] sm:$0xff] %v266
    %331 = vst [vmem:[#allocation2 + $0x1b0] sm:$0xff] %v267
    %332 = vst [vmem:[#allocation2 + $0x1b8] sm:$0xff] %v268
    %333 = vst [vmem:[#allocation2 + $0x1c0] sm:$0xff] %v269
    %334 = vst [vmem:[#allocation2 + $0x1c8] sm:$0xff] %v270
    %335 = vst [vmem:[#allocation2 + $0x1d0] sm:$0xff] %v271
    %336 = vst [vmem:[#allocation2 + $0x1d8] sm:$0xff] %v272
    %337 = vst [vmem:[#allocation2 + $0x1e0] sm:$0xff] %v273
    %338 = vst [vmem:[#allocation2 + $0x1e8] sm:$0xff] %v274
    %339 = vst [vmem:[#allocation2 + $0x1f0] sm:$0xff] %v275
    %340 = vst [vmem:[#allocation2 + $0x1f8] sm:$0xff] %v276
    // Predicated region
    $region10: #{unet_conv_block.5} parent=1 // pred_check
      _
    $region11: #{unet_conv_block.5} parent=1 // pred_check_branch
      %342 = sbr.rel (0) target = $region13
    $region12: #{unet_conv_block.5} parent=1 // pred_region
      %s344 = ssub.s32 8192, 8192
      %345 = vsyncadd [#allocation3], %s344
      %s346 = sshll.u32 [#allocation2], 4
      %s347 = int_to_ptr.vmem [resolvable:$true] %s346
      %352 = dma.vmem_to_hbm [thread:$0]  %s347, 8192, %s2, [#allocation3], 128, 128, 8
    $region13: #{unet_conv_block.5} parent=1 // pred_fallthru
      _
    // Predicated region
    $region14: #{unet_conv_block.5} parent=1 // pred_check
      _
    $region15: #{unet_conv_block.5} parent=1 // pred_check_branch
      %354 = sbr.rel (0) target = $region17
    $region16: #{unet_conv_block.5} parent=1 // pred_region
      %355 = dma.done [#allocation3], 8192
    $region17: #{unet_conv_block.5} parent=1 // pred_fallthru
      _
    %356 = vsyncpa [#allocation3], 1

// kernel: unet_conv_block.3
$region0: #{unet_conv_block.3}
  #allocation0 [shape = 'u32[]', space=smem, size = 0x4, offset = 0x4, fixed_abs, tag = 'smem constant byte address 0x4 - core index']
  #allocation1 [shape = 'u32[144,128]{1,0:T(1,128)}', space=vmem, size = 0x12000, scoped, tag = 'internal scratch']
  #allocation2 [shape = 'bf16[18,16,384]{2,1,0:T(16,128)(2,1)}', space=vmem, size = 0x36000, scoped, tag = 'scratch operand']
  %s0 = inlined_call_operand.vmem [shape: bf16[2,18,18,128], index: 0, kind: input, shape index: {}]
  %s1 = inlined_call_operand.vmem [shape: bf16[3,384,128], index: 1, kind: input, shape index: {}]
  %s2 = inlined_call_operand.vmem [shape: f32[1,128], index: 2, kind: input, shape index: {}]
  %s3 = inlined_call_operand.vmem [shape: bf16[2,256,128], index: 3, kind: output, shape index: {0}]
  %s4 = inlined_call_operand.vmem [shape: f32[2,8,128], index: 4, kind: output, shape index: {1}]
  %5 = xla_tuple %s3, %s4
  %s6 = sld [smem:[#allocation0]]
  $region53: #{unet_conv_block.3} parent=0
    _
  %s8 = ssub.s32 1, %s6
  %s9 = scalar_select 0, %s8, %s6
  loop: start=0, step=1, limit=4
  $region2: #{unet_conv_block.3} parent=0 // loop_pre_header
    _
  $region3: #{unet_conv_block.3} parent=0 // loop_header
    %s11 = sphi 0, %s15
    %p12 = scmp.ge.s32.totalorder %s11, 4
    %s21 = sphi 0, %s23
    %s24 = sphi 0, %s21
    %s25 = sphi 0, %s24
    %s41 = sphi 0, %s25
    %s45 = sphi 0, %s45
    %s47 = sphi 0, %s45
    %s48 = sphi 0, %s47
    %s62 = sphi 0, %s48
    %s66 = sphi 0, %s66
    %s68 = sphi 0, %s66
    %s69 = sphi 0, %s68
    %s83 = sphi 0, %s69
    %s89 = sphi 0, %s91
    %s92 = sphi 0, %s89
    %s93 = sphi 0, %s92
    %s109 = sphi 0, %s93
    %s115 = sphi 0, %s117
    %s118 = sphi 0, %s115
    %s119 = sphi 0, %s118
    %s135 = sphi 0, %s119
  $region4: #{unet_conv_block.3} parent=0 // loop_header_branch
    %14 = sbr.rel (%p12) target = $region8
  $region5: #{unet_conv_block.3} parent=0 // loop_body
    %s16 = ssub.s32 %s11, 1
    %s17 = ssub.s32 %s11, 2
    %s18 = sadd.s32 %s11, 1
    %s19 = ssub.s32 %s11, %s18
    %p20 = scmp.eq.s32.totalorder %s19, 0
    %s22 = sadd.s32 %s21, 1
    %s23 = scalar_select %p20, %s21, %s22
    %p26 = pneg %p20
    %p27 = scmp.eq.s32.totalorder %s11, 1
    %p28 = por %p26, %p27
    %p29 = scmp.ne.s32.totalorder %s21, %s24
    %p30 = scmp.eq.s32.totalorder %s11, 0
    %p31 = por %p29, %p30
    %p32 = scmp.ne.s32.totalorder %s21, %s24
    %p33 = scmp.eq.s32.totalorder %s16, 1
    %p34 = por %p32, %p33
    %p35 = scmp.ne.s32.totalorder %s24, %s25
    %p36 = scmp.eq.s32.totalorder %s16, 0
    %p37 = por %p35, %p36
    %p38 = scmp.ne.s32.totalorder %s24, %s25
    %p39 = scmp.eq.s32.totalorder %s17, 1
    %p40 = por %p38, %p39
    %p42 = scmp.ne.s32.totalorder %s25, %s41
    %p43 = scmp.eq.s32.totalorder %s17, 0
    %p44 = por %p42, %p43
    %s46 = sadd.s32 %s45, 1
    %p49 = scmp.eq.s32.totalorder %s11, 1
    %p50 = scmp.ne.s32.totalorder %s45, %s47
    %p51 = scmp.eq.s32.totalorder %s11, 0
    %p52 = por %p50, %p51
    %p53 = scmp.ne.s32.totalorder %s45, %s47
    %p54 = scmp.eq.s32.totalorder %s16, 1
    %p55 = por %p53, %p54
    %p56 = scmp.ne.s32.totalorder %s47, %s48
    %p57 = scmp.eq.s32.totalorder %s16, 0
    %p58 = por %p56, %p57
    %p59 = scmp.ne.s32.totalorder %s47, %s48
    %p60 = scmp.eq.s32.totalorder %s17, 1
    %p61 = por %p59, %p60
    %p63 = scmp.ne.s32.totalorder %s48, %s62
    %p64 = scmp.eq.s32.totalorder %s17, 0
    %p65 = por %p63, %p64
    %s67 = sadd.s32 %s66, 1
    %p70 = scmp.eq.s32.totalorder %s11, 1
    %p71 = scmp.ne.s32.totalorder %s66, %s68
    %p72 = scmp.eq.s32.totalorder %s11, 0
    %p73 = por %p71, %p72
    %p74 = scmp.ne.s32.totalorder %s66, %s68
    %p75 = scmp.eq.s32.totalorder %s16, 1
    %p76 = por %p74, %p75
    %p77 = scmp.ne.s32.totalorder %s68, %s69
    %p78 = scmp.eq.s32.totalorder %s16, 0
    %p79 = por %p77, %p78
    %p80 = scmp.ne.s32.totalorder %s68, %s69
    %p81 = scmp.eq.s32.totalorder %s17, 1
    %p82 = por %p80, %p81
    %p84 = scmp.ne.s32.totalorder %s69, %s83
    %p85 = scmp.eq.s32.totalorder %s17, 0
    %p86 = por %p84, %p85
    %s87 = ssub.s32 %s11, %s18
    %p88 = scmp.eq.s32.totalorder %s87, 0
    %s90 = sadd.s32 %s89, 1
    %s91 = scalar_select %p88, %s89, %s90
    %p94 = pneg %p88
    %p95 = scmp.eq.s32.totalorder %s11, 1
    %p96 = por %p94, %p95
    %p97 = scmp.ne.s32.totalorder %s89, %s92
    %p98 = scmp.eq.s32.totalorder %s11, 0
    %p99 = por %p97, %p98
    %p100 = scmp.ne.s32.totalorder %s89, %s92
    %p101 = scmp.eq.s32.totalorder %s16, 1
    %p102 = por %p100, %p101
    %p103 = scmp.ne.s32.totalorder %s92, %s93
    %p104 = scmp.eq.s32.totalorder %s16, 0
    %p105 = por %p103, %p104
    %p106 = scmp.ne.s32.totalorder %s92, %s93
    %p107 = scmp.eq.s32.totalorder %s17, 1
    %p108 = por %p106, %p107
    %p110 = scmp.ne.s32.totalorder %s93, %s109
    %p111 = scmp.eq.s32.totalorder %s17, 0
    %p112 = por %p110, %p111
    %s113 = ssub.s32 %s11, %s18
    %p114 = scmp.eq.s32.totalorder %s113, 0
    %s116 = sadd.s32 %s115, 1
    %s117 = scalar_select %p114, %s115, %s116
    %p120 = pneg %p114
    %p121 = scmp.eq.s32.totalorder %s11, 1
    %p122 = por %p120, %p121
    %p123 = scmp.ne.s32.totalorder %s115, %s118
    %p124 = scmp.eq.s32.totalorder %s11, 0
    %p125 = por %p123, %p124
    %p126 = scmp.ne.s32.totalorder %s115, %s118
    %p127 = scmp.eq.s32.totalorder %s16, 1
    %p128 = por %p126, %p127
    %p129 = scmp.ne.s32.totalorder %s118, %s119
    %p130 = scmp.eq.s32.totalorder %s16, 0
    %p131 = por %p129, %p130
    %p132 = scmp.ne.s32.totalorder %s118, %s119
    %p133 = scmp.eq.s32.totalorder %s17, 1
    %p134 = por %p132, %p133
    %p136 = scmp.ne.s32.totalorder %s119, %s135
    %p137 = scmp.eq.s32.totalorder %s17, 0
    %p138 = por %p136, %p137
    %p139 = scmp.le.s32.totalorder 1, %s11
    %p140 = scmp.lt.s32.totalorder %s11, 3
    %p141 = pnand %p139, %p140
    %p142 = pneg %p141
    // Predicated region
    $region9: #{unet_conv_block.3} parent=5 // pred_check
      _
    $region10: #{unet_conv_block.3} parent=5 // pred_check_branch
      %144 = sbr.rel (%p141) target = $region12
    $region11: #{unet_conv_block.3} parent=5 // pred_region
      %s145 = ssub.s32 %s11, 1
      // Predicated region
      $region13: #{unet_conv_block.3} parent=11 // pred_check
        %p146 = pneg %p58
      $region14: #{unet_conv_block.3} parent=11 // pred_check_branch
        %148 = sbr.rel (%p146) target = $region16
      $region15: #{unet_conv_block.3} parent=11 // pred_region
        _
      $region16: #{unet_conv_block.3} parent=11 // pred_fallthru
        _
      // Predicated region
      $region17: #{unet_conv_block.3} parent=11 // pred_check
        %p149 = pneg %p79
      $region18: #{unet_conv_block.3} parent=11 // pred_check_branch
        %151 = sbr.rel (%p149) target = $region20
      $region19: #{unet_conv_block.3} parent=11 // pred_region
        _
      $region20: #{unet_conv_block.3} parent=11 // pred_fallthru
        _
    $region12: #{unet_conv_block.3} parent=5 // pred_fallthru
      _
    %p152 = scmp.lt.s32.totalorder %s11, 2
    // Predicated region
    $region21: #{unet_conv_block.3} parent=5 // pred_check
      %p153 = pneg %p152
    $region22: #{unet_conv_block.3} parent=5 // pred_check_branch
      %155 = sbr.rel (%p153) target = $region24
    $region23: #{unet_conv_block.3} parent=5 // pred_region
      // Predicated region
      $region25: #{unet_conv_block.3} parent=23 // pred_check
        %p156 = pneg %p31
      $region26: #{unet_conv_block.3} parent=23 // pred_check_branch
        %158 = sbr.rel (%p156) target = $region28
      $region27: #{unet_conv_block.3} parent=23 // pred_region
        %p159 = scmp.lt.s32.totalorder %s11, 1
        %s160 = scalar_select %p159, %s11, 1
        %s161 = smul.addr %s160, 54
        %s162 = smul.addr %s161, 4
        %s163 = scalar_lea.vmem %s0, %s162
      $region28: #{unet_conv_block.3} parent=23 // pred_fallthru
        _
    $region24: #{unet_conv_block.3} parent=5 // pred_fallthru
      _
    %p164 = scmp.le.s32.totalorder 1, %s11
    %p165 = scmp.lt.s32.totalorder %s11, 3
    %p166 = pnand %p164, %p165
    %p167 = pneg %p166
    // Predicated region
    $region29: #{unet_conv_block.3} parent=5 // pred_check
      _
    $region30: #{unet_conv_block.3} parent=5 // pred_check_branch
      %169 = sbr.rel (%p166) target = $region32
    $region31: #{unet_conv_block.3} parent=5 // pred_region
      %s170 = ssub.s32 %s11, 1
      %p171 = scmp.lt.s32.totalorder %s16, 1
      %s172 = scalar_select %p171, %s16, 1
      %s173 = smul.addr %s172, 54
      %s174 = smul.addr %s173, 4
      %s175 = scalar_lea.vmem %s0, %s174
      %p176 = pneg %p37
      %p177 = pneg %p34
      %p178 = pneg %p58
      %p179 = pneg %p55
      %p180 = pneg %p79
      %p181 = pneg %p76
      %p182 = pneg %p105
      %p183 = pneg %p102
      %p184 = scmp.lt.s32.totalorder %s16, 1
      %s185 = scalar_select %p184, %s16, 1
      %s186 = smul.addr %s185, 32
      %s187 = smul.addr %s186, 4
      %s188 = scalar_lea.vmem %s3, %s187
      %p189 = pneg %p131
      %p190 = pneg %p128
      %p191 = scmp.lt.s32.totalorder %s16, 1
      %s192 = scalar_select %p191, %s16, 1
      %s193 = smul.addr %s192, 8
      %s194 = scalar_lea.vmem %s4, %s193
      %p195 = scmp.lt.s32.totalorder %s16, 1
      %s196 = scalar_select %p195, %s16, 1
      %s197 = smul.addr %s196, 54
      %s198 = smul.addr %s197, 4
      %s199 = scalar_lea.vmem %s0, %s198
      %p200 = scmp.lt.s32.totalorder %s16, 1
      %s201 = scalar_select %p200, %s16, 1
      %s202 = smul.addr %s201, 32
      %s203 = smul.addr %s202, 4
      %s204 = scalar_lea.vmem %s3, %s203
      %p205 = scmp.lt.s32.totalorder %s16, 1
      %s206 = scalar_select %p205, %s16, 1
      %s207 = smul.addr %s206, 8
      %s208 = scalar_lea.vmem %s4, %s207
      %v210 = vld [vmem:[%s199] sm:$0xf]
      %v211 = vld [vmem:[%s199 + $0x4] sm:$0xf]
      %v212 = vld [vmem:[%s199 + $0xc] sm:$0xf]
      %v213 = vld [vmem:[%s199 + $0x10] sm:$0xf]
      %v214 = vld [vmem:[%s199 + $0x18] sm:$0xf]
      %v215 = vld [vmem:[%s199 + $0x1c] sm:$0xf]
      %v216 = vld [vmem:[%s199 + $0x24] sm:$0xf]
      %v217 = vld [vmem:[%s199 + $0x28] sm:$0xf]
      %v218 = vld [vmem:[%s199 + $0x30] sm:$0xf]
      %v219 = vld [vmem:[%s199 + $0x34] sm:$0xf]
      %v220 = vld [vmem:[%s199 + $0x3c] sm:$0xf]
      %v221 = vld [vmem:[%s199 + $0x40] sm:$0xf]
      %v222 = vld [vmem:[%s199 + $0x48] sm:$0xf]
      %v223 = vld [vmem:[%s199 + $0x4c] sm:$0xf]
      %v224 = vld [vmem:[%s199 + $0x54] sm:$0xf]
      %v225 = vld [vmem:[%s199 + $0x58] sm:$0xf]
      %v226 = vld [vmem:[%s199 + $0x60] sm:$0xf]
      %v227 = vld [vmem:[%s199 + $0x64] sm:$0xf]
      %v228 = vld [vmem:[%s199 + $0x6c] sm:$0xf]
      %v229 = vld [vmem:[%s199 + $0x70] sm:$0xf]
      %v230 = vld [vmem:[%s199 + $0x78] sm:$0xf]
      %v231 = vld [vmem:[%s199 + $0x7c] sm:$0xf]
      %v232 = vld [vmem:[%s199 + $0x84] sm:$0xf]
      %v233 = vld [vmem:[%s199 + $0x88] sm:$0xf]
      %v234 = vld [vmem:[%s199 + $0x90] sm:$0xf]
      %v235 = vld [vmem:[%s199 + $0x94] sm:$0xf]
      %v236 = vld [vmem:[%s199 + $0x9c] sm:$0xf]
      %v237 = vld [vmem:[%s199 + $0xa0] sm:$0xf]
      %v238 = vld [vmem:[%s199 + $0xa8] sm:$0xf]
      %v239 = vld [vmem:[%s199 + $0xac] sm:$0xf]
      %v240 = vld [vmem:[%s199 + $0xb4] sm:$0xf]
      %v241 = vld [vmem:[%s199 + $0xb8] sm:$0xf]
      %v242 = vld [vmem:[%s199 + $0xc0] sm:$0xf]
      %v243 = vld [vmem:[%s199 + $0xc4] sm:$0xf]
      %v244 = vld [vmem:[%s199 + $0xcc] sm:$0xf]
      %v245 = vld [vmem:[%s199 + $0xd0] sm:$0xf]
      %v282 = vunpack.c.l.b16 %v210
      %v283 = vunpack.c.l.b16 %v211
      %v284 = vunpack.c.l.b16 %v212
      %v285 = vunpack.c.l.b16 %v213
      %v286 = vunpack.c.l.b16 %v214
      %v287 = vunpack.c.l.b16 %v215
      %v288 = vunpack.c.l.b16 %v216
      %v289 = vunpack.c.l.b16 %v217
      %v290 = vunpack.c.l.b16 %v218
      %v291 = vunpack.c.l.b16 %v219
      %v292 = vunpack.c.l.b16 %v220
      %v293 = vunpack.c.l.b16 %v221
      %v294 = vunpack.c.l.b16 %v222
      %v295 = vunpack.c.l.b16 %v223
      %v296 = vunpack.c.l.b16 %v224
      %v297 = vunpack.c.l.b16 %v225
      %v298 = vunpack.c.l.b16 %v226
      %v299 = vunpack.c.l.b16 %v227
      %v300 = vunpack.c.l.b16 %v228
      %v301 = vunpack.c.l.b16 %v229
      %v302 = vunpack.c.l.b16 %v230
      %v303 = vunpack.c.l.b16 %v231
      %v304 = vunpack.c.l.b16 %v232
      %v305 = vunpack.c.l.b16 %v233
      %v306 = vunpack.c.l.b16 %v234
      %v307 = vunpack.c.l.b16 %v235
      %v308 = vunpack.c.l.b16 %v236
      %v309 = vunpack.c.l.b16 %v237
      %v310 = vunpack.c.l.b16 %v238
      %v311 = vunpack.c.l.b16 %v239
      %v312 = vunpack.c.l.b16 %v240
      %v313 = vunpack.c.l.b16 %v241
      %v314 = vunpack.c.l.b16 %v242
      %v315 = vunpack.c.l.b16 %v243
      %v316 = vunpack.c.l.b16 %v244
      %v317 = vunpack.c.l.b16 %v245
      %v318 = vpack.c.b16 %v283, %v282
      %v319 = vpack.c.b16 %v285, %v284
      %v320 = vpack.c.b16 %v287, %v286
      %v321 = vpack.c.b16 %v289, %v288
      %v322 = vpack.c.b16 %v291, %v290
      %v323 = vpack.c.b16 %v293, %v292
      %v324 = vpack.c.b16 %v295, %v294
      %v325 = vpack.c.b16 %v297, %v296
      %v326 = vpack.c.b16 %v299, %v298
      %v327 = vpack.c.b16 %v301, %v300
      %v328 = vpack.c.b16 %v303, %v302
      %v329 = vpack.c.b16 %v305, %v304
      %v330 = vpack.c.b16 %v307, %v306
      %v331 = vpack.c.b16 %v309, %v308
      %v332 = vpack.c.b16 %v311, %v310
      %v333 = vpack.c.b16 %v313, %v312
      %v334 = vpack.c.b16 %v315, %v314
      %v335 = vpack.c.b16 %v317, %v316
      %354 = vst [vmem:[#allocation2] sm:$0xff] %v318
      %355 = vst [vmem:[#allocation2 + $0x18] sm:$0xff] %v319
      %356 = vst [vmem:[#allocation2 + $0x30] sm:$0xff] %v320
      %357 = vst [vmem:[#allocation2 + $0x48] sm:$0xff] %v321
      %358 = vst [vmem:[#allocation2 + $0x60] sm:$0xff] %v322
      %359 = vst [vmem:[#allocation2 + $0x78] sm:$0xff] %v323
      %360 = vst [vmem:[#allocation2 + $0x90] sm:$0xff] %v324
      %361 = vst [vmem:[#allocation2 + $0xa8] sm:$0xff] %v325
      %362 = vst [vmem:[#allocation2 + $0xc0] sm:$0xff] %v326
      %363 = vst [vmem:[#allocation2 + $0xd8] sm:$0xff] %v327
      %364 = vst [vmem:[#allocation2 + $0xf0] sm:$0xff] %v328
      %365 = vst [vmem:[#allocation2 + $0x108] sm:$0xff] %v329
      %366 = vst [vmem:[#allocation2 + $0x120] sm:$0xff] %v330
      %367 = vst [vmem:[#allocation2 + $0x138] sm:$0xff] %v331
      %368 = vst [vmem:[#allocation2 + $0x150] sm:$0xff] %v332
      %369 = vst [vmem:[#allocation2 + $0x168] sm:$0xff] %v333
      %370 = vst [vmem:[#allocation2 + $0x180] sm:$0xff] %v334
      %371 = vst [vmem:[#allocation2 + $0x198] sm:$0xff] %v335
      %v372 = vld [vmem:[%s199] sm:$0xf]
      %v373 = vld [vmem:[%s199 + $0x4] sm:$0xf]
      %v374 = vld [vmem:[%s199 + $0x8] sm:$0x1]
      %v375 = vld [vmem:[%s199 + $0xc] sm:$0xf]
      %v376 = vld [vmem:[%s199 + $0x10] sm:$0xf]
      %v377 = vld [vmem:[%s199 + $0x14] sm:$0x1]
      %v378 = vld [vmem:[%s199 + $0x18] sm:$0xf]
      %v379 = vld [vmem:[%s199 + $0x1c] sm:$0xf]
      %v380 = vld [vmem:[%s199 + $0x20] sm:$0x1]
      %v381 = vld [vmem:[%s199 + $0x24] sm:$0xf]
      %v382 = vld [vmem:[%s199 + $0x28] sm:$0xf]
      %v383 = vld [vmem:[%s199 + $0x2c] sm:$0x1]
      %v384 = vld [vmem:[%s199 + $0x30] sm:$0xf]
      %v385 = vld [vmem:[%s199 + $0x34] sm:$0xf]
      %v386 = vld [vmem:[%s199 + $0x38] sm:$0x1]
      %v387 = vld [vmem:[%s199 + $0x3c] sm:$0xf]
      %v388 = vld [vmem:[%s199 + $0x40] sm:$0xf]
      %v389 = vld [vmem:[%s199 + $0x44] sm:$0x1]
      %v390 = vld [vmem:[%s199 + $0x48] sm:$0xf]
      %v391 = vld [vmem:[%s199 + $0x4c] sm:$0xf]
      %v392 = vld [vmem:[%s199 + $0x50] sm:$0x1]
      %v393 = vld [vmem:[%s199 + $0x54] sm:$0xf]
      %v394 = vld [vmem:[%s199 + $0x58] sm:$0xf]
      %v395 = vld [vmem:[%s199 + $0x5c] sm:$0x1]
      %v396 = vld [vmem:[%s199 + $0x60] sm:$0xf]
      %v397 = vld [vmem:[%s199 + $0x64] sm:$0xf]
      %v398 = vld [vmem:[%s199 + $0x68] sm:$0x1]
      %v399 = vld [vmem:[%s199 + $0x6c] sm:$0xf]
      %v400 = vld [vmem:[%s199 + $0x70] sm:$0xf]
      %v401 = vld [vmem:[%s199 + $0x74] sm:$0x1]
      %v402 = vld [vmem:[%s199 + $0x78] sm:$0xf]
      %v403 = vld [vmem:[%s199 + $0x7c] sm:$0xf]
      %v404 = vld [vmem:[%s199 + $0x80] sm:$0x1]
      %v405 = vld [vmem:[%s199 + $0x84] sm:$0xf]
      %v406 = vld [vmem:[%s199 + $0x88] sm:$0xf]
      %v407 = vld [vmem:[%s199 + $0x8c] sm:$0x1]
      %v408 = vld [vmem:[%s199 + $0x90] sm:$0xf]
      %v409 = vld [vmem:[%s199 + $0x94] sm:$0xf]
      %v410 = vld [vmem:[%s199 + $0x98] sm:$0x1]
      %v411 = vld [vmem:[%s199 + $0x9c] sm:$0xf]
      %v412 = vld [vmem:[%s199 + $0xa0] sm:$0xf]
      %v413 = vld [vmem:[%s199 + $0xa4] sm:$0x1]
      %v414 = vld [vmem:[%s199 + $0xa8] sm:$0xf]
      %v415 = vld [vmem:[%s199 + $0xac] sm:$0xf]
      %v416 = vld [vmem:[%s199 + $0xb0] sm:$0x1]
      %v417 = vld [vmem:[%s199 + $0xb4] sm:$0xf]
      %v418 = vld [vmem:[%s199 + $0xb8] sm:$0xf]
      %v419 = vld [vmem:[%s199 + $0xbc] sm:$0x1]
      %v420 = vld [vmem:[%s199 + $0xc0] sm:$0xf]
      %v421 = vld [vmem:[%s199 + $0xc4] sm:$0xf]
      %v422 = vld [vmem:[%s199 + $0xc8] sm:$0x1]
      %v423 = vld [vmem:[%s199 + $0xcc] sm:$0xf]
      %v424 = vld [vmem:[%s199 + $0xd0] sm:$0xf]
      %v425 = vld [vmem:[%s199 + $0xd4] sm:$0x1]
      %v480 = vunpack.c.l.b16 %v372
      %v481 = vunpack.c.l.b16 %v373
      %v482 = vunpack.c.l.b16 %v374
      %v483 = vunpack.c.l.b16 %v375
      %v484 = vunpack.c.l.b16 %v376
      %v485 = vunpack.c.l.b16 %v377
      %v486 = vunpack.c.l.b16 %v378
      %v487 = vunpack.c.l.b16 %v379
      %v488 = vunpack.c.l.b16 %v380
      %v489 = vunpack.c.l.b16 %v381
      %v490 = vunpack.c.l.b16 %v382
      %v491 = vunpack.c.l.b16 %v383
      %v492 = vunpack.c.l.b16 %v384
      %v493 = vunpack.c.l.b16 %v385
      %v494 = vunpack.c.l.b16 %v386
      %v495 = vunpack.c.l.b16 %v387
      %v496 = vunpack.c.l.b16 %v388
      %v497 = vunpack.c.l.b16 %v389
      %v498 = vunpack.c.l.b16 %v390
      %v499 = vunpack.c.l.b16 %v391
      %v500 = vunpack.c.l.b16 %v392
      %v501 = vunpack.c.l.b16 %v393
      %v502 = vunpack.c.l.b16 %v394
      %v503 = vunpack.c.l.b16 %v395
      %v504 = vunpack.c.l.b16 %v396
      %v505 = vunpack.c.l.b16 %v397
      %v506 = vunpack.c.l.b16 %v398
      %v507 = vunpack.c.l.b16 %v399
      %v508 = vunpack.c.l.b16 %v400
      %v509 = vunpack.c.l.b16 %v401
      %v510 = vunpack.c.l.b16 %v402
      %v511 = vunpack.c.l.b16 %v403
      %v512 = vunpack.c.l.b16 %v404
      %v513 = vunpack.c.l.b16 %v405
      %v514 = vunpack.c.l.b16 %v406
      %v515 = vunpack.c.l.b16 %v407
      %v516 = vunpack.c.l.b16 %v408
      %v517 = vunpack.c.l.b16 %v409
      %v518 = vunpack.c.l.b16 %v410
      %v519 = vunpack.c.l.b16 %v411
      %v520 = vunpack.c.l.b16 %v412
      %v521 = vunpack.c.l.b16 %v413
      %v522 = vunpack.c.l.b16 %v414
      %v523 = vunpack.c.l.b16 %v415
      %v524 = vunpack.c.l.b16 %v416
      %v525 = vunpack.c.l.b16 %v417
      %v526 = vunpack.c.l.b16 %v418
      %v527 = vunpack.c.l.b16 %v419
      %v528 = vunpack.c.l.b16 %v420
      %v529 = vunpack.c.l.b16 %v421
      %v530 = vunpack.c.l.b16 %v422
      %v531 = vunpack.c.l.b16 %v423
      %v532 = vunpack.c.l.b16 %v424
      %v533 = vunpack.c.l.b16 %v425
      %v534 = vpack.c.b16 %v481, %v480
      %v535 = vpack.c.b16 %v482, %v482
      %v536 = vpack.c.b16 %v484, %v483
      %v537 = vpack.c.b16 %v485, %v485
      %v538 = vpack.c.b16 %v487, %v486
      %v539 = vpack.c.b16 %v488, %v488
      %v540 = vpack.c.b16 %v490, %v489
      %v541 = vpack.c.b16 %v491, %v491
      %v542 = vpack.c.b16 %v493, %v492
      %v543 = vpack.c.b16 %v494, %v494
      %v544 = vpack.c.b16 %v496, %v495
      %v545 = vpack.c.b16 %v497, %v497
      %v546 = vpack.c.b16 %v499, %v498
      %v547 = vpack.c.b16 %v500, %v500
      %v548 = vpack.c.b16 %v502, %v501
      %v549 = vpack.c.b16 %v503, %v503
      %v550 = vpack.c.b16 %v505, %v504
      %v551 = vpack.c.b16 %v506, %v506
      %v552 = vpack.c.b16 %v508, %v507
      %v553 = vpack.c.b16 %v509, %v509
      %v554 = vpack.c.b16 %v511, %v510
      %v555 = vpack.c.b16 %v512, %v512
      %v556 = vpack.c.b16 %v514, %v513
      %v557 = vpack.c.b16 %v515, %v515
      %v558 = vpack.c.b16 %v517, %v516
      %v559 = vpack.c.b16 %v518, %v518
      %v560 = vpack.c.b16 %v520, %v519
      %v561 = vpack.c.b16 %v521, %v521
      %v562 = vpack.c.b16 %v523, %v522
      %v563 = vpack.c.b16 %v524, %v524
      %v564 = vpack.c.b16 %v526, %v525
      %v565 = vpack.c.b16 %v527, %v527
      %v566 = vpack.c.b16 %v529, %v528
      %v567 = vpack.c.b16 %v530, %v530
      %v568 = vpack.c.b16 %v532, %v531
      %v569 = vpack.c.b16 %v533, %v533
      %vm570 = vsmask.f32 7424
      %v572 = vshrl.u32 %v534, 16
      %v574 = vshll.u32 %v534, 16
      %v576 = vrot.slane %v574, 1
      %v577 = vor.u32 %v572, %v576
      %v579 = vshll.u32 %v535, 16
      %v581 = vrot.slane %v579, 1
      %v582 = vsel %vm570, %v577, %v581
      %v584 = vshrl.u32 %v536, 16
      %v586 = vshll.u32 %v536, 16
      %v588 = vrot.slane %v586, 1
      %v589 = vor.u32 %v584, %v588
      %v591 = vshll.u32 %v537, 16
      %v593 = vrot.slane %v591, 1
      %v594 = vsel %vm570, %v589, %v593
      %v596 = vshrl.u32 %v538, 16
      %v598 = vshll.u32 %v538, 16
      %v600 = vrot.slane %v598, 1
      %v601 = vor.u32 %v596, %v600
      %v603 = vshll.u32 %v539, 16
      %v605 = vrot.slane %v603, 1
      %v606 = vsel %vm570, %v601, %v605
      %v608 = vshrl.u32 %v540, 16
      %v610 = vshll.u32 %v540, 16
      %v612 = vrot.slane %v610, 1
      %v613 = vor.u32 %v608, %v612
      %v615 = vshll.u32 %v541, 16
      %v617 = vrot.slane %v615, 1
      %v618 = vsel %vm570, %v613, %v617
      %v620 = vshrl.u32 %v542, 16
      %v622 = vshll.u32 %v542, 16
      %v624 = vrot.slane %v622, 1
      %v625 = vor.u32 %v620, %v624
      %v627 = vshll.u32 %v543, 16
      %v629 = vrot.slane %v627, 1
      %v630 = vsel %vm570, %v625, %v629
      %v632 = vshrl.u32 %v544, 16
      %v634 = vshll.u32 %v544, 16
      %v636 = vrot.slane %v634, 1
      %v637 = vor.u32 %v632, %v636
      %v639 = vshll.u32 %v545, 16
      %v641 = vrot.slane %v639, 1
      %v642 = vsel %vm570, %v637, %v641
      %v644 = vshrl.u32 %v546, 16
      %v646 = vshll.u32 %v546, 16
      %v648 = vrot.slane %v646, 1
      %v649 = vor.u32 %v644, %v648
      %v651 = vshll.u32 %v547, 16
      %v653 = vrot.slane %v651, 1
      %v654 = vsel %vm570, %v649, %v653
      %v656 = vshrl.u32 %v548, 16
      %v658 = vshll.u32 %v548, 16
      %v660 = vrot.slane %v658, 1
      %v661 = vor.u32 %v656, %v660
      %v663 = vshll.u32 %v549, 16
      %v665 = vrot.slane %v663, 1
      %v666 = vsel %vm570, %v661, %v665
      %v668 = vshrl.u32 %v550, 16
      %v670 = vshll.u32 %v550, 16
      %v672 = vrot.slane %v670, 1
      %v673 = vor.u32 %v668, %v672
      %v675 = vshll.u32 %v551, 16
      %v677 = vrot.slane %v675, 1
      %v678 = vsel %vm570, %v673, %v677
      %v680 = vshrl.u32 %v552, 16
      %v682 = vshll.u32 %v552, 16
      %v684 = vrot.slane %v682, 1
      %v685 = vor.u32 %v680, %v684
      %v687 = vshll.u32 %v553, 16
      %v689 = vrot.slane %v687, 1
      %v690 = vsel %vm570, %v685, %v689
      %v692 = vshrl.u32 %v554, 16
      %v694 = vshll.u32 %v554, 16
      %v696 = vrot.slane %v694, 1
      %v697 = vor.u32 %v692, %v696
      %v699 = vshll.u32 %v555, 16
      %v701 = vrot.slane %v699, 1
      %v702 = vsel %vm570, %v697, %v701
      %v704 = vshrl.u32 %v556, 16
      %v706 = vshll.u32 %v556, 16
      %v708 = vrot.slane %v706, 1
      %v709 = vor.u32 %v704, %v708
      %v711 = vshll.u32 %v557, 16
      %v713 = vrot.slane %v711, 1
      %v714 = vsel %vm570, %v709, %v713
      %v716 = vshrl.u32 %v558, 16
      %v718 = vshll.u32 %v558, 16
      %v720 = vrot.slane %v718, 1
      %v721 = vor.u32 %v716, %v720
      %v723 = vshll.u32 %v559, 16
      %v725 = vrot.slane %v723, 1
      %v726 = vsel %vm570, %v721, %v725
      %v728 = vshrl.u32 %v560, 16
      %v730 = vshll.u32 %v560, 16
      %v732 = vrot.slane %v730, 1
      %v733 = vor.u32 %v728, %v732
      %v735 = vshll.u32 %v561, 16
      %v737 = vrot.slane %v735, 1
      %v738 = vsel %vm570, %v733, %v737
      %v740 = vshrl.u32 %v562, 16
      %v742 = vshll.u32 %v562, 16
      %v744 = vrot.slane %v742, 1
      %v745 = vor.u32 %v740, %v744
      %v747 = vshll.u32 %v563, 16
      %v749 = vrot.slane %v747, 1
      %v750 = vsel %vm570, %v745, %v749
      %v752 = vshrl.u32 %v564, 16
      %v754 = vshll.u32 %v564, 16
      %v756 = vrot.slane %v754, 1
      %v757 = vor.u32 %v752, %v756
      %v759 = vshll.u32 %v565, 16
      %v761 = vrot.slane %v759, 1
      %v762 = vsel %vm570, %v757, %v761
      %v764 = vshrl.u32 %v566, 16
      %v766 = vshll.u32 %v566, 16
      %v768 = vrot.slane %v766, 1
      %v769 = vor.u32 %v764, %v768
      %v771 = vshll.u32 %v567, 16
      %v773 = vrot.slane %v771, 1
      %v774 = vsel %vm570, %v769, %v773
      %v776 = vshrl.u32 %v568, 16
      %v778 = vshll.u32 %v568, 16
      %v780 = vrot.slane %v778, 1
      %v781 = vor.u32 %v776, %v780
      %v783 = vshll.u32 %v569, 16
      %v785 = vrot.slane %v783, 1
      %v786 = vsel %vm570, %v781, %v785
      %805 = vst [vmem:[#allocation2 + $0x8] sm:$0xff] %v582
      %806 = vst [vmem:[#allocation2 + $0x20] sm:$0xff] %v594
      %807 = vst [vmem:[#allocation2 + $0x38] sm:$0xff] %v606
      %808 = vst [vmem:[#allocation2 + $0x50] sm:$0xff] %v618
      %809 = vst [vmem:[#allocation2 + $0x68] sm:$0xff] %v630
      %810 = vst [vmem:[#allocation2 + $0x80] sm:$0xff] %v642
      %811 = vst [vmem:[#allocation2 + $0x98] sm:$0xff] %v654
      %812 = vst [vmem:[#allocation2 + $0xb0] sm:$0xff] %v666
      %813 = vst [vmem:[#allocation2 + $0xc8] sm:$0xff] %v678
      %814 = vst [vmem:[#allocation2 + $0xe0] sm:$0xff] %v690
      %815 = vst [vmem:[#allocation2 + $0xf8] sm:$0xff] %v702
      %816 = vst [vmem:[#allocation2 + $0x110] sm:$0xff] %v714
      %817 = vst [vmem:[#allocation2 + $0x128] sm:$0xff] %v726
      %818 = vst [vmem:[#allocation2 + $0x140] sm:$0xff] %v738
      %819 = vst [vmem:[#allocation2 + $0x158] sm:$0xff] %v750
      %820 = vst [vmem:[#allocation2 + $0x170] sm:$0xff] %v762
      %821 = vst [vmem:[#allocation2 + $0x188] sm:$0xff] %v774
      %822 = vst [vmem:[#allocation2 + $0x1a0] sm:$0xff] %v786
      %v823 = vld [vmem:[%s199] sm:$0xe]
      %v824 = vld [vmem:[%s199 + $0x4] sm:$0xf]
      %v825 = vld [vmem:[%s199 + $0x8] sm:$0x1]
      %v826 = vld [vmem:[%s199 + $0xc] sm:$0xe]
      %v827 = vld [vmem:[%s199 + $0x10] sm:$0xf]
      %v828 = vld [vmem:[%s199 + $0x14] sm:$0x1]
      %v829 = vld [vmem:[%s199 + $0x18] sm:$0xe]
      %v830 = vld [vmem:[%s199 + $0x1c] sm:$0xf]
      %v831 = vld [vmem:[%s199 + $0x20] sm:$0x1]
      %v832 = vld [vmem:[%s199 + $0x24] sm:$0xe]
      %v833 = vld [vmem:[%s199 + $0x28] sm:$0xf]
      %v834 = vld [vmem:[%s199 + $0x2c] sm:$0x1]
      %v835 = vld [vmem:[%s199 + $0x30] sm:$0xe]
      %v836 = vld [vmem:[%s199 + $0x34] sm:$0xf]
      %v837 = vld [vmem:[%s199 + $0x38] sm:$0x1]
      %v838 = vld [vmem:[%s199 + $0x3c] sm:$0xe]
      %v839 = vld [vmem:[%s199 + $0x40] sm:$0xf]
      %v840 = vld [vmem:[%s199 + $0x44] sm:$0x1]
      %v841 = vld [vmem:[%s199 + $0x48] sm:$0xe]
      %v842 = vld [vmem:[%s199 + $0x4c] sm:$0xf]
      %v843 = vld [vmem:[%s199 + $0x50] sm:$0x1]
      %v844 = vld [vmem:[%s199 + $0x54] sm:$0xe]
      %v845 = vld [vmem:[%s199 + $0x58] sm:$0xf]
      %v846 = vld [vmem:[%s199 + $0x5c] sm:$0x1]
      %v847 = vld [vmem:[%s199 + $0x60] sm:$0xe]
      %v848 = vld [vmem:[%s199 + $0x64] sm:$0xf]
      %v849 = vld [vmem:[%s199 + $0x68] sm:$0x1]
      %v850 = vld [vmem:[%s199 + $0x6c] sm:$0xe]
      %v851 = vld [vmem:[%s199 + $0x70] sm:$0xf]
      %v852 = vld [vmem:[%s199 + $0x74] sm:$0x1]
      %v853 = vld [vmem:[%s199 + $0x78] sm:$0xe]
      %v854 = vld [vmem:[%s199 + $0x7c] sm:$0xf]
      %v855 = vld [vmem:[%s199 + $0x80] sm:$0x1]
      %v856 = vld [vmem:[%s199 + $0x84] sm:$0xe]
      %v857 = vld [vmem:[%s199 + $0x88] sm:$0xf]
      %v858 = vld [vmem:[%s199 + $0x8c] sm:$0x1]
      %v859 = vld [vmem:[%s199 + $0x90] sm:$0xe]
      %v860 = vld [vmem:[%s199 + $0x94] sm:$0xf]
      %v861 = vld [vmem:[%s199 + $0x98] sm:$0x1]
      %v862 = vld [vmem:[%s199 + $0x9c] sm:$0xe]
      %v863 = vld [vmem:[%s199 + $0xa0] sm:$0xf]
      %v864 = vld [vmem:[%s199 + $0xa4] sm:$0x1]
      %v865 = vld [vmem:[%s199 + $0xa8] sm:$0xe]
      %v866 = vld [vmem:[%s199 + $0xac] sm:$0xf]
      %v867 = vld [vmem:[%s199 + $0xb0] sm:$0x1]
      %v868 = vld [vmem:[%s199 + $0xb4] sm:$0xe]
      %v869 = vld [vmem:[%s199 + $0xb8] sm:$0xf]
      %v870 = vld [vmem:[%s199 + $0xbc] sm:$0x1]
      %v871 = vld [vmem:[%s199 + $0xc0] sm:$0xe]
      %v872 = vld [vmem:[%s199 + $0xc4] sm:$0xf]
      %v873 = vld [vmem:[%s199 + $0xc8] sm:$0x1]
      %v874 = vld [vmem:[%s199 + $0xcc] sm:$0xe]
      %v875 = vld [vmem:[%s199 + $0xd0] sm:$0xf]
      %v876 = vld [vmem:[%s199 + $0xd4] sm:$0x1]
      %v931 = vunpack.c.l.b16 %v823
      %v932 = vunpack.c.l.b16 %v824
      %v933 = vunpack.c.l.b16 %v825
      %v934 = vunpack.c.l.b16 %v826
      %v935 = vunpack.c.l.b16 %v827
      %v936 = vunpack.c.l.b16 %v828
      %v937 = vunpack.c.l.b16 %v829
      %v938 = vunpack.c.l.b16 %v830
      %v939 = vunpack.c.l.b16 %v831
      %v940 = vunpack.c.l.b16 %v832
      %v941 = vunpack.c.l.b16 %v833
      %v942 = vunpack.c.l.b16 %v834
      %v943 = vunpack.c.l.b16 %v835
      %v944 = vunpack.c.l.b16 %v836
      %v945 = vunpack.c.l.b16 %v837
      %v946 = vunpack.c.l.b16 %v838
      %v947 = vunpack.c.l.b16 %v839
      %v948 = vunpack.c.l.b16 %v840
      %v949 = vunpack.c.l.b16 %v841
      %v950 = vunpack.c.l.b16 %v842
      %v951 = vunpack.c.l.b16 %v843
      %v952 = vunpack.c.l.b16 %v844
      %v953 = vunpack.c.l.b16 %v845
      %v954 = vunpack.c.l.b16 %v846
      %v955 = vunpack.c.l.b16 %v847
      %v956 = vunpack.c.l.b16 %v848
      %v957 = vunpack.c.l.b16 %v849
      %v958 = vunpack.c.l.b16 %v850
      %v959 = vunpack.c.l.b16 %v851
      %v960 = vunpack.c.l.b16 %v852
      %v961 = vunpack.c.l.b16 %v853
      %v962 = vunpack.c.l.b16 %v854
      %v963 = vunpack.c.l.b16 %v855
      %v964 = vunpack.c.l.b16 %v856
      %v965 = vunpack.c.l.b16 %v857
      %v966 = vunpack.c.l.b16 %v858
      %v967 = vunpack.c.l.b16 %v859
      %v968 = vunpack.c.l.b16 %v860
      %v969 = vunpack.c.l.b16 %v861
      %v970 = vunpack.c.l.b16 %v862
      %v971 = vunpack.c.l.b16 %v863
      %v972 = vunpack.c.l.b16 %v864
      %v973 = vunpack.c.l.b16 %v865
      %v974 = vunpack.c.l.b16 %v866
      %v975 = vunpack.c.l.b16 %v867
      %v976 = vunpack.c.l.b16 %v868
      %v977 = vunpack.c.l.b16 %v869
      %v978 = vunpack.c.l.b16 %v870
      %v979 = vunpack.c.l.b16 %v871
      %v980 = vunpack.c.l.b16 %v872
      %v981 = vunpack.c.l.b16 %v873
      %v982 = vunpack.c.l.b16 %v874
      %v983 = vunpack.c.l.b16 %v875
      %v984 = vunpack.c.l.b16 %v876
      %v985 = vpack.c.b16 %v932, %v931
      %v986 = vpack.c.b16 %v933, %v933
      %v987 = vpack.c.b16 %v935, %v934
      %v988 = vpack.c.b16 %v936, %v936
      %v989 = vpack.c.b16 %v938, %v937
      %v990 = vpack.c.b16 %v939, %v939
      %v991 = vpack.c.b16 %v941, %v940
      %v992 = vpack.c.b16 %v942, %v942
      %v993 = vpack.c.b16 %v944, %v943
      %v994 = vpack.c.b16 %v945, %v945
      %v995 = vpack.c.b16 %v947, %v946
      %v996 = vpack.c.b16 %v948, %v948
      %v997 = vpack.c.b16 %v950, %v949
      %v998 = vpack.c.b16 %v951, %v951
      %v999 = vpack.c.b16 %v953, %v952
      %v1000 = vpack.c.b16 %v954, %v954
      %v1001 = vpack.c.b16 %v956, %v955
      %v1002 = vpack.c.b16 %v957, %v957
      %v1003 = vpack.c.b16 %v959, %v958
      %v1004 = vpack.c.b16 %v960, %v960
      %v1005 = vpack.c.b16 %v962, %v961
      %v1006 = vpack.c.b16 %v963, %v963
      %v1007 = vpack.c.b16 %v965, %v964
      %v1008 = vpack.c.b16 %v966, %v966
      %v1009 = vpack.c.b16 %v968, %v967
      %v1010 = vpack.c.b16 %v969, %v969
      %v1011 = vpack.c.b16 %v971, %v970
      %v1012 = vpack.c.b16 %v972, %v972
      %v1013 = vpack.c.b16 %v974, %v973
      %v1014 = vpack.c.b16 %v975, %v975
      %v1015 = vpack.c.b16 %v977, %v976
      %v1016 = vpack.c.b16 %v978, %v978
      %v1017 = vpack.c.b16 %v980, %v979
      %v1018 = vpack.c.b16 %v981, %v981
      %v1019 = vpack.c.b16 %v983, %v982
      %v1020 = vpack.c.b16 %v984, %v984
      %vm1021 = vcmask 1046528
      %v1022 = vrot.slane %v985, 1
      %v1023 = vrot.slane %v986, 1
      %v1024 = vsel %vm1021, %v1022, %v1023
      %v1025 = vrot.slane %v987, 1
      %v1026 = vrot.slane %v988, 1
      %v1027 = vsel %vm1021, %v1025, %v1026
      %v1028 = vrot.slane %v989, 1
      %v1029 = vrot.slane %v990, 1
      %v1030 = vsel %vm1021, %v1028, %v1029
      %v1031 = vrot.slane %v991, 1
      %v1032 = vrot.slane %v992, 1
      %v1033 = vsel %vm1021, %v1031, %v1032
      %v1034 = vrot.slane %v993, 1
      %v1035 = vrot.slane %v994, 1
      %v1036 = vsel %vm1021, %v1034, %v1035
      %v1037 = vrot.slane %v995, 1
      %v1038 = vrot.slane %v996, 1
      %v1039 = vsel %vm1021, %v1037, %v1038
      %v1040 = vrot.slane %v997, 1
      %v1041 = vrot.slane %v998, 1
      %v1042 = vsel %vm1021, %v1040, %v1041
      %v1043 = vrot.slane %v999, 1
      %v1044 = vrot.slane %v1000, 1
      %v1045 = vsel %vm1021, %v1043, %v1044
      %v1046 = vrot.slane %v1001, 1
      %v1047 = vrot.slane %v1002, 1
      %v1048 = vsel %vm1021, %v1046, %v1047
      %v1049 = vrot.slane %v1003, 1
      %v1050 = vrot.slane %v1004, 1
      %v1051 = vsel %vm1021, %v1049, %v1050
      %v1052 = vrot.slane %v1005, 1
      %v1053 = vrot.slane %v1006, 1
      %v1054 = vsel %vm1021, %v1052, %v1053
      %v1055 = vrot.slane %v1007, 1
      %v1056 = vrot.slane %v1008, 1
      %v1057 = vsel %vm1021, %v1055, %v1056
      %v1058 = vrot.slane %v1009, 1
      %v1059 = vrot.slane %v1010, 1
      %v1060 = vsel %vm1021, %v1058, %v1059
      %v1061 = vrot.slane %v1011, 1
      %v1062 = vrot.slane %v1012, 1
      %v1063 = vsel %vm1021, %v1061, %v1062
      %v1064 = vrot.slane %v1013, 1
      %v1065 = vrot.slane %v1014, 1
      %v1066 = vsel %vm1021, %v1064, %v1065
      %v1067 = vrot.slane %v1015, 1
      %v1068 = vrot.slane %v1016, 1
      %v1069 = vsel %vm1021, %v1067, %v1068
      %v1070 = vrot.slane %v1017, 1
      %v1071 = vrot.slane %v1018, 1
      %v1072 = vsel %vm1021, %v1070, %v1071
      %v1073 = vrot.slane %v1019, 1
      %v1074 = vrot.slane %v1020, 1
      %v1075 = vsel %vm1021, %v1073, %v1074
      %1094 = vst [vmem:[#allocation2 + $0x10] sm:$0xff] %v1024
      %1095 = vst [vmem:[#allocation2 + $0x28] sm:$0xff] %v1027
      %1096 = vst [vmem:[#allocation2 + $0x40] sm:$0xff] %v1030
      %1097 = vst [vmem:[#allocation2 + $0x58] sm:$0xff] %v1033
      %1098 = vst [vmem:[#allocation2 + $0x70] sm:$0xff] %v1036
      %1099 = vst [vmem:[#allocation2 + $0x88] sm:$0xff] %v1039
      %1100 = vst [vmem:[#allocation2 + $0xa0] sm:$0xff] %v1042
      %1101 = vst [vmem:[#allocation2 + $0xb8] sm:$0xff] %v1045
      %1102 = vst [vmem:[#allocation2 + $0xd0] sm:$0xff] %v1048
      %1103 = vst [vmem:[#allocation2 + $0xe8] sm:$0xff] %v1051
      %1104 = vst [vmem:[#allocation2 + $0x100] sm:$0xff] %v1054
      %1105 = vst [vmem:[#allocation2 + $0x118] sm:$0xff] %v1057
      %1106 = vst [vmem:[#allocation2 + $0x130] sm:$0xff] %v1060
      %1107 = vst [vmem:[#allocation2 + $0x148] sm:$0xff] %v1063
      %1108 = vst [vmem:[#allocation2 + $0x160] sm:$0xff] %v1066
      %1109 = vst [vmem:[#allocation2 + $0x178] sm:$0xff] %v1069
      %1110 = vst [vmem:[#allocation2 + $0x190] sm:$0xff] %v1072
      %1111 = vst [vmem:[#allocation2 + $0x1a8] sm:$0xff] %v1075
      %v1112 = vld [vmem:[%s2] sm:$0x1]
      %v1113 = vld [vmem:[#allocation2] sm:$0xff]
      %v1114 = vld [vmem:[#allocation2 + $0x8] sm:$0xff]
      %v1115 = vld [vmem:[#allocation2 + $0x10] sm:$0xff]
      %v1116 = vld [vmem:[#allocation2 + $0x18] sm:$0xff]
      %v1117 = vld [vmem:[#allocation2 + $0x20] sm:$0xff]
      %v1118 = vld [vmem:[#allocation2 + $0x28] sm:$0xff]
      %v1119 = vld [vmem:[#allocation2 + $0x30] sm:$0xff]
      %v1120 = vld [vmem:[#allocation2 + $0x38] sm:$0xff]
      %v1121 = vld [vmem:[#allocation2 + $0x40] sm:$0xff]
      %v1122 = vld [vmem:[#allocation2 + $0x48] sm:$0xff]
      %v1123 = vld [vmem:[#allocation2 + $0x50] sm:$0xff]
      %v1124 = vld [vmem:[#allocation2 + $0x58] sm:$0xff]
      %v1125 = vld [vmem:[#allocation2 + $0x60] sm:$0xff]
      %v1126 = vld [vmem:[#allocation2 + $0x68] sm:$0xff]
      %v1127 = vld [vmem:[#allocation2 + $0x70] sm:$0xff]
      %v1128 = vld [vmem:[#allocation2 + $0x78] sm:$0xff]
      %v1129 = vld [vmem:[#allocation2 + $0x80] sm:$0xff]
      %v1130 = vld [vmem:[#allocation2 + $0x88] sm:$0xff]
      %v1131 = vld [vmem:[#allocation2 + $0x90] sm:$0xff]
      %v1132 = vld [vmem:[#allocation2 + $0x98] sm:$0xff]
      %v1133 = vld [vmem:[#allocation2 + $0xa0] sm:$0xff]
      %v1134 = vld [vmem:[#allocation2 + $0xa8] sm:$0xff]
      %v1135 = vld [vmem:[#allocation2 + $0xb0] sm:$0xff]
      %v1136 = vld [vmem:[#allocation2 + $0xb8] sm:$0xff]
      %v1137 = vld [vmem:[#allocation2 + $0xc0] sm:$0xff]
      %v1138 = vld [vmem:[#allocation2 + $0xc8] sm:$0xff]
      %v1139 = vld [vmem:[#allocation2 + $0xd0] sm:$0xff]
      %v1140 = vld [vmem:[#allocation2 + $0xd8] sm:$0xff]
      %v1141 = vld [vmem:[#allocation2 + $0xe0] sm:$0xff]
      %v1142 = vld [vmem:[#allocation2 + $0xe8] sm:$0xff]
      %v1143 = vld [vmem:[#allocation2 + $0xf0] sm:$0xff]
      %v1144 = vld [vmem:[#allocation2 + $0xf8] sm:$0xff]
      %v1145 = vld [vmem:[#allocation2 + $0x100] sm:$0xff]
      %v1146 = vld [vmem:[#allocation2 + $0x108] sm:$0xff]
      %v1147 = vld [vmem:[#allocation2 + $0x110] sm:$0xff]
      %v1148 = vld [vmem:[#allocation2 + $0x118] sm:$0xff]
      %v1149 = vld [vmem:[#allocation2 + $0x120] sm:$0xff]
      %v1150 = vld [vmem:[#allocation2 + $0x128] sm:$0xff]
      %v1151 = vld [vmem:[#allocation2 + $0x130] sm:$0xff]
      %v1152 = vld [vmem:[#allocation2 + $0x138] sm:$0xff]
      %v1153 = vld [vmem:[#allocation2 + $0x140] sm:$0xff]
      %v1154 = vld [vmem:[#allocation2 + $0x148] sm:$0xff]
      %v1155 = vld [vmem:[#allocation2 + $0x150] sm:$0xff]
      %v1156 = vld [vmem:[#allocation2 + $0x158] sm:$0xff]
      %v1157 = vld [vmem:[#allocation2 + $0x160] sm:$0xff]
      %v1158 = vld [vmem:[#allocation2 + $0x168] sm:$0xff]
      %v1159 = vld [vmem:[#allocation2 + $0x170] sm:$0xff]
      %v1160 = vld [vmem:[#allocation2 + $0x178] sm:$0xff]
      %v1161 = vld [vmem:[%s1] sm:$0xf]
      %v1162 = vld [vmem:[%s1 + $0x4] sm:$0xf]
      %v1163 = vld [vmem:[%s1 + $0x8] sm:$0xf]
      %v1164 = vld [vmem:[%s1 + $0xc] sm:$0xf]
      %v1165 = vld [vmem:[%s1 + $0x10] sm:$0xf]
      %v1166 = vld [vmem:[%s1 + $0x14] sm:$0xf]
      %v1167 = vld [vmem:[%s1 + $0x18] sm:$0xf]
      %v1168 = vld [vmem:[%s1 + $0x1c] sm:$0xf]
      %v1169 = vld [vmem:[%s1 + $0x20] sm:$0xf]
      %v1170 = vld [vmem:[%s1 + $0x24] sm:$0xf]
      %v1171 = vld [vmem:[%s1 + $0x28] sm:$0xf]
      %v1172 = vld [vmem:[%s1 + $0x2c] sm:$0xf]
      %v1173 = vld [vmem:[%s1 + $0x30] sm:$0xf]
      %v1174 = vld [vmem:[%s1 + $0x34] sm:$0xf]
      %v1175 = vld [vmem:[%s1 + $0x38] sm:$0xf]
      %v1176 = vld [vmem:[%s1 + $0x3c] sm:$0xf]
      %v1177 = vld [vmem:[%s1 + $0x40] sm:$0xf]
      %v1178 = vld [vmem:[%s1 + $0x44] sm:$0xf]
      %v1179 = vld [vmem:[%s1 + $0x48] sm:$0xf]
      %v1180 = vld [vmem:[%s1 + $0x4c] sm:$0xf]
      %v1181 = vld [vmem:[%s1 + $0x50] sm:$0xf]
      %v1182 = vld [vmem:[%s1 + $0x54] sm:$0xf]
      %v1183 = vld [vmem:[%s1 + $0x58] sm:$0xf]
      %v1184 = vld [vmem:[%s1 + $0x5c] sm:$0xf]
      %v1185 = vld [vmem:[%s1 + $0x60] sm:$0xf]
      %v1186 = vld [vmem:[%s1 + $0x64] sm:$0xf]
      %v1187 = vld [vmem:[%s1 + $0x68] sm:$0xf]
      %v1188 = vld [vmem:[%s1 + $0x6c] sm:$0xf]
      %v1189 = vld [vmem:[%s1 + $0x70] sm:$0xf]
      %v1190 = vld [vmem:[%s1 + $0x74] sm:$0xf]
      %v1191 = vld [vmem:[%s1 + $0x78] sm:$0xf]
      %v1192 = vld [vmem:[%s1 + $0x7c] sm:$0xf]
      %v1193 = vld [vmem:[%s1 + $0x80] sm:$0xf]
      %v1194 = vld [vmem:[%s1 + $0x84] sm:$0xf]
      %v1195 = vld [vmem:[%s1 + $0x88] sm:$0xf]
      %v1196 = vld [vmem:[%s1 + $0x8c] sm:$0xf]
      %v1197 = vld [vmem:[%s1 + $0x90] sm:$0xf]
      %v1198 = vld [vmem:[%s1 + $0x94] sm:$0xf]
      %v1199 = vld [vmem:[%s1 + $0x98] sm:$0xf]
      %v1200 = vld [vmem:[%s1 + $0x9c] sm:$0xf]
      %v1201 = vld [vmem:[%s1 + $0xa0] sm:$0xf]
      %v1202 = vld [vmem:[%s1 + $0xa4] sm:$0xf]
      %v1203 = vld [vmem:[%s1 + $0xa8] sm:$0xf]
      %v1204 = vld [vmem:[%s1 + $0xac] sm:$0xf]
      %v1205 = vld [vmem:[%s1 + $0xb0] sm:$0xf]
      %v1206 = vld [vmem:[%s1 + $0xb4] sm:$0xf]
      %v1207 = vld [vmem:[%s1 + $0xb8] sm:$0xf]
      %v1208 = vld [vmem:[%s1 + $0xbc] sm:$0xf]
      %s1209 = scalar_lea.vmem [#allocation2], 24
      %v1210 = vld [vmem:[%s1209] sm:$0xff]
      %v1211 = vld [vmem:[%s1209 + $0x8] sm:$0xff]
      %v1212 = vld [vmem:[%s1209 + $0x10] sm:$0xff]
      %v1213 = vld [vmem:[%s1209 + $0x18] sm:$0xff]
      %v1214 = vld [vmem:[%s1209 + $0x20] sm:$0xff]
      %v1215 = vld [vmem:[%s1209 + $0x28] sm:$0xff]
      %v1216 = vld [vmem:[%s1209 + $0x30] sm:$0xff]
      %v1217 = vld [vmem:[%s1209 + $0x38] sm:$0xff]
      %v1218 = vld [vmem:[%s1209 + $0x40] sm:$0xff]
      %v1219 = vld [vmem:[%s1209 + $0x48] sm:$0xff]
      %v1220 = vld [vmem:[%s1209 + $0x50] sm:$0xff]
      %v1221 = vld [vmem:[%s1209 + $0x58] sm:$0xff]
      %v1222 = vld [vmem:[%s1209 + $0x60] sm:$0xff]
      %v1223 = vld [vmem:[%s1209 + $0x68] sm:$0xff]
      %v1224 = vld [vmem:[%s1209 + $0x70] sm:$0xff]
      %v1225 = vld [vmem:[%s1209 + $0x78] sm:$0xff]
      %v1226 = vld [vmem:[%s1209 + $0x80] sm:$0xff]
      %v1227 = vld [vmem:[%s1209 + $0x88] sm:$0xff]
      %v1228 = vld [vmem:[%s1209 + $0x90] sm:$0xff]
      %v1229 = vld [vmem:[%s1209 + $0x98] sm:$0xff]
      %v1230 = vld [vmem:[%s1209 + $0xa0] sm:$0xff]
      %v1231 = vld [vmem:[%s1209 + $0xa8] sm:$0xff]
      %v1232 = vld [vmem:[%s1209 + $0xb0] sm:$0xff]
      %v1233 = vld [vmem:[%s1209 + $0xb8] sm:$0xff]
      %v1234 = vld [vmem:[%s1209 + $0xc0] sm:$0xff]
      %v1235 = vld [vmem:[%s1209 + $0xc8] sm:$0xff]
      %v1236 = vld [vmem:[%s1209 + $0xd0] sm:$0xff]
      %v1237 = vld [vmem:[%s1209 + $0xd8] sm:$0xff]
      %v1238 = vld [vmem:[%s1209 + $0xe0] sm:$0xff]
      %v1239 = vld [vmem:[%s1209 + $0xe8] sm:$0xff]
      %v1240 = vld [vmem:[%s1209 + $0xf0] sm:$0xff]
      %v1241 = vld [vmem:[%s1209 + $0xf8] sm:$0xff]
      %v1242 = vld [vmem:[%s1209 + $0x100] sm:$0xff]
      %v1243 = vld [vmem:[%s1209 + $0x108] sm:$0xff]
      %v1244 = vld [vmem:[%s1209 + $0x110] sm:$0xff]
      %v1245 = vld [vmem:[%s1209 + $0x118] sm:$0xff]
      %v1246 = vld [vmem:[%s1209 + $0x120] sm:$0xff]
      %v1247 = vld [vmem:[%s1209 + $0x128] sm:$0xff]
      %v1248 = vld [vmem:[%s1209 + $0x130] sm:$0xff]
      %v1249 = vld [vmem:[%s1209 + $0x138] sm:$0xff]
      %v1250 = vld [vmem:[%s1209 + $0x140] sm:$0xff]
      %v1251 = vld [vmem:[%s1209 + $0x148] sm:$0xff]
      %v1252 = vld [vmem:[%s1209 + $0x150] sm:$0xff]
      %v1253 = vld [vmem:[%s1209 + $0x158] sm:$0xff]
      %v1254 = vld [vmem:[%s1209 + $0x160] sm:$0xff]
      %v1255 = vld [vmem:[%s1209 + $0x168] sm:$0xff]
      %v1256 = vld [vmem:[%s1209 + $0x170] sm:$0xff]
      %v1257 = vld [vmem:[%s1209 + $0x178] sm:$0xff]
      %s1258 = scalar_lea.vmem %s1, 192
      %v1259 = vld [vmem:[%s1258] sm:$0xf]
      %v1260 = vld [vmem:[%s1258 + $0x4] sm:$0xf]
      %v1261 = vld [vmem:[%s1258 + $0x8] sm:$0xf]
      %v1262 = vld [vmem:[%s1258 + $0xc] sm:$0xf]
      %v1263 = vld [vmem:[%s1258 + $0x10] sm:$0xf]
      %v1264 = vld [vmem:[%s1258 + $0x14] sm:$0xf]
      %v1265 = vld [vmem:[%s1258 + $0x18] sm:$0xf]
      %v1266 = vld [vmem:[%s1258 + $0x1c] sm:$0xf]
      %v1267 = vld [vmem:[%s1258 + $0x20] sm:$0xf]
      %v1268 = vld [vmem:[%s1258 + $0x24] sm:$0xf]
      %v1269 = vld [vmem:[%s1258 + $0x28] sm:$0xf]
      %v1270 = vld [vmem:[%s1258 + $0x2c] sm:$0xf]
      %v1271 = vld [vmem:[%s1258 + $0x30] sm:$0xf]
      %v1272 = vld [vmem:[%s1258 + $0x34] sm:$0xf]
      %v1273 = vld [vmem:[%s1258 + $0x38] sm:$0xf]
      %v1274 = vld [vmem:[%s1258 + $0x3c] sm:$0xf]
      %v1275 = vld [vmem:[%s1258 + $0x40] sm:$0xf]
      %v1276 = vld [vmem:[%s1258 + $0x44] sm:$0xf]
      %v1277 = vld [vmem:[%s1258 + $0x48] sm:$0xf]
      %v1278 = vld [vmem:[%s1258 + $0x4c] sm:$0xf]
      %v1279 = vld [vmem:[%s1258 + $0x50] sm:$0xf]
      %v1280 = vld [vmem:[%s1258 + $0x54] sm:$0xf]
      %v1281 = vld [vmem:[%s1258 + $0x58] sm:$0xf]
      %v1282 = vld [vmem:[%s1258 + $0x5c] sm:$0xf]
      %v1283 = vld [vmem:[%s1258 + $0x60] sm:$0xf]
      %v1284 = vld [vmem:[%s1258 + $0x64] sm:$0xf]
      %v1285 = vld [vmem:[%s1258 + $0x68] sm:$0xf]
      %v1286 = vld [vmem:[%s1258 + $0x6c] sm:$0xf]
      %v1287 = vld [vmem:[%s1258 + $0x70] sm:$0xf]
      %v1288 = vld [vmem:[%s1258 + $0x74] sm:$0xf]
      %v1289 = vld [vmem:[%s1258 + $0x78] sm:$0xf]
      %v1290 = vld [vmem:[%s1258 + $0x7c] sm:$0xf]
      %v1291 = vld [vmem:[%s1258 + $0x80] sm:$0xf]
      %v1292 = vld [vmem:[%s1258 + $0x84] sm:$0xf]
      %v1293 = vld [vmem:[%s1258 + $0x88] sm:$0xf]
      %v1294 = vld [vmem:[%s1258 + $0x8c] sm:$0xf]
      %v1295 = vld [vmem:[%s1258 + $0x90] sm:$0xf]
      %v1296 = vld [vmem:[%s1258 + $0x94] sm:$0xf]
      %v1297 = vld [vmem:[%s1258 + $0x98] sm:$0xf]
      %v1298 = vld [vmem:[%s1258 + $0x9c] sm:$0xf]
      %v1299 = vld [vmem:[%s1258 + $0xa0] sm:$0xf]
      %v1300 = vld [vmem:[%s1258 + $0xa4] sm:$0xf]
      %v1301 = vld [vmem:[%s1258 + $0xa8] sm:$0xf]
      %v1302 = vld [vmem:[%s1258 + $0xac] sm:$0xf]
      %v1303 = vld [vmem:[%s1258 + $0xb0] sm:$0xf]
      %v1304 = vld [vmem:[%s1258 + $0xb4] sm:$0xf]
      %v1305 = vld [vmem:[%s1258 + $0xb8] sm:$0xf]
      %v1306 = vld [vmem:[%s1258 + $0xbc] sm:$0xf]
      %v1355 = vunpack.c.l.b16 %v1259
      %v1356 = vunpack.c.l.b16 %v1260
      %v1357 = vunpack.c.l.b16 %v1261
      %v1358 = vunpack.c.l.b16 %v1262
      %v1359 = vunpack.c.l.b16 %v1263
      %v1360 = vunpack.c.l.b16 %v1264
      %v1361 = vunpack.c.l.b16 %v1265
      %v1362 = vunpack.c.l.b16 %v1266
      %v1363 = vunpack.c.l.b16 %v1267
      %v1364 = vunpack.c.l.b16 %v1268
      %v1365 = vunpack.c.l.b16 %v1269
      %v1366 = vunpack.c.l.b16 %v1270
      %v1367 = vunpack.c.l.b16 %v1271
      %v1368 = vunpack.c.l.b16 %v1272
      %v1369 = vunpack.c.l.b16 %v1273
      %v1370 = vunpack.c.l.b16 %v1274
      %v1371 = vunpack.c.l.b16 %v1275
      %v1372 = vunpack.c.l.b16 %v1276
      %v1373 = vunpack.c.l.b16 %v1277
      %v1374 = vunpack.c.l.b16 %v1278
      %v1375 = vunpack.c.l.b16 %v1279
      %v1376 = vunpack.c.l.b16 %v1280
      %v1377 = vunpack.c.l.b16 %v1281
      %v1378 = vunpack.c.l.b16 %v1282
      %v1379 = vunpack.c.l.b16 %v1283
      %v1380 = vunpack.c.l.b16 %v1284
      %v1381 = vunpack.c.l.b16 %v1285
      %v1382 = vunpack.c.l.b16 %v1286
      %v1383 = vunpack.c.l.b16 %v1287
      %v1384 = vunpack.c.l.b16 %v1288
      %v1385 = vunpack.c.l.b16 %v1289
      %v1386 = vunpack.c.l.b16 %v1290
      %v1387 = vunpack.c.l.b16 %v1291
      %v1388 = vunpack.c.l.b16 %v1292
      %v1389 = vunpack.c.l.b16 %v1293
      %v1390 = vunpack.c.l.b16 %v1294
      %v1391 = vunpack.c.l.b16 %v1295
      %v1392 = vunpack.c.l.b16 %v1296
      %v1393 = vunpack.c.l.b16 %v1297
      %v1394 = vunpack.c.l.b16 %v1298
      %v1395 = vunpack.c.l.b16 %v1299
      %v1396 = vunpack.c.l.b16 %v1300
      %v1397 = vunpack.c.l.b16 %v1301
      %v1398 = vunpack.c.l.b16 %v1302
      %v1399 = vunpack.c.l.b16 %v1303
      %v1400 = vunpack.c.l.b16 %v1304
      %v1401 = vunpack.c.l.b16 %v1305
      %v1402 = vunpack.c.l.b16 %v1306
      %v1403 = vpack.c.b16 %v1356, %v1355
      %v1404 = vpack.c.b16 %v1358, %v1357
      %v1405 = vpack.c.b16 %v1360, %v1359
      %v1406 = vpack.c.b16 %v1362, %v1361
      %v1407 = vpack.c.b16 %v1364, %v1363
      %v1408 = vpack.c.b16 %v1366, %v1365
      %v1409 = vpack.c.b16 %v1368, %v1367
      %v1410 = vpack.c.b16 %v1370, %v1369
      %v1411 = vpack.c.b16 %v1372, %v1371
      %v1412 = vpack.c.b16 %v1374, %v1373
      %v1413 = vpack.c.b16 %v1376, %v1375
      %v1414 = vpack.c.b16 %v1378, %v1377
      %v1415 = vpack.c.b16 %v1380, %v1379
      %v1416 = vpack.c.b16 %v1382, %v1381
      %v1417 = vpack.c.b16 %v1384, %v1383
      %v1418 = vpack.c.b16 %v1386, %v1385
      %v1419 = vpack.c.b16 %v1388, %v1387
      %v1420 = vpack.c.b16 %v1390, %v1389
      %v1421 = vpack.c.b16 %v1392, %v1391
      %v1422 = vpack.c.b16 %v1394, %v1393
      %v1423 = vpack.c.b16 %v1396, %v1395
      %v1424 = vpack.c.b16 %v1398, %v1397
      %v1425 = vpack.c.b16 %v1400, %v1399
      %v1426 = vpack.c.b16 %v1402, %v1401
      %1451 = vmatprep.subr.bf16.mxu0 0
      %1452 = vmatpush1.bf16.msra.mxu0 %v1403
      %1453 = vmatprep.subr.bf16.mxu0 0
      %1454 = vmatpush1.bf16.msra.mxu0 %v1404
      %1455 = vmatprep.subr.bf16.mxu0 0
      %1456 = vmatpush1.bf16.msra.mxu0 %v1405
      %1457 = vmatprep.subr.bf16.mxu0 0
      %1458 = vmatpush1.bf16.msra.mxu0 %v1406
      %1459 = vmatprep.subr.bf16.mxu0 0
      %1460 = vmatpush1.bf16.msra.mxu0 %v1407
      %1461 = vmatprep.subr.bf16.mxu0 0
      %1462 = vmatpush1.bf16.msra.mxu0 %v1408
      %1463 = vmatprep.subr.bf16.mxu0 0
      %1464 = vmatpush1.bf16.msra.mxu0 %v1409
      %1465 = vmatprep.subr.bf16.mxu0 0
      %1466 = vmatpush1.bf16.msra.mxu0 %v1410
      %1467 = vmatprep.subr.bf16.mxu0 0
      %1468 = vmatpush1.bf16.msra.mxu0 %v1411
      %1469 = vmatprep.subr.bf16.mxu0 0
      %1470 = vmatpush1.bf16.msra.mxu0 %v1412
      %1471 = vmatprep.subr.bf16.mxu0 0
      %1472 = vmatpush1.bf16.msra.mxu0 %v1413
      %1473 = vmatprep.subr.bf16.mxu0 0
      %1474 = vmatpush1.bf16.msra.mxu0 %v1414
      %1475 = vmatprep.subr.bf16.mxu0 0
      %1476 = vmatpush1.bf16.msra.mxu0 %v1415
      %1477 = vmatprep.subr.bf16.mxu0 0
      %1478 = vmatpush1.bf16.msra.mxu0 %v1416
      %1479 = vmatprep.subr.bf16.mxu0 0
      %1480 = vmatpush1.bf16.msra.mxu0 %v1417
      %1481 = vmatprep.subr.bf16.mxu0 0
      %1482 = vmatpush1.bf16.msra.mxu0 %v1418
      %1483 = vmatprep.mubr.bf16.mxu0 %v1211
      %1484 = vmatmul.mubr.bf16.gmra.mrb[0].mxu0 %v1210
      %v1485 = vpop.f32.mrb[0].mxu0
      %v1486 = vadd.f32 0.0, %v1485
      %v1487 = vpop.f32.mrb[0].mxu0
      %v1488 = vpop.f32.mrb[0].mxu0
      %v1489 = vadd.f32 0.0, %v1488
      %v1490 = vpop.f32.mrb[0].mxu0
      %1491 = vmatprep.mubr.bf16.mxu0 %v1214
      %1492 = vmatmul.mubr.bf16.gmra.mrb[0].mxu0 %v1213
      %v1493 = vpop.f32.mrb[0].mxu0
      %v1494 = vadd.f32 0.0, %v1493
      %v1495 = vpop.f32.mrb[0].mxu0
      %v1496 = vpop.f32.mrb[0].mxu0
      %v1497 = vadd.f32 0.0, %v1496
      %v1498 = vpop.f32.mrb[0].mxu0
      %1499 = vmatprep.mubr.bf16.mxu0 %v1217
      %1500 = vmatmul.mubr.bf16.gmra.mrb[0].mxu0 %v1216
      %v1501 = vpop.f32.mrb[0].mxu0
      %v1502 = vadd.f32 0.0, %v1501
      %v1503 = vpop.f32.mrb[0].mxu0
      %v1504 = vpop.f32.mrb[0].mxu0
      %v1505 = vadd.f32 0.0, %v1504
      %v1506 = vpop.f32.mrb[0].mxu0
      %1507 = vmatprep.mubr.bf16.mxu0 %v1220
      %1508 = vmatmul.mubr.bf16.gmra.mrb[0].mxu0 %v1219
      %v1509 = vpop.f32.mrb[0].mxu0
      %v1510 = vadd.f32 0.0, %v1509
      %v1511 = vpop.f32.mrb[0].mxu0
      %v1512 = vpop.f32.mrb[0].mxu0
      %v1513 = vadd.f32 0.0, %v1512
      %v1514 = vpop.f32.mrb[0].mxu0
      %1515 = vmatprep.mubr.bf16.mxu0 %v1223
      %1516 = vmatmul.mubr.bf16.gmra.mrb[0].mxu0 %v1222
      %v1517 = vpop.f32.mrb[0].mxu0
      %v1518 = vadd.f32 0.0, %v1517
      %v1519 = vpop.f32.mrb[0].mxu0
      %v1520 = vpop.f32.mrb[0].mxu0
      %v1521 = vadd.f32 0.0, %v1520
      %v1522 = vpop.f32.mrb[0].mxu0
      %1523 = vmatprep.mubr.bf16.mxu0 %v1226
      %1524 = vmatmul.mubr.bf16.gmra.mrb[0].mxu0 %v1225
      %v1525 = vpop.f32.mrb[0].mxu0
      %v1526 = vadd.f32 0.0, %v1525
      %v1527 = vpop.f32.mrb[0].mxu0
      %v1528 = vpop.f32.mrb[0].mxu0
      %v1529 = vadd.f32 0.0, %v1528
      %v1530 = vpop.f32.mrb[0].mxu0
      %1531 = vmatprep.mubr.bf16.mxu0 %v1229
      %1532 = vmatmul.mubr.bf16.gmra.mrb[0].mxu0 %v1228
      %v1533 = vpop.f32.mrb[0].mxu0
      %v1534 = vadd.f32 0.0, %v1533
      %v1535 = vpop.f32.mrb[0].mxu0
      %v1536 = vpop.f32.mrb[0].mxu0
      %v1537 = vadd.f32 0.0, %v1536
      %v1538 = vpop.f32.mrb[0].mxu0
      %1539 = vmatprep.mubr.bf16.mxu0 %v1232
      %1540 = vmatmul.mubr.bf16.gmra.mrb[0].mxu0 %v1231
      %v1541 = vpop.f32.mrb[0].mxu0
      %v1542 = vadd.f32 0.0, %v1541
      %v1543 = vpop.f32.mrb[0].mxu0
      %v1544 = vpop.f32.mrb[0].mxu0
      %v1545 = vadd.f32 0.0, %v1544
      %v1546 = vpop.f32.mrb[0].mxu0
      %1547 = vmatprep.mubr.bf16.mxu0 %v1235
      %1548 = vmatmul.mubr.bf16.gmra.mrb[0].mxu0 %v1234
      %v1549 = vpop.f32.mrb[0].mxu0
      %v1550 = vadd.f32 0.0, %v1549
      %v1551 = vpop.f32.mrb[0].mxu0
      %v1552 = vpop.f32.mrb[0].mxu0
      %v1553 = vadd.f32 0.0, %v1552
      %v1554 = vpop.f32.mrb[0].mxu0
      %1555 = vmatprep.mubr.bf16.mxu0 %v1238
      %1556 = vmatmul.mubr.bf16.gmra.mrb[0].mxu0 %v1237
      %v1557 = vpop.f32.mrb[0].mxu0
      %v1558 = vadd.f32 0.0, %v1557
      %v1559 = vpop.f32.mrb[0].mxu0
      %v1560 = vpop.f32.mrb[0].mxu0
      %v1561 = vadd.f32 0.0, %v1560
      %v1562 = vpop.f32.mrb[0].mxu0
      %1563 = vmatprep.mubr.bf16.mxu0 %v1241
      %1564 = vmatmul.mubr.bf16.gmra.mrb[0].mxu0 %v1240
      %v1565 = vpop.f32.mrb[0].mxu0
      %v1566 = vadd.f32 0.0, %v1565
      %v1567 = vpop.f32.mrb[0].mxu0
      %v1568 = vpop.f32.mrb[0].mxu0
      %v1569 = vadd.f32 0.0, %v1568
      %v1570 = vpop.f32.mrb[0].mxu0
      %1571 = vmatprep.mubr.bf16.mxu0 %v1244
      %1572 = vmatmul.mubr.bf16.gmra.mrb[0].mxu0 %v1243
      %v1573 = vpop.f32.mrb[0].mxu0
      %v1574 = vadd.f32 0.0, %v1573
      %v1575 = vpop.f32.mrb[0].mxu0
      %v1576 = vpop.f32.mrb[0].mxu0
      %v1577 = vadd.f32 0.0, %v1576
      %v1578 = vpop.f32.mrb[0].mxu0
      %1579 = vmatprep.mubr.bf16.mxu0 %v1247
      %1580 = vmatmul.mubr.bf16.gmra.mrb[0].mxu0 %v1246
      %v1581 = vpop.f32.mrb[0].mxu0
      %v1582 = vadd.f32 0.0, %v1581
      %v1583 = vpop.f32.mrb[0].mxu0
      %v1584 = vpop.f32.mrb[0].mxu0
      %v1585 = vadd.f32 0.0, %v1584
      %v1586 = vpop.f32.mrb[0].mxu0
      %1587 = vmatprep.mubr.bf16.mxu0 %v1250
      %1588 = vmatmul.mubr.bf16.gmra.mrb[0].mxu0 %v1249
      %v1589 = vpop.f32.mrb[0].mxu0
      %v1590 = vadd.f32 0.0, %v1589
      %v1591 = vpop.f32.mrb[0].mxu0
      %v1592 = vpop.f32.mrb[0].mxu0
      %v1593 = vadd.f32 0.0, %v1592
      %v1594 = vpop.f32.mrb[0].mxu0
      %1595 = vmatprep.mubr.bf16.mxu0 %v1253
      %1596 = vmatmul.mubr.bf16.gmra.mrb[0].mxu0 %v1252
      %v1597 = vpop.f32.mrb[0].mxu0
      %v1598 = vadd.f32 0.0, %v1597
      %v1599 = vpop.f32.mrb[0].mxu0
      %v1600 = vpop.f32.mrb[0].mxu0
      %v1601 = vadd.f32 0.0, %v1600
      %v1602 = vpop.f32.mrb[0].mxu0
      %1603 = vmatprep.mubr.bf16.mxu0 %v1256
      %1604 = vmatmul.mubr.bf16.gmra.mrb[0].mxu0 %v1255
      %v1605 = vpop.f32.mrb[0].mxu0
      %v1606 = vadd.f32 0.0, %v1605
      %v1607 = vpop.f32.mrb[0].mxu0
      %v1608 = vpop.f32.mrb[0].mxu0
      %v1609 = vadd.f32 0.0, %v1608
      %v1610 = vpop.f32.mrb[0].mxu0
      %1611 = vdwg.mxu0
      %1612 = vmatprep.subr.bf16.mxu0 0
      %1613 = vmatpush1.bf16.msra.mxu0 %v1419
      %1614 = vmatprep.subr.bf16.mxu0 0
      %1615 = vmatpush1.bf16.msra.mxu0 %v1420
      %1616 = vmatprep.subr.bf16.mxu0 0
      %1617 = vmatpush1.bf16.msra.mxu0 %v1421
      %1618 = vmatprep.subr.bf16.mxu0 0
      %1619 = vmatpush1.bf16.msra.mxu0 %v1422
      %1620 = vmatprep.subr.bf16.mxu0 0
      %1621 = vmatpush1.bf16.msra.mxu0 %v1423
      %1622 = vmatprep.subr.bf16.mxu0 0
      %1623 = vmatpush1.bf16.msra.mxu0 %v1424
      %1624 = vmatprep.subr.bf16.mxu0 0
      %1625 = vmatpush1.bf16.msra.mxu0 %v1425
      %1626 = vmatprep.subr.bf16.mxu0 0
      %1627 = vmatpush1.bf16.msra.mxu0 %v1426
      %1628 = vmatprep.subr.bf16.mxu0 0
      %1629 = vmatpush1.bf16.msra.mxu0 0
      %1630 = vmatprep.subr.bf16.mxu0 0
      %1631 = vmatpush1.bf16.msra.mxu0 0
      %1632 = vmatprep.subr.bf16.mxu0 0
      %1633 = vmatpush1.bf16.msra.mxu0 0
      %1634 = vmatprep.subr.bf16.mxu0 0
      %1635 = vmatpush1.bf16.msra.mxu0 0
      %1636 = vmatprep.subr.bf16.mxu0 0
      %1637 = vmatpush1.bf16.msra.mxu0 0
      %1638 = vmatprep.subr.bf16.mxu0 0
      %1639 = vmatpush1.bf16.msra.mxu0 0
      %1640 = vmatprep.subr.bf16.mxu0 0
      %1641 = vmatpush1.bf16.msra.mxu0 0
      %1642 = vmatprep.subr.bf16.mxu0 0
      %1643 = vmatpush1.bf16.msra.mxu0 0
      %1644 = vmatprep.mubr.bf16.mxu0 0
      %1645 = vmatmul.mubr.bf16.gmra.mrb[0].mxu0 %v1212
      %v1646 = vpop.f32.mrb[0].mxu0
      %v1647 = vadd.f32 %v1486, %v1646
      %v1648 = vpop.f32.mrb[0].mxu0
      %v1649 = vpop.f32.mrb[0].mxu0
      %v1650 = vadd.f32 %v1489, %v1649
      %v1651 = vpop.f32.mrb[0].mxu0
      %1652 = vmatprep.mubr.bf16.mxu0 0
      %1653 = vmatmul.mubr.bf16.gmra.mrb[0].mxu0 %v1215
      %v1654 = vpop.f32.mrb[0].mxu0
      %v1655 = vadd.f32 %v1494, %v1654
      %v1656 = vpop.f32.mrb[0].mxu0
      %v1657 = vpop.f32.mrb[0].mxu0
      %v1658 = vadd.f32 %v1497, %v1657
      %v1659 = vpop.f32.mrb[0].mxu0
      %1660 = vmatprep.mubr.bf16.mxu0 0
      %1661 = vmatmul.mubr.bf16.gmra.mrb[0].mxu0 %v1218
      %v1662 = vpop.f32.mrb[0].mxu0
      %v1663 = vadd.f32 %v1502, %v1662
      %v1664 = vpop.f32.mrb[0].mxu0
      %v1665 = vpop.f32.mrb[0].mxu0
      %v1666 = vadd.f32 %v1505, %v1665
      %v1667 = vpop.f32.mrb[0].mxu0
      %1668 = vmatprep.mubr.bf16.mxu0 0
      %1669 = vmatmul.mubr.bf16.gmra.mrb[0].mxu0 %v1221
      %v1670 = vpop.f32.mrb[0].mxu0
      %v1671 = vadd.f32 %v1510, %v1670
      %v1672 = vpop.f32.mrb[0].mxu0
      %v1673 = vpop.f32.mrb[0].mxu0
      %v1674 = vadd.f32 %v1513, %v1673
      %v1675 = vpop.f32.mrb[0].mxu0
      %1676 = vmatprep.mubr.bf16.mxu0 0
      %1677 = vmatmul.mubr.bf16.gmra.mrb[0].mxu0 %v1224
      %v1678 = vpop.f32.mrb[0].mxu0
      %v1679 = vadd.f32 %v1518, %v1678
      %v1680 = vpop.f32.mrb[0].mxu0
      %v1681 = vpop.f32.mrb[0].mxu0
      %v1682 = vadd.f32 %v1521, %v1681
      %v1683 = vpop.f32.mrb[0].mxu0
      %1684 = vmatprep.mubr.bf16.mxu0 0
      %1685 = vmatmul.mubr.bf16.gmra.mrb[0].mxu0 %v1227
      %v1686 = vpop.f32.mrb[0].mxu0
      %v1687 = vadd.f32 %v1526, %v1686
      %v1688 = vpop.f32.mrb[0].mxu0
      %v1689 = vpop.f32.mrb[0].mxu0
      %v1690 = vadd.f32 %v1529, %v1689
      %v1691 = vpop.f32.mrb[0].mxu0
      %1692 = vmatprep.mubr.bf16.mxu0 0
      %1693 = vmatmul.mubr.bf16.gmra.mrb[0].mxu0 %v1230
      %v1694 = vpop.f32.mrb[0].mxu0
      %v1695 = vadd.f32 %v1534, %v1694
      %v1696 = vpop.f32.mrb[0].mxu0
      %v1697 = vpop.f32.mrb[0].mxu0
      %v1698 = vadd.f32 %v1537, %v1697
      %v1699 = vpop.f32.mrb[0].mxu0
      %1700 = vmatprep.mubr.bf16.mxu0 0
      %1701 = vmatmul.mubr.bf16.gmra.mrb[0].mxu0 %v1233
      %v1702 = vpop.f32.mrb[0].mxu0
      %v1703 = vadd.f32 %v1542, %v1702
      %v1704 = vpop.f32.mrb[0].mxu0
      %v1705 = vpop.f32.mrb[0].mxu0
      %v1706 = vadd.f32 %v1545, %v1705
      %v1707 = vpop.f32.mrb[0].mxu0
      %1708 = vmatprep.mubr.bf16.mxu0 0
      %1709 = vmatmul.mubr.bf16.gmra.mrb[0].mxu0 %v1236
      %v1710 = vpop.f32.mrb[0].mxu0
      %v1711 = vadd.f32 %v1550, %v1710
      %v1712 = vpop.f32.mrb[0].mxu0
      %v1713 = vpop.f32.mrb[0].mxu0
      %v1714 = vadd.f32 %v1553, %v1713
      %v1715 = vpop.f32.mrb[0].mxu0
      %1716 = vmatprep.mubr.bf16.mxu0 0
      %1717 = vmatmul.mubr.bf16.gmra.mrb[0].mxu0 %v1239
      %v1718 = vpop.f32.mrb[0].mxu0
      %v1719 = vadd.f32 %v1558, %v1718
      %v1720 = vpop.f32.mrb[0].mxu0
      %v1721 = vpop.f32.mrb[0].mxu0
      %v1722 = vadd.f32 %v1561, %v1721
      %v1723 = vpop.f32.mrb[0].mxu0
      %1724 = vmatprep.mubr.bf16.mxu0 0
      %1725 = vmatmul.mubr.bf16.gmra.mrb[0].mxu0 %v1242
      %v1726 = vpop.f32.mrb[0].mxu0
      %v1727 = vadd.f32 %v1566, %v1726
      %v1728 = vpop.f32.mrb[0].mxu0
      %v1729 = vpop.f32.mrb[0].mxu0
      %v1730 = vadd.f32 %v1569, %v1729
      %v1731 = vpop.f32.mrb[0].mxu0
      %1732 = vmatprep.mubr.bf16.mxu0 0
      %1733 = vmatmul.mubr.bf16.gmra.mrb[0].mxu0 %v1245
      %v1734 = vpop.f32.mrb[0].mxu0
      %v1735 = vadd.f32 %v1574, %v1734
      %v1736 = vpop.f32.mrb[0].mxu0
      %v1737 = vpop.f32.mrb[0].mxu0
      %v1738 = vadd.f32 %v1577, %v1737
      %v1739 = vpop.f32.mrb[0].mxu0
      %1740 = vmatprep.mubr.bf16.mxu0 0
      %1741 = vmatmul.mubr.bf16.gmra.mrb[0].mxu0 %v1248
      %v1742 = vpop.f32.mrb[0].mxu0
      %v1743 = vadd.f32 %v1582, %v1742
      %v1744 = vpop.f32.mrb[0].mxu0
      %v1745 = vpop.f32.mrb[0].mxu0
      %v1746 = vadd.f32 %v1585, %v1745
      %v1747 = vpop.f32.mrb[0].mxu0
      %1748 = vmatprep.mubr.bf16.mxu0 0
      %1749 = vmatmul.mubr.bf16.gmra.mrb[0].mxu0 %v1251
      %v1750 = vpop.f32.mrb[0].mxu0
      %v1751 = vadd.f32 %v1590, %v1750
      %v1752 = vpop.f32.mrb[0].mxu0
      %v1753 = vpop.f32.mrb[0].mxu0
      %v1754 = vadd.f32 %v1593, %v1753
      %v1755 = vpop.f32.mrb[0].mxu0
      %1756 = vmatprep.mubr.bf16.mxu0 0
      %1757 = vmatmul.mubr.bf16.gmra.mrb[0].mxu0 %v1254
      %v1758 = vpop.f32.mrb[0].mxu0
      %v1759 = vadd.f32 %v1598, %v1758
      %v1760 = vpop.f32.mrb[0].mxu0
      %v1761 = vpop.f32.mrb[0].mxu0
      %v1762 = vadd.f32 %v1601, %v1761
      %v1763 = vpop.f32.mrb[0].mxu0
      %1764 = vmatprep.mubr.bf16.mxu0 0
      %1765 = vmatmul.mubr.bf16.gmra.mrb[0].mxu0 %v1257
      %v1766 = vpop.f32.mrb[0].mxu0
      %v1767 = vadd.f32 %v1606, %v1766
      %v1768 = vpop.f32.mrb[0].mxu0
      %v1769 = vpop.f32.mrb[0].mxu0
      %v1770 = vadd.f32 %v1609, %v1769
      %v1771 = vpop.f32.mrb[0].mxu0
      %1772 = vdwg.mxu0
      %v1821 = vunpack.c.l.b16 %v1161
      %v1822 = vunpack.c.l.b16 %v1162
      %v1823 = vunpack.c.l.b16 %v1163
      %v1824 = vunpack.c.l.b16 %v1164
      %v1825 = vunpack.c.l.b16 %v1165
      %v1826 = vunpack.c.l.b16 %v1166
      %v1827 = vunpack.c.l.b16 %v1167
      %v1828 = vunpack.c.l.b16 %v1168
      %v1829 = vunpack.c.l.b16 %v1169
      %v1830 = vunpack.c.l.b16 %v1170
      %v1831 = vunpack.c.l.b16 %v1171
      %v1832 = vunpack.c.l.b16 %v1172
      %v1833 = vunpack.c.l.b16 %v1173
      %v1834 = vunpack.c.l.b16 %v1174
      %v1835 = vunpack.c.l.b16 %v1175
      %v1836 = vunpack.c.l.b16 %v1176
      %v1837 = vunpack.c.l.b16 %v1177
      %v1838 = vunpack.c.l.b16 %v1178
      %v1839 = vunpack.c.l.b16 %v1179
      %v1840 = vunpack.c.l.b16 %v1180
      %v1841 = vunpack.c.l.b16 %v1181
      %v1842 = vunpack.c.l.b16 %v1182
      %v1843 = vunpack.c.l.b16 %v1183
      %v1844 = vunpack.c.l.b16 %v1184
      %v1845 = vunpack.c.l.b16 %v1185
      %v1846 = vunpack.c.l.b16 %v1186
      %v1847 = vunpack.c.l.b16 %v1187
      %v1848 = vunpack.c.l.b16 %v1188
      %v1849 = vunpack.c.l.b16 %v1189
      %v1850 = vunpack.c.l.b16 %v1190
      %v1851 = vunpack.c.l.b16 %v1191
      %v1852 = vunpack.c.l.b16 %v1192
      %v1853 = vunpack.c.l.b16 %v1193
      %v1854 = vunpack.c.l.b16 %v1194
      %v1855 = vunpack.c.l.b16 %v1195
      %v1856 = vunpack.c.l.b16 %v1196
      %v1857 = vunpack.c.l.b16 %v1197
      %v1858 = vunpack.c.l.b16 %v1198
      %v1859 = vunpack.c.l.b16 %v1199
      %v1860 = vunpack.c.l.b16 %v1200
      %v1861 = vunpack.c.l.b16 %v1201
      %v1862 = vunpack.c.l.b16 %v1202
      %v1863 = vunpack.c.l.b16 %v1203
      %v1864 = vunpack.c.l.b16 %v1204
      %v1865 = vunpack.c.l.b16 %v1205
      %v1866 = vunpack.c.l.b16 %v1206
      %v1867 = vunpack.c.l.b16 %v1207
      %v1868 = vunpack.c.l.b16 %v1208
      %v1869 = vpack.c.b16 %v1822, %v1821
      %v1870 = vpack.c.b16 %v1824, %v1823
      %v1871 = vpack.c.b16 %v1826, %v1825
      %v1872 = vpack.c.b16 %v1828, %v1827
      %v1873 = vpack.c.b16 %v1830, %v1829
      %v1874 = vpack.c.b16 %v1832, %v1831
      %v1875 = vpack.c.b16 %v1834, %v1833
      %v1876 = vpack.c.b16 %v1836, %v1835
      %v1877 = vpack.c.b16 %v1838, %v1837
      %v1878 = vpack.c.b16 %v1840, %v1839
      %v1879 = vpack.c.b16 %v1842, %v1841
      %v1880 = vpack.c.b16 %v1844, %v1843
      %v1881 = vpack.c.b16 %v1846, %v1845
      %v1882 = vpack.c.b16 %v1848, %v1847
      %v1883 = vpack.c.b16 %v1850, %v1849
      %v1884 = vpack.c.b16 %v1852, %v1851
      %v1885 = vpack.c.b16 %v1854, %v1853
      %v1886 = vpack.c.b16 %v1856, %v1855
      %v1887 = vpack.c.b16 %v1858, %v1857
      %v1888 = vpack.c.b16 %v1860, %v1859
      %v1889 = vpack.c.b16 %v1862, %v1861
      %v1890 = vpack.c.b16 %v1864, %v1863
      %v1891 = vpack.c.b16 %v1866, %v1865
      %v1892 = vpack.c.b16 %v1868, %v1867
      %1917 = vmatprep.subr.bf16.mxu0 0
      %1918 = vmatpush1.bf16.msra.mxu0 %v1869
      %1919 = vmatprep.subr.bf16.mxu0 0
      %1920 = vmatpush1.bf16.msra.mxu0 %v1870
      %1921 = vmatprep.subr.bf16.mxu0 0
      %1922 = vmatpush1.bf16.msra.mxu0 %v1871
      %1923 = vmatprep.subr.bf16.mxu0 0
      %1924 = vmatpush1.bf16.msra.mxu0 %v1872
      %1925 = vmatprep.subr.bf16.mxu0 0
      %1926 = vmatpush1.bf16.msra.mxu0 %v1873
      %1927 = vmatprep.subr.bf16.mxu0 0
      %1928 = vmatpush1.bf16.msra.mxu0 %v1874
      %1929 = vmatprep.subr.bf16.mxu0 0
      %1930 = vmatpush1.bf16.msra.mxu0 %v1875
      %1931 = vmatprep.subr.bf16.mxu0 0
      %1932 = vmatpush1.bf16.msra.mxu0 %v1876
      %1933 = vmatprep.subr.bf16.mxu0 0
      %1934 = vmatpush1.bf16.msra.mxu0 %v1877
      %1935 = vmatprep.subr.bf16.mxu0 0
      %1936 = vmatpush1.bf16.msra.mxu0 %v1878
      %1937 = vmatprep.subr.bf16.mxu0 0
      %1938 = vmatpush1.bf16.msra.mxu0 %v1879
      %1939 = vmatprep.subr.bf16.mxu0 0
      %1940 = vmatpush1.bf16.msra.mxu0 %v1880
      %1941 = vmatprep.subr.bf16.mxu0 0
      %1942 = vmatpush1.bf16.msra.mxu0 %v1881
      %1943 = vmatprep.subr.bf16.mxu0 0
      %1944 = vmatpush1.bf16.msra.mxu0 %v1882
      %1945 = vmatprep.subr.bf16.mxu0 0
      %1946 = vmatpush1.bf16.msra.mxu0 %v1883
      %1947 = vmatprep.subr.bf16.mxu0 0
      %1948 = vmatpush1.bf16.msra.mxu0 %v1884
      %1949 = vmatprep.mubr.bf16.mxu0 %v1114
      %1950 = vmatmul.mubr.bf16.gmra.mrb[0].mxu0 %v1113
      %v1951 = vpop.f32.mrb[0].mxu0
      %v1952 = vadd.f32 %v1647, %v1951
      %v1953 = vpop.f32.mrb[0].mxu0
      %v1954 = vpop.f32.mrb[0].mxu0
      %v1955 = vadd.f32 %v1650, %v1954
      %v1956 = vpop.f32.mrb[0].mxu0
      %1957 = vmatprep.mubr.bf16.mxu0 %v1117
      %1958 = vmatmul.mubr.bf16.gmra.mrb[0].mxu0 %v1116
      %v1959 = vpop.f32.mrb[0].mxu0
      %v1960 = vadd.f32 %v1655, %v1959
      %v1961 = vpop.f32.mrb[0].mxu0
      %v1962 = vpop.f32.mrb[0].mxu0
      %v1963 = vadd.f32 %v1658, %v1962
      %v1964 = vpop.f32.mrb[0].mxu0
      %1965 = vmatprep.mubr.bf16.mxu0 %v1120
      %1966 = vmatmul.mubr.bf16.gmra.mrb[0].mxu0 %v1119
      %v1967 = vpop.f32.mrb[0].mxu0
      %v1968 = vadd.f32 %v1663, %v1967
      %v1969 = vpop.f32.mrb[0].mxu0
      %v1970 = vpop.f32.mrb[0].mxu0
      %v1971 = vadd.f32 %v1666, %v1970
      %v1972 = vpop.f32.mrb[0].mxu0
      %1973 = vmatprep.mubr.bf16.mxu0 %v1123
      %1974 = vmatmul.mubr.bf16.gmra.mrb[0].mxu0 %v1122
      %v1975 = vpop.f32.mrb[0].mxu0
      %v1976 = vadd.f32 %v1671, %v1975
      %v1977 = vpop.f32.mrb[0].mxu0
      %v1978 = vpop.f32.mrb[0].mxu0
      %v1979 = vadd.f32 %v1674, %v1978
      %v1980 = vpop.f32.mrb[0].mxu0
      %1981 = vmatprep.mubr.bf16.mxu0 %v1126
      %1982 = vmatmul.mubr.bf16.gmra.mrb[0].mxu0 %v1125
      %v1983 = vpop.f32.mrb[0].mxu0
      %v1984 = vadd.f32 %v1679, %v1983
      %v1985 = vpop.f32.mrb[0].mxu0
      %v1986 = vpop.f32.mrb[0].mxu0
      %v1987 = vadd.f32 %v1682, %v1986
      %v1988 = vpop.f32.mrb[0].mxu0
      %1989 = vmatprep.mubr.bf16.mxu0 %v1129
      %1990 = vmatmul.mubr.bf16.gmra.mrb[0].mxu0 %v1128
      %v1991 = vpop.f32.mrb[0].mxu0
      %v1992 = vadd.f32 %v1687, %v1991
      %v1993 = vpop.f32.mrb[0].mxu0
      %v1994 = vpop.f32.mrb[0].mxu0
      %v1995 = vadd.f32 %v1690, %v1994
      %v1996 = vpop.f32.mrb[0].mxu0
      %1997 = vmatprep.mubr.bf16.mxu0 %v1132
      %1998 = vmatmul.mubr.bf16.gmra.mrb[0].mxu0 %v1131
      %v1999 = vpop.f32.mrb[0].mxu0
      %v2000 = vadd.f32 %v1695, %v1999
      %v2001 = vpop.f32.mrb[0].mxu0
      %v2002 = vpop.f32.mrb[0].mxu0
      %v2003 = vadd.f32 %v1698, %v2002
      %v2004 = vpop.f32.mrb[0].mxu0
      %2005 = vmatprep.mubr.bf16.mxu0 %v1135
      %2006 = vmatmul.mubr.bf16.gmra.mrb[0].mxu0 %v1134
      %v2007 = vpop.f32.mrb[0].mxu0
      %v2008 = vadd.f32 %v1703, %v2007
      %v2009 = vpop.f32.mrb[0].mxu0
      %v2010 = vpop.f32.mrb[0].mxu0
      %v2011 = vadd.f32 %v1706, %v2010
      %v2012 = vpop.f32.mrb[0].mxu0
      %2013 = vmatprep.mubr.bf16.mxu0 %v1138
      %2014 = vmatmul.mubr.bf16.gmra.mrb[0].mxu0 %v1137
      %v2015 = vpop.f32.mrb[0].mxu0
      %v2016 = vadd.f32 %v1711, %v2015
      %v2017 = vpop.f32.mrb[0].mxu0
      %v2018 = vpop.f32.mrb[0].mxu0
      %v2019 = vadd.f32 %v1714, %v2018
      %v2020 = vpop.f32.mrb[0].mxu0
      %2021 = vmatprep.mubr.bf16.mxu0 %v1141
      %2022 = vmatmul.mubr.bf16.gmra.mrb[0].mxu0 %v1140
      %v2023 = vpop.f32.mrb[0].mxu0
      %v2024 = vadd.f32 %v1719, %v2023
      %v2025 = vpop.f32.mrb[0].mxu0
      %v2026 = vpop.f32.mrb[0].mxu0
      %v2027 = vadd.f32 %v1722, %v2026
      %v2028 = vpop.f32.mrb[0].mxu0
      %2029 = vmatprep.mubr.bf16.mxu0 %v1144
      %2030 = vmatmul.mubr.bf16.gmra.mrb[0].mxu0 %v1143
      %v2031 = vpop.f32.mrb[0].mxu0
      %v2032 = vadd.f32 %v1727, %v2031
      %v2033 = vpop.f32.mrb[0].mxu0
      %v2034 = vpop.f32.mrb[0].mxu0
      %v2035 = vadd.f32 %v1730, %v2034
      %v2036 = vpop.f32.mrb[0].mxu0
      %2037 = vmatprep.mubr.bf16.mxu0 %v1147
      %2038 = vmatmul.mubr.bf16.gmra.mrb[0].mxu0 %v1146
      %v2039 = vpop.f32.mrb[0].mxu0
      %v2040 = vadd.f32 %v1735, %v2039
      %v2041 = vpop.f32.mrb[0].mxu0
      %v2042 = vpop.f32.mrb[0].mxu0
      %v2043 = vadd.f32 %v1738, %v2042
      %v2044 = vpop.f32.mrb[0].mxu0
      %2045 = vmatprep.mubr.bf16.mxu0 %v1150
      %2046 = vmatmul.mubr.bf16.gmra.mrb[0].mxu0 %v1149
      %v2047 = vpop.f32.mrb[0].mxu0
      %v2048 = vadd.f32 %v1743, %v2047
      %v2049 = vpop.f32.mrb[0].mxu0
      %v2050 = vpop.f32.mrb[0].mxu0
      %v2051 = vadd.f32 %v1746, %v2050
      %v2052 = vpop.f32.mrb[0].mxu0
      %2053 = vmatprep.mubr.bf16.mxu0 %v1153
      %2054 = vmatmul.mubr.bf16.gmra.mrb[0].mxu0 %v1152
      %v2055 = vpop.f32.mrb[0].mxu0
      %v2056 = vadd.f32 %v1751, %v2055
      %v2057 = vpop.f32.mrb[0].mxu0
      %v2058 = vpop.f32.mrb[0].mxu0
      %v2059 = vadd.f32 %v1754, %v2058
      %v2060 = vpop.f32.mrb[0].mxu0
      %2061 = vmatprep.mubr.bf16.mxu0 %v1156
      %2062 = vmatmul.mubr.bf16.gmra.mrb[0].mxu0 %v1155
      %v2063 = vpop.f32.mrb[0].mxu0
      %v2064 = vadd.f32 %v1759, %v2063
      %v2065 = vpop.f32.mrb[0].mxu0
      %v2066 = vpop.f32.mrb[0].mxu0
      %v2067 = vadd.f32 %v1762, %v2066
      %v2068 = vpop.f32.mrb[0].mxu0
      %2069 = vmatprep.mubr.bf16.mxu0 %v1159
      %2070 = vmatmul.mubr.bf16.gmra.mrb[0].mxu0 %v1158
      %v2071 = vpop.f32.mrb[0].mxu0
      %v2072 = vadd.f32 %v1767, %v2071
      %v2073 = vpop.f32.mrb[0].mxu0
      %v2074 = vpop.f32.mrb[0].mxu0
      %v2075 = vadd.f32 %v1770, %v2074
      %v2076 = vpop.f32.mrb[0].mxu0
      %2077 = vdwg.mxu0
      %2078 = vmatprep.subr.bf16.mxu0 0
      %2079 = vmatpush1.bf16.msra.mxu0 %v1885
      %2080 = vmatprep.subr.bf16.mxu0 0
      %2081 = vmatpush1.bf16.msra.mxu0 %v1886
      %2082 = vmatprep.subr.bf16.mxu0 0
      %2083 = vmatpush1.bf16.msra.mxu0 %v1887
      %2084 = vmatprep.subr.bf16.mxu0 0
      %2085 = vmatpush1.bf16.msra.mxu0 %v1888
      %2086 = vmatprep.subr.bf16.mxu0 0
      %2087 = vmatpush1.bf16.msra.mxu0 %v1889
      %2088 = vmatprep.subr.bf16.mxu0 0
      %2089 = vmatpush1.bf16.msra.mxu0 %v1890
      %2090 = vmatprep.subr.bf16.mxu0 0
      %2091 = vmatpush1.bf16.msra.mxu0 %v1891
      %2092 = vmatprep.subr.bf16.mxu0 0
      %2093 = vmatpush1.bf16.msra.mxu0 %v1892
      %2094 = vmatprep.subr.bf16.mxu0 0
      %2095 = vmatpush1.bf16.msra.mxu0 0
      %2096 = vmatprep.subr.bf16.mxu0 0
      %2097 = vmatpush1.bf16.msra.mxu0 0
      %2098 = vmatprep.subr.bf16.mxu0 0
      %2099 = vmatpush1.bf16.msra.mxu0 0
      %2100 = vmatprep.subr.bf16.mxu0 0
      %2101 = vmatpush1.bf16.msra.mxu0 0
      %2102 = vmatprep.subr.bf16.mxu0 0
      %2103 = vmatpush1.bf16.msra.mxu0 0
      %2104 = vmatprep.subr.bf16.mxu0 0
      %2105 = vmatpush1.bf16.msra.mxu0 0
      %2106 = vmatprep.subr.bf16.mxu0 0
      %2107 = vmatpush1.bf16.msra.mxu0 0
      %2108 = vmatprep.subr.bf16.mxu0 0
      %2109 = vmatpush1.bf16.msra.mxu0 0
      %2110 = vmatprep.mubr.bf16.mxu0 0
      %2111 = vmatmul.mubr.bf16.gmra.mrb[0].mxu0 %v1115
      %v2112 = vpop.f32.mrb[0].mxu0
      %v2113 = vadd.f32 %v1952, %v2112
      %v2114 = vpop.f32.mrb[0].mxu0
      %v2115 = vpop.f32.mrb[0].mxu0
      %v2116 = vadd.f32 %v1955, %v2115
      %v2117 = vpop.f32.mrb[0].mxu0
      %2118 = vmatprep.mubr.bf16.mxu0 0
      %2119 = vmatmul.mubr.bf16.gmra.mrb[0].mxu0 %v1118
      %v2120 = vpop.f32.mrb[0].mxu0
      %v2121 = vadd.f32 %v1960, %v2120
      %v2122 = vpop.f32.mrb[0].mxu0
      %v2123 = vpop.f32.mrb[0].mxu0
      %v2124 = vadd.f32 %v1963, %v2123
      %v2125 = vpop.f32.mrb[0].mxu0
      %2126 = vmatprep.mubr.bf16.mxu0 0
      %2127 = vmatmul.mubr.bf16.gmra.mrb[0].mxu0 %v1121
      %v2128 = vpop.f32.mrb[0].mxu0
      %v2129 = vadd.f32 %v1968, %v2128
      %v2130 = vpop.f32.mrb[0].mxu0
      %v2131 = vpop.f32.mrb[0].mxu0
      %v2132 = vadd.f32 %v1971, %v2131
      %v2133 = vpop.f32.mrb[0].mxu0
      %2134 = vmatprep.mubr.bf16.mxu0 0
      %2135 = vmatmul.mubr.bf16.gmra.mrb[0].mxu0 %v1124
      %v2136 = vpop.f32.mrb[0].mxu0
      %v2137 = vadd.f32 %v1976, %v2136
      %v2138 = vpop.f32.mrb[0].mxu0
      %v2139 = vpop.f32.mrb[0].mxu0
      %v2140 = vadd.f32 %v1979, %v2139
      %v2141 = vpop.f32.mrb[0].mxu0
      %2142 = vmatprep.mubr.bf16.mxu0 0
      %2143 = vmatmul.mubr.bf16.gmra.mrb[0].mxu0 %v1127
      %v2144 = vpop.f32.mrb[0].mxu0
      %v2145 = vadd.f32 %v1984, %v2144
      %v2146 = vpop.f32.mrb[0].mxu0
      %v2147 = vpop.f32.mrb[0].mxu0
      %v2148 = vadd.f32 %v1987, %v2147
      %v2149 = vpop.f32.mrb[0].mxu0
      %2150 = vmatprep.mubr.bf16.mxu0 0
      %2151 = vmatmul.mubr.bf16.gmra.mrb[0].mxu0 %v1130
      %v2152 = vpop.f32.mrb[0].mxu0
      %v2153 = vadd.f32 %v1992, %v2152
      %v2154 = vpop.f32.mrb[0].mxu0
      %v2155 = vpop.f32.mrb[0].mxu0
      %v2156 = vadd.f32 %v1995, %v2155
      %v2157 = vpop.f32.mrb[0].mxu0
      %2158 = vmatprep.mubr.bf16.mxu0 0
      %2159 = vmatmul.mubr.bf16.gmra.mrb[0].mxu0 %v1133
      %v2160 = vpop.f32.mrb[0].mxu0
      %v2161 = vadd.f32 %v2000, %v2160
      %v2162 = vpop.f32.mrb[0].mxu0
      %v2163 = vpop.f32.mrb[0].mxu0
      %v2164 = vadd.f32 %v2003, %v2163
      %v2165 = vpop.f32.mrb[0].mxu0
      %2166 = vmatprep.mubr.bf16.mxu0 0
      %2167 = vmatmul.mubr.bf16.gmra.mrb[0].mxu0 %v1136
      %v2168 = vpop.f32.mrb[0].mxu0
      %v2169 = vadd.f32 %v2008, %v2168
      %v2170 = vpop.f32.mrb[0].mxu0
      %v2171 = vpop.f32.mrb[0].mxu0
      %v2172 = vadd.f32 %v2011, %v2171
      %v2173 = vpop.f32.mrb[0].mxu0
      %2174 = vmatprep.mubr.bf16.mxu0 0
      %2175 = vmatmul.mubr.bf16.gmra.mrb[0].mxu0 %v1139
      %v2176 = vpop.f32.mrb[0].mxu0
      %v2177 = vadd.f32 %v2016, %v2176
      %v2178 = vpop.f32.mrb[0].mxu0
      %v2179 = vpop.f32.mrb[0].mxu0
      %v2180 = vadd.f32 %v2019, %v2179
      %v2181 = vpop.f32.mrb[0].mxu0
      %2182 = vmatprep.mubr.bf16.mxu0 0
      %2183 = vmatmul.mubr.bf16.gmra.mrb[0].mxu0 %v1142
      %v2184 = vpop.f32.mrb[0].mxu0
      %v2185 = vadd.f32 %v2024, %v2184
      %v2186 = vpop.f32.mrb[0].mxu0
      %v2187 = vpop.f32.mrb[0].mxu0
      %v2188 = vadd.f32 %v2027, %v2187
      %v2189 = vpop.f32.mrb[0].mxu0
      %2190 = vmatprep.mubr.bf16.mxu0 0
      %2191 = vmatmul.mubr.bf16.gmra.mrb[0].mxu0 %v1145
      %v2192 = vpop.f32.mrb[0].mxu0
      %v2193 = vadd.f32 %v2032, %v2192
      %v2194 = vpop.f32.mrb[0].mxu0
      %v2195 = vpop.f32.mrb[0].mxu0
      %v2196 = vadd.f32 %v2035, %v2195
      %v2197 = vpop.f32.mrb[0].mxu0
      %2198 = vmatprep.mubr.bf16.mxu0 0
      %2199 = vmatmul.mubr.bf16.gmra.mrb[0].mxu0 %v1148
      %v2200 = vpop.f32.mrb[0].mxu0
      %v2201 = vadd.f32 %v2040, %v2200
      %v2202 = vpop.f32.mrb[0].mxu0
      %v2203 = vpop.f32.mrb[0].mxu0
      %v2204 = vadd.f32 %v2043, %v2203
      %v2205 = vpop.f32.mrb[0].mxu0
      %2206 = vmatprep.mubr.bf16.mxu0 0
      %2207 = vmatmul.mubr.bf16.gmra.mrb[0].mxu0 %v1151
      %v2208 = vpop.f32.mrb[0].mxu0
      %v2209 = vadd.f32 %v2048, %v2208
      %v2210 = vpop.f32.mrb[0].mxu0
      %v2211 = vpop.f32.mrb[0].mxu0
      %v2212 = vadd.f32 %v2051, %v2211
      %v2213 = vpop.f32.mrb[0].mxu0
      %2214 = vmatprep.mubr.bf16.mxu0 0
      %2215 = vmatmul.mubr.bf16.gmra.mrb[0].mxu0 %v1154
      %v2216 = vpop.f32.mrb[0].mxu0
      %v2217 = vadd.f32 %v2056, %v2216
      %v2218 = vpop.f32.mrb[0].mxu0
      %v2219 = vpop.f32.mrb[0].mxu0
      %v2220 = vadd.f32 %v2059, %v2219
      %v2221 = vpop.f32.mrb[0].mxu0
      %2222 = vmatprep.mubr.bf16.mxu0 0
      %2223 = vmatmul.mubr.bf16.gmra.mrb[0].mxu0 %v1157
      %v2224 = vpop.f32.mrb[0].mxu0
      %v2225 = vadd.f32 %v2064, %v2224
      %v2226 = vpop.f32.mrb[0].mxu0
      %v2227 = vpop.f32.mrb[0].mxu0
      %v2228 = vadd.f32 %v2067, %v2227
      %v2229 = vpop.f32.mrb[0].mxu0
      %2230 = vmatprep.mubr.bf16.mxu0 0
      %2231 = vmatmul.mubr.bf16.gmra.mrb[0].mxu0 %v1160
      %v2232 = vpop.f32.mrb[0].mxu0
      %v2233 = vadd.f32 %v2072, %v2232
      %v2234 = vpop.f32.mrb[0].mxu0
      %v2235 = vpop.f32.mrb[0].mxu0
      %v2236 = vadd.f32 %v2075, %v2235
      %v2237 = vpop.f32.mrb[0].mxu0
      %2238 = vdwg.mxu0
      %s2239 = scalar_lea.vmem [#allocation2], 48
      %v2240 = vld [vmem:[%s2239] sm:$0xff]
      %v2241 = vld [vmem:[%s2239 + $0x8] sm:$0xff]
      %v2242 = vld [vmem:[%s2239 + $0x10] sm:$0xff]
      %v2243 = vld [vmem:[%s2239 + $0x18] sm:$0xff]
      %v2244 = vld [vmem:[%s2239 + $0x20] sm:$0xff]
      %v2245 = vld [vmem:[%s2239 + $0x28] sm:$0xff]
      %v2246 = vld [vmem:[%s2239 + $0x30] sm:$0xff]
      %v2247 = vld [vmem:[%s2239 + $0x38] sm:$0xff]
      %v2248 = vld [vmem:[%s2239 + $0x40] sm:$0xff]
      %v2249 = vld [vmem:[%s2239 + $0x48] sm:$0xff]
      %v2250 = vld [vmem:[%s2239 + $0x50] sm:$0xff]
      %v2251 = vld [vmem:[%s2239 + $0x58] sm:$0xff]
      %v2252 = vld [vmem:[%s2239 + $0x60] sm:$0xff]
      %v2253 = vld [vmem:[%s2239 + $0x68] sm:$0xff]
      %v2254 = vld [vmem:[%s2239 + $0x70] sm:$0xff]
      %v2255 = vld [vmem:[%s2239 + $0x78] sm:$0xff]
      %v2256 = vld [vmem:[%s2239 + $0x80] sm:$0xff]
      %v2257 = vld [vmem:[%s2239 + $0x88] sm:$0xff]
      %v2258 = vld [vmem:[%s2239 + $0x90] sm:$0xff]
      %v2259 = vld [vmem:[%s2239 + $0x98] sm:$0xff]
      %v2260 = vld [vmem:[%s2239 + $0xa0] sm:$0xff]
      %v2261 = vld [vmem:[%s2239 + $0xa8] sm:$0xff]
      %v2262 = vld [vmem:[%s2239 + $0xb0] sm:$0xff]
      %v2263 = vld [vmem:[%s2239 + $0xb8] sm:$0xff]
      %v2264 = vld [vmem:[%s2239 + $0xc0] sm:$0xff]
      %v2265 = vld [vmem:[%s2239 + $0xc8] sm:$0xff]
      %v2266 = vld [vmem:[%s2239 + $0xd0] sm:$0xff]
      %v2267 = vld [vmem:[%s2239 + $0xd8] sm:$0xff]
      %v2268 = vld [vmem:[%s2239 + $0xe0] sm:$0xff]
      %v2269 = vld [vmem:[%s2239 + $0xe8] sm:$0xff]
      %v2270 = vld [vmem:[%s2239 + $0xf0] sm:$0xff]
      %v2271 = vld [vmem:[%s2239 + $0xf8] sm:$0xff]
      %v2272 = vld [vmem:[%s2239 + $0x100] sm:$0xff]
      %v2273 = vld [vmem:[%s2239 + $0x108] sm:$0xff]
      %v2274 = vld [vmem:[%s2239 + $0x110] sm:$0xff]
      %v2275 = vld [vmem:[%s2239 + $0x118] sm:$0xff]
      %v2276 = vld [vmem:[%s2239 + $0x120] sm:$0xff]
      %v2277 = vld [vmem:[%s2239 + $0x128] sm:$0xff]
      %v2278 = vld [vmem:[%s2239 + $0x130] sm:$0xff]
      %v2279 = vld [vmem:[%s2239 + $0x138] sm:$0xff]
      %v2280 = vld [vmem:[%s2239 + $0x140] sm:$0xff]
      %v2281 = vld [vmem:[%s2239 + $0x148] sm:$0xff]
      %v2282 = vld [vmem:[%s2239 + $0x150] sm:$0xff]
      %v2283 = vld [vmem:[%s2239 + $0x158] sm:$0xff]
      %v2284 = vld [vmem:[%s2239 + $0x160] sm:$0xff]
      %v2285 = vld [vmem:[%s2239 + $0x168] sm:$0xff]
      %v2286 = vld [vmem:[%s2239 + $0x170] sm:$0xff]
      %v2287 = vld [vmem:[%s2239 + $0x178] sm:$0xff]
      %s2288 = scalar_lea.vmem %s1, 384
      %v2289 = vld [vmem:[%s2288] sm:$0xf]
      %v2290 = vld [vmem:[%s2288 + $0x4] sm:$0xf]
      %v2291 = vld [vmem:[%s2288 + $0x8] sm:$0xf]
      %v2292 = vld [vmem:[%s2288 + $0xc] sm:$0xf]
      %v2293 = vld [vmem:[%s2288 + $0x10] sm:$0xf]
      %v2294 = vld [vmem:[%s2288 + $0x14] sm:$0xf]
      %v2295 = vld [vmem:[%s2288 + $0x18] sm:$0xf]
      %v2296 = vld [vmem:[%s2288 + $0x1c] sm:$0xf]
      %v2297 = vld [vmem:[%s2288 + $0x20] sm:$0xf]
      %v2298 = vld [vmem:[%s2288 + $0x24] sm:$0xf]
      %v2299 = vld [vmem:[%s2288 + $0x28] sm:$0xf]
      %v2300 = vld [vmem:[%s2288 + $0x2c] sm:$0xf]
      %v2301 = vld [vmem:[%s2288 + $0x30] sm:$0xf]
      %v2302 = vld [vmem:[%s2288 + $0x34] sm:$0xf]
      %v2303 = vld [vmem:[%s2288 + $0x38] sm:$0xf]
      %v2304 = vld [vmem:[%s2288 + $0x3c] sm:$0xf]
      %v2305 = vld [vmem:[%s2288 + $0x40] sm:$0xf]
      %v2306 = vld [vmem:[%s2288 + $0x44] sm:$0xf]
      %v2307 = vld [vmem:[%s2288 + $0x48] sm:$0xf]
      %v2308 = vld [vmem:[%s2288 + $0x4c] sm:$0xf]
      %v2309 = vld [vmem:[%s2288 + $0x50] sm:$0xf]
      %v2310 = vld [vmem:[%s2288 + $0x54] sm:$0xf]
      %v2311 = vld [vmem:[%s2288 + $0x58] sm:$0xf]
      %v2312 = vld [vmem:[%s2288 + $0x5c] sm:$0xf]
      %v2313 = vld [vmem:[%s2288 + $0x60] sm:$0xf]
      %v2314 = vld [vmem:[%s2288 + $0x64] sm:$0xf]
      %v2315 = vld [vmem:[%s2288 + $0x68] sm:$0xf]
      %v2316 = vld [vmem:[%s2288 + $0x6c] sm:$0xf]
      %v2317 = vld [vmem:[%s2288 + $0x70] sm:$0xf]
      %v2318 = vld [vmem:[%s2288 + $0x74] sm:$0xf]
      %v2319 = vld [vmem:[%s2288 + $0x78] sm:$0xf]
      %v2320 = vld [vmem:[%s2288 + $0x7c] sm:$0xf]
      %v2321 = vld [vmem:[%s2288 + $0x80] sm:$0xf]
      %v2322 = vld [vmem:[%s2288 + $0x84] sm:$0xf]
      %v2323 = vld [vmem:[%s2288 + $0x88] sm:$0xf]
      %v2324 = vld [vmem:[%s2288 + $0x8c] sm:$0xf]
      %v2325 = vld [vmem:[%s2288 + $0x90] sm:$0xf]
      %v2326 = vld [vmem:[%s2288 + $0x94] sm:$0xf]
      %v2327 = vld [vmem:[%s2288 + $0x98] sm:$0xf]
      %v2328 = vld [vmem:[%s2288 + $0x9c] sm:$0xf]
      %v2329 = vld [vmem:[%s2288 + $0xa0] sm:$0xf]
      %v2330 = vld [vmem:[%s2288 + $0xa4] sm:$0xf]
      %v2331 = vld [vmem:[%s2288 + $0xa8] sm:$0xf]
      %v2332 = vld [vmem:[%s2288 + $0xac] sm:$0xf]
      %v2333 = vld [vmem:[%s2288 + $0xb0] sm:$0xf]
      %v2334 = vld [vmem:[%s2288 + $0xb4] sm:$0xf]
      %v2335 = vld [vmem:[%s2288 + $0xb8] sm:$0xf]
      %v2336 = vld [vmem:[%s2288 + $0xbc] sm:$0xf]
      %v2385 = vunpack.c.l.b16 %v2289
      %v2386 = vunpack.c.l.b16 %v2290
      %v2387 = vunpack.c.l.b16 %v2291
      %v2388 = vunpack.c.l.b16 %v2292
      %v2389 = vunpack.c.l.b16 %v2293
      %v2390 = vunpack.c.l.b16 %v2294
      %v2391 = vunpack.c.l.b16 %v2295
      %v2392 = vunpack.c.l.b16 %v2296
      %v2393 = vunpack.c.l.b16 %v2297
      %v2394 = vunpack.c.l.b16 %v2298
      %v2395 = vunpack.c.l.b16 %v2299
      %v2396 = vunpack.c.l.b16 %v2300
      %v2397 = vunpack.c.l.b16 %v2301
      %v2398 = vunpack.c.l.b16 %v2302
      %v2399 = vunpack.c.l.b16 %v2303
      %v2400 = vunpack.c.l.b16 %v2304
      %v2401 = vunpack.c.l.b16 %v2305
      %v2402 = vunpack.c.l.b16 %v2306
      %v2403 = vunpack.c.l.b16 %v2307
      %v2404 = vunpack.c.l.b16 %v2308
      %v2405 = vunpack.c.l.b16 %v2309
      %v2406 = vunpack.c.l.b16 %v2310
      %v2407 = vunpack.c.l.b16 %v2311
      %v2408 = vunpack.c.l.b16 %v2312
      %v2409 = vunpack.c.l.b16 %v2313
      %v2410 = vunpack.c.l.b16 %v2314
      %v2411 = vunpack.c.l.b16 %v2315
      %v2412 = vunpack.c.l.b16 %v2316
      %v2413 = vunpack.c.l.b16 %v2317
      %v2414 = vunpack.c.l.b16 %v2318
      %v2415 = vunpack.c.l.b16 %v2319
      %v2416 = vunpack.c.l.b16 %v2320
      %v2417 = vunpack.c.l.b16 %v2321
      %v2418 = vunpack.c.l.b16 %v2322
      %v2419 = vunpack.c.l.b16 %v2323
      %v2420 = vunpack.c.l.b16 %v2324
      %v2421 = vunpack.c.l.b16 %v2325
      %v2422 = vunpack.c.l.b16 %v2326
      %v2423 = vunpack.c.l.b16 %v2327
      %v2424 = vunpack.c.l.b16 %v2328
      %v2425 = vunpack.c.l.b16 %v2329
      %v2426 = vunpack.c.l.b16 %v2330
      %v2427 = vunpack.c.l.b16 %v2331
      %v2428 = vunpack.c.l.b16 %v2332
      %v2429 = vunpack.c.l.b16 %v2333
      %v2430 = vunpack.c.l.b16 %v2334
      %v2431 = vunpack.c.l.b16 %v2335
      %v2432 = vunpack.c.l.b16 %v2336
      %v2433 = vpack.c.b16 %v2386, %v2385
      %v2434 = vpack.c.b16 %v2388, %v2387
      %v2435 = vpack.c.b16 %v2390, %v2389
      %v2436 = vpack.c.b16 %v2392, %v2391
      %v2437 = vpack.c.b16 %v2394, %v2393
      %v2438 = vpack.c.b16 %v2396, %v2395
      %v2439 = vpack.c.b16 %v2398, %v2397
      %v2440 = vpack.c.b16 %v2400, %v2399
      %v2441 = vpack.c.b16 %v2402, %v2401
      %v2442 = vpack.c.b16 %v2404, %v2403
      %v2443 = vpack.c.b16 %v2406, %v2405
      %v2444 = vpack.c.b16 %v2408, %v2407
      %v2445 = vpack.c.b16 %v2410, %v2409
      %v2446 = vpack.c.b16 %v2412, %v2411
      %v2447 = vpack.c.b16 %v2414, %v2413
      %v2448 = vpack.c.b16 %v2416, %v2415
      %v2449 = vpack.c.b16 %v2418, %v2417
      %v2450 = vpack.c.b16 %v2420, %v2419
      %v2451 = vpack.c.b16 %v2422, %v2421
      %v2452 = vpack.c.b16 %v2424, %v2423
      %v2453 = vpack.c.b16 %v2426, %v2425
      %v2454 = vpack.c.b16 %v2428, %v2427
      %v2455 = vpack.c.b16 %v2430, %v2429
      %v2456 = vpack.c.b16 %v2432, %v2431
      %2481 = vmatprep.subr.bf16.mxu0 0
      %2482 = vmatpush1.bf16.msra.mxu0 %v2433
      %2483 = vmatprep.subr.bf16.mxu0 0
      %2484 = vmatpush1.bf16.msra.mxu0 %v2434
      %2485 = vmatprep.subr.bf16.mxu0 0
      %2486 = vmatpush1.bf16.msra.mxu0 %v2435
      %2487 = vmatprep.subr.bf16.mxu0 0
      %2488 = vmatpush1.bf16.msra.mxu0 %v2436
      %2489 = vmatprep.subr.bf16.mxu0 0
      %2490 = vmatpush1.bf16.msra.mxu0 %v2437
      %2491 = vmatprep.subr.bf16.mxu0 0
      %2492 = vmatpush1.bf16.msra.mxu0 %v2438
      %2493 = vmatprep.subr.bf16.mxu0 0
      %2494 = vmatpush1.bf16.msra.mxu0 %v2439
      %2495 = vmatprep.subr.bf16.mxu0 0
      %2496 = vmatpush1.bf16.msra.mxu0 %v2440
      %2497 = vmatprep.subr.bf16.mxu0 0
      %2498 = vmatpush1.bf16.msra.mxu0 %v2441
      %2499 = vmatprep.subr.bf16.mxu0 0
      %2500 = vmatpush1.bf16.msra.mxu0 %v2442
      %2501 = vmatprep.subr.bf16.mxu0 0
      %2502 = vmatpush1.bf16.msra.mxu0 %v2443
      %2503 = vmatprep.subr.bf16.mxu0 0
      %2504 = vmatpush1.bf16.msra.mxu0 %v2444
      %2505 = vmatprep.subr.bf16.mxu0 0
      %2506 = vmatpush1.bf16.msra.mxu0 %v2445
      %2507 = vmatprep.subr.bf16.mxu0 0
      %2508 = vmatpush1.bf16.msra.mxu0 %v2446
      %2509 = vmatprep.subr.bf16.mxu0 0
      %2510 = vmatpush1.bf16.msra.mxu0 %v2447
      %2511 = vmatprep.subr.bf16.mxu0 0
      %2512 = vmatpush1.bf16.msra.mxu0 %v2448
      %2513 = vmatprep.mubr.bf16.mxu0 %v2241
      %2514 = vmatmul.mubr.bf16.gmra.mrb[0].mxu0 %v2240
      %v2515 = vpop.f32.mrb[0].mxu0
      %v2516 = vadd.f32 0.0, %v2515
      %v2517 = vpop.f32.mrb[0].mxu0
      %v2518 = vpop.f32.mrb[0].mxu0
      %v2519 = vadd.f32 0.0, %v2518
      %v2520 = vpop.f32.mrb[0].mxu0
      %2521 = vmatprep.mubr.bf16.mxu0 %v2244
      %2522 = vmatmul.mubr.bf16.gmra.mrb[0].mxu0 %v2243
      %v2523 = vpop.f32.mrb[0].mxu0
      %v2524 = vadd.f32 0.0, %v2523
      %v2525 = vpop.f32.mrb[0].mxu0
      %v2526 = vpop.f32.mrb[0].mxu0
      %v2527 = vadd.f32 0.0, %v2526
      %v2528 = vpop.f32.mrb[0].mxu0
      %2529 = vmatprep.mubr.bf16.mxu0 %v2247
      %2530 = vmatmul.mubr.bf16.gmra.mrb[0].mxu0 %v2246
      %v2531 = vpop.f32.mrb[0].mxu0
      %v2532 = vadd.f32 0.0, %v2531
      %v2533 = vpop.f32.mrb[0].mxu0
      %v2534 = vpop.f32.mrb[0].mxu0
      %v2535 = vadd.f32 0.0, %v2534
      %v2536 = vpop.f32.mrb[0].mxu0
      %2537 = vmatprep.mubr.bf16.mxu0 %v2250
      %2538 = vmatmul.mubr.bf16.gmra.mrb[0].mxu0 %v2249
      %v2539 = vpop.f32.mrb[0].mxu0
      %v2540 = vadd.f32 0.0, %v2539
      %v2541 = vpop.f32.mrb[0].mxu0
      %v2542 = vpop.f32.mrb[0].mxu0
      %v2543 = vadd.f32 0.0, %v2542
      %v2544 = vpop.f32.mrb[0].mxu0
      %2545 = vmatprep.mubr.bf16.mxu0 %v2253
      %2546 = vmatmul.mubr.bf16.gmra.mrb[0].mxu0 %v2252
      %v2547 = vpop.f32.mrb[0].mxu0
      %v2548 = vadd.f32 0.0, %v2547
      %v2549 = vpop.f32.mrb[0].mxu0
      %v2550 = vpop.f32.mrb[0].mxu0
      %v2551 = vadd.f32 0.0, %v2550
      %v2552 = vpop.f32.mrb[0].mxu0
      %2553 = vmatprep.mubr.bf16.mxu0 %v2256
      %2554 = vmatmul.mubr.bf16.gmra.mrb[0].mxu0 %v2255
      %v2555 = vpop.f32.mrb[0].mxu0
      %v2556 = vadd.f32 0.0, %v2555
      %v2557 = vpop.f32.mrb[0].mxu0
      %v2558 = vpop.f32.mrb[0].mxu0
      %v2559 = vadd.f32 0.0, %v2558
      %v2560 = vpop.f32.mrb[0].mxu0
      %2561 = vmatprep.mubr.bf16.mxu0 %v2259
      %2562 = vmatmul.mubr.bf16.gmra.mrb[0].mxu0 %v2258
      %v2563 = vpop.f32.mrb[0].mxu0
      %v2564 = vadd.f32 0.0, %v2563
      %v2565 = vpop.f32.mrb[0].mxu0
      %v2566 = vpop.f32.mrb[0].mxu0
      %v2567 = vadd.f32 0.0, %v2566
      %v2568 = vpop.f32.mrb[0].mxu0
      %2569 = vmatprep.mubr.bf16.mxu0 %v2262
      %2570 = vmatmul.mubr.bf16.gmra.mrb[0].mxu0 %v2261
      %v2571 = vpop.f32.mrb[0].mxu0
      %v2572 = vadd.f32 0.0, %v2571
      %v2573 = vpop.f32.mrb[0].mxu0
      %v2574 = vpop.f32.mrb[0].mxu0
      %v2575 = vadd.f32 0.0, %v2574
      %v2576 = vpop.f32.mrb[0].mxu0
      %2577 = vmatprep.mubr.bf16.mxu0 %v2265
      %2578 = vmatmul.mubr.bf16.gmra.mrb[0].mxu0 %v2264
      %v2579 = vpop.f32.mrb[0].mxu0
      %v2580 = vadd.f32 0.0, %v2579
      %v2581 = vpop.f32.mrb[0].mxu0
      %v2582 = vpop.f32.mrb[0].mxu0
      %v2583 = vadd.f32 0.0, %v2582
      %v2584 = vpop.f32.mrb[0].mxu0
      %2585 = vmatprep.mubr.bf16.mxu0 %v2268
      %2586 = vmatmul.mubr.bf16.gmra.mrb[0].mxu0 %v2267
      %v2587 = vpop.f32.mrb[0].mxu0
      %v2588 = vadd.f32 0.0, %v2587
      %v2589 = vpop.f32.mrb[0].mxu0
      %v2590 = vpop.f32.mrb[0].mxu0
      %v2591 = vadd.f32 0.0, %v2590
      %v2592 = vpop.f32.mrb[0].mxu0
      %2593 = vmatprep.mubr.bf16.mxu0 %v2271
      %2594 = vmatmul.mubr.bf16.gmra.mrb[0].mxu0 %v2270
      %v2595 = vpop.f32.mrb[0].mxu0
      %v2596 = vadd.f32 0.0, %v2595
      %v2597 = vpop.f32.mrb[0].mxu0
      %v2598 = vpop.f32.mrb[0].mxu0
      %v2599 = vadd.f32 0.0, %v2598
      %v2600 = vpop.f32.mrb[0].mxu0
      %2601 = vmatprep.mubr.bf16.mxu0 %v2274
      %2602 = vmatmul.mubr.bf16.gmra.mrb[0].mxu0 %v2273
      %v2603 = vpop.f32.mrb[0].mxu0
      %v2604 = vadd.f32 0.0, %v2603
      %v2605 = vpop.f32.mrb[0].mxu0
      %v2606 = vpop.f32.mrb[0].mxu0
      %v2607 = vadd.f32 0.0, %v2606
      %v2608 = vpop.f32.mrb[0].mxu0
      %2609 = vmatprep.mubr.bf16.mxu0 %v2277
      %2610 = vmatmul.mubr.bf16.gmra.mrb[0].mxu0 %v2276
      %v2611 = vpop.f32.mrb[0].mxu0
      %v2612 = vadd.f32 0.0, %v2611
      %v2613 = vpop.f32.mrb[0].mxu0
      %v2614 = vpop.f32.mrb[0].mxu0
      %v2615 = vadd.f32 0.0, %v2614
      %v2616 = vpop.f32.mrb[0].mxu0
      %2617 = vmatprep.mubr.bf16.mxu0 %v2280
      %2618 = vmatmul.mubr.bf16.gmra.mrb[0].mxu0 %v2279
      %v2619 = vpop.f32.mrb[0].mxu0
      %v2620 = vadd.f32 0.0, %v2619
      %v2621 = vpop.f32.mrb[0].mxu0
      %v2622 = vpop.f32.mrb[0].mxu0
      %v2623 = vadd.f32 0.0, %v2622
      %v2624 = vpop.f32.mrb[0].mxu0
      %2625 = vmatprep.mubr.bf16.mxu0 %v2283
      %2626 = vmatmul.mubr.bf16.gmra.mrb[0].mxu0 %v2282
      %v2627 = vpop.f32.mrb[0].mxu0
      %v2628 = vadd.f32 0.0, %v2627
      %v2629 = vpop.f32.mrb[0].mxu0
      %v2630 = vpop.f32.mrb[0].mxu0
      %v2631 = vadd.f32 0.0, %v2630
      %v2632 = vpop.f32.mrb[0].mxu0
      %2633 = vmatprep.mubr.bf16.mxu0 %v2286
      %2634 = vmatmul.mubr.bf16.gmra.mrb[0].mxu0 %v2285
      %v2635 = vpop.f32.mrb[0].mxu0
      %v2636 = vadd.f32 0.0, %v2635
      %v2637 = vpop.f32.mrb[0].mxu0
      %v2638 = vpop.f32.mrb[0].mxu0
      %v2639 = vadd.f32 0.0, %v2638
      %v2640 = vpop.f32.mrb[0].mxu0
      %2641 = vdwg.mxu0
      %2642 = vmatprep.subr.bf16.mxu0 0
      %2643 = vmatpush1.bf16.msra.mxu0 %v2449
      %2644 = vmatprep.subr.bf16.mxu0 0
      %2645 = vmatpush1.bf16.msra.mxu0 %v2450
      %2646 = vmatprep.subr.bf16.mxu0 0
      %2647 = vmatpush1.bf16.msra.mxu0 %v2451
      %2648 = vmatprep.subr.bf16.mxu0 0
      %2649 = vmatpush1.bf16.msra.mxu0 %v2452
      %2650 = vmatprep.subr.bf16.mxu0 0
      %2651 = vmatpush1.bf16.msra.mxu0 %v2453
      %2652 = vmatprep.subr.bf16.mxu0 0
      %2653 = vmatpush1.bf16.msra.mxu0 %v2454
      %2654 = vmatprep.subr.bf16.mxu0 0
      %2655 = vmatpush1.bf16.msra.mxu0 %v2455
      %2656 = vmatprep.subr.bf16.mxu0 0
      %2657 = vmatpush1.bf16.msra.mxu0 %v2456
      %2658 = vmatprep.subr.bf16.mxu0 0
      %2659 = vmatpush1.bf16.msra.mxu0 0
      %2660 = vmatprep.subr.bf16.mxu0 0
      %2661 = vmatpush1.bf16.msra.mxu0 0
      %2662 = vmatprep.subr.bf16.mxu0 0
      %2663 = vmatpush1.bf16.msra.mxu0 0
      %2664 = vmatprep.subr.bf16.mxu0 0
      %2665 = vmatpush1.bf16.msra.mxu0 0
      %2666 = vmatprep.subr.bf16.mxu0 0
      %2667 = vmatpush1.bf16.msra.mxu0 0
      %2668 = vmatprep.subr.bf16.mxu0 0
      %2669 = vmatpush1.bf16.msra.mxu0 0
      %2670 = vmatprep.subr.bf16.mxu0 0
      %2671 = vmatpush1.bf16.msra.mxu0 0
      %2672 = vmatprep.subr.bf16.mxu0 0
      %2673 = vmatpush1.bf16.msra.mxu0 0
      %2674 = vmatprep.mubr.bf16.mxu0 0
      %2675 = vmatmul.mubr.bf16.gmra.mrb[0].mxu0 %v2242
      %v2676 = vpop.f32.mrb[0].mxu0
      %v2677 = vadd.f32 %v2516, %v2676
      %v2678 = vpop.f32.mrb[0].mxu0
      %v2679 = vpop.f32.mrb[0].mxu0
      %v2680 = vadd.f32 %v2519, %v2679
      %v2681 = vpop.f32.mrb[0].mxu0
      %2682 = vmatprep.mubr.bf16.mxu0 0
      %2683 = vmatmul.mubr.bf16.gmra.mrb[0].mxu0 %v2245
      %v2684 = vpop.f32.mrb[0].mxu0
      %v2685 = vadd.f32 %v2524, %v2684
      %v2686 = vpop.f32.mrb[0].mxu0
      %v2687 = vpop.f32.mrb[0].mxu0
      %v2688 = vadd.f32 %v2527, %v2687
      %v2689 = vpop.f32.mrb[0].mxu0
      %2690 = vmatprep.mubr.bf16.mxu0 0
      %2691 = vmatmul.mubr.bf16.gmra.mrb[0].mxu0 %v2248
      %v2692 = vpop.f32.mrb[0].mxu0
      %v2693 = vadd.f32 %v2532, %v2692
      %v2694 = vpop.f32.mrb[0].mxu0
      %v2695 = vpop.f32.mrb[0].mxu0
      %v2696 = vadd.f32 %v2535, %v2695
      %v2697 = vpop.f32.mrb[0].mxu0
      %2698 = vmatprep.mubr.bf16.mxu0 0
      %2699 = vmatmul.mubr.bf16.gmra.mrb[0].mxu0 %v2251
      %v2700 = vpop.f32.mrb[0].mxu0
      %v2701 = vadd.f32 %v2540, %v2700
      %v2702 = vpop.f32.mrb[0].mxu0
      %v2703 = vpop.f32.mrb[0].mxu0
      %v2704 = vadd.f32 %v2543, %v2703
      %v2705 = vpop.f32.mrb[0].mxu0
      %2706 = vmatprep.mubr.bf16.mxu0 0
      %2707 = vmatmul.mubr.bf16.gmra.mrb[0].mxu0 %v2254
      %v2708 = vpop.f32.mrb[0].mxu0
      %v2709 = vadd.f32 %v2548, %v2708
      %v2710 = vpop.f32.mrb[0].mxu0
      %v2711 = vpop.f32.mrb[0].mxu0
      %v2712 = vadd.f32 %v2551, %v2711
      %v2713 = vpop.f32.mrb[0].mxu0
      %2714 = vmatprep.mubr.bf16.mxu0 0
      %2715 = vmatmul.mubr.bf16.gmra.mrb[0].mxu0 %v2257
      %v2716 = vpop.f32.mrb[0].mxu0
      %v2717 = vadd.f32 %v2556, %v2716
      %v2718 = vpop.f32.mrb[0].mxu0
      %v2719 = vpop.f32.mrb[0].mxu0
      %v2720 = vadd.f32 %v2559, %v2719
      %v2721 = vpop.f32.mrb[0].mxu0
      %2722 = vmatprep.mubr.bf16.mxu0 0
      %2723 = vmatmul.mubr.bf16.gmra.mrb[0].mxu0 %v2260
      %v2724 = vpop.f32.mrb[0].mxu0
      %v2725 = vadd.f32 %v2564, %v2724
      %v2726 = vpop.f32.mrb[0].mxu0
      %v2727 = vpop.f32.mrb[0].mxu0
      %v2728 = vadd.f32 %v2567, %v2727
      %v2729 = vpop.f32.mrb[0].mxu0
      %2730 = vmatprep.mubr.bf16.mxu0 0
      %2731 = vmatmul.mubr.bf16.gmra.mrb[0].mxu0 %v2263
      %v2732 = vpop.f32.mrb[0].mxu0
      %v2733 = vadd.f32 %v2572, %v2732
      %v2734 = vpop.f32.mrb[0].mxu0
      %v2735 = vpop.f32.mrb[0].mxu0
      %v2736 = vadd.f32 %v2575, %v2735
      %v2737 = vpop.f32.mrb[0].mxu0
      %2738 = vmatprep.mubr.bf16.mxu0 0
      %2739 = vmatmul.mubr.bf16.gmra.mrb[0].mxu0 %v2266
      %v2740 = vpop.f32.mrb[0].mxu0
      %v2741 = vadd.f32 %v2580, %v2740
      %v2742 = vpop.f32.mrb[0].mxu0
      %v2743 = vpop.f32.mrb[0].mxu0
      %v2744 = vadd.f32 %v2583, %v2743
      %v2745 = vpop.f32.mrb[0].mxu0
      %2746 = vmatprep.mubr.bf16.mxu0 0
      %2747 = vmatmul.mubr.bf16.gmra.mrb[0].mxu0 %v2269
      %v2748 = vpop.f32.mrb[0].mxu0
      %v2749 = vadd.f32 %v2588, %v2748
      %v2750 = vpop.f32.mrb[0].mxu0
      %v2751 = vpop.f32.mrb[0].mxu0
      %v2752 = vadd.f32 %v2591, %v2751
      %v2753 = vpop.f32.mrb[0].mxu0
      %2754 = vmatprep.mubr.bf16.mxu0 0
      %2755 = vmatmul.mubr.bf16.gmra.mrb[0].mxu0 %v2272
      %v2756 = vpop.f32.mrb[0].mxu0
      %v2757 = vadd.f32 %v2596, %v2756
      %v2758 = vpop.f32.mrb[0].mxu0
      %v2759 = vpop.f32.mrb[0].mxu0
      %v2760 = vadd.f32 %v2599, %v2759
      %v2761 = vpop.f32.mrb[0].mxu0
      %2762 = vmatprep.mubr.bf16.mxu0 0
      %2763 = vmatmul.mubr.bf16.gmra.mrb[0].mxu0 %v2275
      %v2764 = vpop.f32.mrb[0].mxu0
      %v2765 = vadd.f32 %v2604, %v2764
      %v2766 = vpop.f32.mrb[0].mxu0
      %v2767 = vpop.f32.mrb[0].mxu0
      %v2768 = vadd.f32 %v2607, %v2767
      %v2769 = vpop.f32.mrb[0].mxu0
      %2770 = vmatprep.mubr.bf16.mxu0 0
      %2771 = vmatmul.mubr.bf16.gmra.mrb[0].mxu0 %v2278
      %v2772 = vpop.f32.mrb[0].mxu0
      %v2773 = vadd.f32 %v2612, %v2772
      %v2774 = vpop.f32.mrb[0].mxu0
      %v2775 = vpop.f32.mrb[0].mxu0
      %v2776 = vadd.f32 %v2615, %v2775
      %v2777 = vpop.f32.mrb[0].mxu0
      %2778 = vmatprep.mubr.bf16.mxu0 0
      %2779 = vmatmul.mubr.bf16.gmra.mrb[0].mxu0 %v2281
      %v2780 = vpop.f32.mrb[0].mxu0
      %v2781 = vadd.f32 %v2620, %v2780
      %v2782 = vpop.f32.mrb[0].mxu0
      %v2783 = vpop.f32.mrb[0].mxu0
      %v2784 = vadd.f32 %v2623, %v2783
      %v2785 = vpop.f32.mrb[0].mxu0
      %2786 = vmatprep.mubr.bf16.mxu0 0
      %2787 = vmatmul.mubr.bf16.gmra.mrb[0].mxu0 %v2284
      %v2788 = vpop.f32.mrb[0].mxu0
      %v2789 = vadd.f32 %v2628, %v2788
      %v2790 = vpop.f32.mrb[0].mxu0
      %v2791 = vpop.f32.mrb[0].mxu0
      %v2792 = vadd.f32 %v2631, %v2791
      %v2793 = vpop.f32.mrb[0].mxu0
      %2794 = vmatprep.mubr.bf16.mxu0 0
      %2795 = vmatmul.mubr.bf16.gmra.mrb[0].mxu0 %v2287
      %v2796 = vpop.f32.mrb[0].mxu0
      %v2797 = vadd.f32 %v2636, %v2796
      %v2798 = vpop.f32.mrb[0].mxu0
      %v2799 = vpop.f32.mrb[0].mxu0
      %v2800 = vadd.f32 %v2639, %v2799
      %v2801 = vpop.f32.mrb[0].mxu0
      %2802 = vdwg.mxu0
      %v2803 = vadd.f32 %v2113, %v2677
      %v2804 = vadd.f32 %v2116, %v2680
      %v2805 = vadd.f32 %v2121, %v2685
      %v2806 = vadd.f32 %v2124, %v2688
      %v2807 = vadd.f32 %v2129, %v2693
      %v2808 = vadd.f32 %v2132, %v2696
      %v2809 = vadd.f32 %v2137, %v2701
      %v2810 = vadd.f32 %v2140, %v2704
      %v2811 = vadd.f32 %v2145, %v2709
      %v2812 = vadd.f32 %v2148, %v2712
      %v2813 = vadd.f32 %v2153, %v2717
      %v2814 = vadd.f32 %v2156, %v2720
      %v2815 = vadd.f32 %v2161, %v2725
      %v2816 = vadd.f32 %v2164, %v2728
      %v2817 = vadd.f32 %v2169, %v2733
      %v2818 = vadd.f32 %v2172, %v2736
      %v2819 = vadd.f32 %v2177, %v2741
      %v2820 = vadd.f32 %v2180, %v2744
      %v2821 = vadd.f32 %v2185, %v2749
      %v2822 = vadd.f32 %v2188, %v2752
      %v2823 = vadd.f32 %v2193, %v2757
      %v2824 = vadd.f32 %v2196, %v2760
      %v2825 = vadd.f32 %v2201, %v2765
      %v2826 = vadd.f32 %v2204, %v2768
      %v2827 = vadd.f32 %v2209, %v2773
      %v2828 = vadd.f32 %v2212, %v2776
      %v2829 = vadd.f32 %v2217, %v2781
      %v2830 = vadd.f32 %v2220, %v2784
      %v2831 = vadd.f32 %v2225, %v2789
      %v2832 = vadd.f32 %v2228, %v2792
      %v2833 = vadd.f32 %v2233, %v2797
      %v2834 = vadd.f32 %v2236, %v2800
      %v2836 = vlaneseq
      %v2837 = vshrl.u32 %v2836, 7
      %v2838 = vsub.s32 0, %v2837
      %v2839 = vrot.slane %v1112, %v2838
      %v2841 = vadd.f32 %v2803, %v2839
      %v2842 = vadd.f32 %v2804, %v2839
      %v2843 = vadd.f32 %v2805, %v2839
      %v2844 = vadd.f32 %v2806, %v2839
      %v2845 = vadd.f32 %v2807, %v2839
      %v2846 = vadd.f32 %v2808, %v2839
      %v2847 = vadd.f32 %v2809, %v2839
      %v2848 = vadd.f32 %v2810, %v2839
      %v2849 = vadd.f32 %v2811, %v2839
      %v2850 = vadd.f32 %v2812, %v2839
      %v2851 = vadd.f32 %v2813, %v2839
      %v2852 = vadd.f32 %v2814, %v2839
      %v2853 = vadd.f32 %v2815, %v2839
      %v2854 = vadd.f32 %v2816, %v2839
      %v2855 = vadd.f32 %v2817, %v2839
      %v2856 = vadd.f32 %v2818, %v2839
      %v2857 = vadd.f32 %v2819, %v2839
      %v2858 = vadd.f32 %v2820, %v2839
      %v2859 = vadd.f32 %v2821, %v2839
      %v2860 = vadd.f32 %v2822, %v2839
      %v2861 = vadd.f32 %v2823, %v2839
      %v2862 = vadd.f32 %v2824, %v2839
      %v2863 = vadd.f32 %v2825, %v2839
      %v2864 = vadd.f32 %v2826, %v2839
      %v2865 = vadd.f32 %v2827, %v2839
      %v2866 = vadd.f32 %v2828, %v2839
      %v2867 = vadd.f32 %v2829, %v2839
      %v2868 = vadd.f32 %v2830, %v2839
      %v2869 = vadd.f32 %v2831, %v2839
      %v2870 = vadd.f32 %v2832, %v2839
      %v2871 = vadd.f32 %v2833, %v2839
      %v2872 = vadd.f32 %v2834, %v2839
      %v2873 = vmax.f32 %v2841, 0.0
      %v2874 = vmax.f32 %v2842, 0.0
      %v2875 = vmax.f32 %v2843, 0.0
      %v2876 = vmax.f32 %v2844, 0.0
      %v2877 = vmax.f32 %v2845, 0.0
      %v2878 = vmax.f32 %v2846, 0.0
      %v2879 = vmax.f32 %v2847, 0.0
      %v2880 = vmax.f32 %v2848, 0.0
      %v2881 = vmax.f32 %v2849, 0.0
      %v2882 = vmax.f32 %v2850, 0.0
      %v2883 = vmax.f32 %v2851, 0.0
      %v2884 = vmax.f32 %v2852, 0.0
      %v2885 = vmax.f32 %v2853, 0.0
      %v2886 = vmax.f32 %v2854, 0.0
      %v2887 = vmax.f32 %v2855, 0.0
      %v2888 = vmax.f32 %v2856, 0.0
      %v2889 = vmax.f32 %v2857, 0.0
      %v2890 = vmax.f32 %v2858, 0.0
      %v2891 = vmax.f32 %v2859, 0.0
      %v2892 = vmax.f32 %v2860, 0.0
      %v2893 = vmax.f32 %v2861, 0.0
      %v2894 = vmax.f32 %v2862, 0.0
      %v2895 = vmax.f32 %v2863, 0.0
      %v2896 = vmax.f32 %v2864, 0.0
      %v2897 = vmax.f32 %v2865, 0.0
      %v2898 = vmax.f32 %v2866, 0.0
      %v2899 = vmax.f32 %v2867, 0.0
      %v2900 = vmax.f32 %v2868, 0.0
      %v2901 = vmax.f32 %v2869, 0.0
      %v2902 = vmax.f32 %v2870, 0.0
      %v2903 = vmax.f32 %v2871, 0.0
      %v2904 = vmax.f32 %v2872, 0.0
      %v2905 = vpack.c.bf16 %v2874, %v2873
      %v2906 = vpack.c.bf16 %v2876, %v2875
      %v2907 = vpack.c.bf16 %v2878, %v2877
      %v2908 = vpack.c.bf16 %v2880, %v2879
      %v2909 = vpack.c.bf16 %v2882, %v2881
      %v2910 = vpack.c.bf16 %v2884, %v2883
      %v2911 = vpack.c.bf16 %v2886, %v2885
      %v2912 = vpack.c.bf16 %v2888, %v2887
      %v2913 = vpack.c.bf16 %v2890, %v2889
      %v2914 = vpack.c.bf16 %v2892, %v2891
      %v2915 = vpack.c.bf16 %v2894, %v2893
      %v2916 = vpack.c.bf16 %v2896, %v2895
      %v2917 = vpack.c.bf16 %v2898, %v2897
      %v2918 = vpack.c.bf16 %v2900, %v2899
      %v2919 = vpack.c.bf16 %v2902, %v2901
      %v2920 = vpack.c.bf16 %v2904, %v2903
      %v2937 = vunpack.c.l.b16 %v2905
      %v2938 = vunpack.c.h.b16 %v2905
      %v2939 = vunpack.c.l.b16 %v2906
      %v2940 = vunpack.c.h.b16 %v2906
      %v2941 = vunpack.c.l.b16 %v2907
      %v2942 = vunpack.c.h.b16 %v2907
      %v2943 = vunpack.c.l.b16 %v2908
      %v2944 = vunpack.c.h.b16 %v2908
      %v2945 = vunpack.c.l.b16 %v2909
      %v2946 = vunpack.c.h.b16 %v2909
      %v2947 = vunpack.c.l.b16 %v2910
      %v2948 = vunpack.c.h.b16 %v2910
      %v2949 = vunpack.c.l.b16 %v2911
      %v2950 = vunpack.c.h.b16 %v2911
      %v2951 = vunpack.c.l.b16 %v2912
      %v2952 = vunpack.c.h.b16 %v2912
      %v2953 = vunpack.c.l.b16 %v2913
      %v2954 = vunpack.c.h.b16 %v2913
      %v2955 = vunpack.c.l.b16 %v2914
      %v2956 = vunpack.c.h.b16 %v2914
      %v2957 = vunpack.c.l.b16 %v2915
      %v2958 = vunpack.c.h.b16 %v2915
      %v2959 = vunpack.c.l.b16 %v2916
      %v2960 = vunpack.c.h.b16 %v2916
      %v2961 = vunpack.c.l.b16 %v2917
      %v2962 = vunpack.c.h.b16 %v2917
      %v2963 = vunpack.c.l.b16 %v2918
      %v2964 = vunpack.c.h.b16 %v2918
      %v2965 = vunpack.c.l.b16 %v2919
      %v2966 = vunpack.c.h.b16 %v2919
      %v2967 = vunpack.c.l.b16 %v2920
      %v2968 = vunpack.c.h.b16 %v2920
      %v2969 = vpack.c.b16 %v2937, %v2937
      %v2970 = vpack.c.b16 %v2938, %v2938
      %v2971 = vpack.c.b16 %v2939, %v2939
      %v2972 = vpack.c.b16 %v2940, %v2940
      %v2973 = vpack.c.b16 %v2941, %v2941
      %v2974 = vpack.c.b16 %v2942, %v2942
      %v2975 = vpack.c.b16 %v2943, %v2943
      %v2976 = vpack.c.b16 %v2944, %v2944
      %v2977 = vpack.c.b16 %v2945, %v2945
      %v2978 = vpack.c.b16 %v2946, %v2946
      %v2979 = vpack.c.b16 %v2947, %v2947
      %v2980 = vpack.c.b16 %v2948, %v2948
      %v2981 = vpack.c.b16 %v2949, %v2949
      %v2982 = vpack.c.b16 %v2950, %v2950
      %v2983 = vpack.c.b16 %v2951, %v2951
      %v2984 = vpack.c.b16 %v2952, %v2952
      %v2985 = vpack.c.b16 %v2953, %v2953
      %v2986 = vpack.c.b16 %v2954, %v2954
      %v2987 = vpack.c.b16 %v2955, %v2955
      %v2988 = vpack.c.b16 %v2956, %v2956
      %v2989 = vpack.c.b16 %v2957, %v2957
      %v2990 = vpack.c.b16 %v2958, %v2958
      %v2991 = vpack.c.b16 %v2959, %v2959
      %v2992 = vpack.c.b16 %v2960, %v2960
      %v2993 = vpack.c.b16 %v2961, %v2961
      %v2994 = vpack.c.b16 %v2962, %v2962
      %v2995 = vpack.c.b16 %v2963, %v2963
      %v2996 = vpack.c.b16 %v2964, %v2964
      %v2997 = vpack.c.b16 %v2965, %v2965
      %v2998 = vpack.c.b16 %v2966, %v2966
      %v2999 = vpack.c.b16 %v2967, %v2967
      %v3000 = vpack.c.b16 %v2968, %v2968
      %3033 = vst [vmem:[%s204] sm:$0xf] %v2969
      %3034 = vst [vmem:[%s204 + $0x4] sm:$0xf] %v2970
      %3035 = vst [vmem:[%s204 + $0x8] sm:$0xf] %v2971
      %3036 = vst [vmem:[%s204 + $0xc] sm:$0xf] %v2972
      %3037 = vst [vmem:[%s204 + $0x10] sm:$0xf] %v2973
      %3038 = vst [vmem:[%s204 + $0x14] sm:$0xf] %v2974
      %3039 = vst [vmem:[%s204 + $0x18] sm:$0xf] %v2975
      %3040 = vst [vmem:[%s204 + $0x1c] sm:$0xf] %v2976
      %3041 = vst [vmem:[%s204 + $0x20] sm:$0xf] %v2977
      %3042 = vst [vmem:[%s204 + $0x24] sm:$0xf] %v2978
      %3043 = vst [vmem:[%s204 + $0x28] sm:$0xf] %v2979
      %3044 = vst [vmem:[%s204 + $0x2c] sm:$0xf] %v2980
      %3045 = vst [vmem:[%s204 + $0x30] sm:$0xf] %v2981
      %3046 = vst [vmem:[%s204 + $0x34] sm:$0xf] %v2982
      %3047 = vst [vmem:[%s204 + $0x38] sm:$0xf] %v2983
      %3048 = vst [vmem:[%s204 + $0x3c] sm:$0xf] %v2984
      %3049 = vst [vmem:[%s204 + $0x40] sm:$0xf] %v2985
      %3050 = vst [vmem:[%s204 + $0x44] sm:$0xf] %v2986
      %3051 = vst [vmem:[%s204 + $0x48] sm:$0xf] %v2987
      %3052 = vst [vmem:[%s204 + $0x4c] sm:$0xf] %v2988
      %3053 = vst [vmem:[%s204 + $0x50] sm:$0xf] %v2989
      %3054 = vst [vmem:[%s204 + $0x54] sm:$0xf] %v2990
      %3055 = vst [vmem:[%s204 + $0x58] sm:$0xf] %v2991
      %3056 = vst [vmem:[%s204 + $0x5c] sm:$0xf] %v2992
      %3057 = vst [vmem:[%s204 + $0x60] sm:$0xf] %v2993
      %3058 = vst [vmem:[%s204 + $0x64] sm:$0xf] %v2994
      %3059 = vst [vmem:[%s204 + $0x68] sm:$0xf] %v2995
      %3060 = vst [vmem:[%s204 + $0x6c] sm:$0xf] %v2996
      %3061 = vst [vmem:[%s204 + $0x70] sm:$0xf] %v2997
      %3062 = vst [vmem:[%s204 + $0x74] sm:$0xf] %v2998
      %3063 = vst [vmem:[%s204 + $0x78] sm:$0xf] %v2999
      %3064 = vst [vmem:[%s204 + $0x7c] sm:$0xf] %v3000
      %v3065 = vadd.f32 %v2873, %v2874
      %v3066 = vadd.f32 %v3065, %v2875
      %v3067 = vadd.f32 %v3066, %v2876
      %v3068 = vadd.f32 %v3067, %v2877
      %v3069 = vadd.f32 %v3068, %v2878
      %v3070 = vadd.f32 %v3069, %v2879
      %v3071 = vadd.f32 %v3070, %v2880
      %v3072 = vadd.f32 %v3071, %v2881
      %v3073 = vadd.f32 %v3072, %v2882
      %v3074 = vadd.f32 %v3073, %v2883
      %v3075 = vadd.f32 %v3074, %v2884
      %v3076 = vadd.f32 %v3075, %v2885
      %v3077 = vadd.f32 %v3076, %v2886
      %v3078 = vadd.f32 %v3077, %v2887
      %v3079 = vadd.f32 %v3078, %v2888
      %v3080 = vadd.f32 %v3079, %v2889
      %v3081 = vadd.f32 %v3080, %v2890
      %v3082 = vadd.f32 %v3081, %v2891
      %v3083 = vadd.f32 %v3082, %v2892
      %v3084 = vadd.f32 %v3083, %v2893
      %v3085 = vadd.f32 %v3084, %v2894
      %v3086 = vadd.f32 %v3085, %v2895
      %v3087 = vadd.f32 %v3086, %v2896
      %v3088 = vadd.f32 %v3087, %v2897
      %v3089 = vadd.f32 %v3088, %v2898
      %v3090 = vadd.f32 %v3089, %v2899
      %v3091 = vadd.f32 %v3090, %v2900
      %v3092 = vadd.f32 %v3091, %v2901
      %v3093 = vadd.f32 %v3092, %v2902
      %v3094 = vadd.f32 %v3093, %v2903
      %v3095 = vadd.f32 %v3094, %v2904
      %v3096 = vrot.slane %v3095, 4
      %v3097 = vadd.f32 %v3095, %v3096
      %v3098 = vrot.slane %v3097, 2
      %v3099 = vadd.f32 %v3097, %v3098
      %v3100 = vrot.slane %v3099, 1
      %v3101 = vadd.f32 %v3099, %v3100
      %v3102 = vadd.f32 %v3101, 0.0
      %v3103 = vmul.f32 %v2873, %v2873
      %v3104 = vmul.f32 %v2874, %v2874
      %v3105 = vmul.f32 %v2875, %v2875
      %v3106 = vmul.f32 %v2876, %v2876
      %v3107 = vmul.f32 %v2877, %v2877
      %v3108 = vmul.f32 %v2878, %v2878
      %v3109 = vmul.f32 %v2879, %v2879
      %v3110 = vmul.f32 %v2880, %v2880
      %v3111 = vmul.f32 %v2881, %v2881
      %v3112 = vmul.f32 %v2882, %v2882
      %v3113 = vmul.f32 %v2883, %v2883
      %v3114 = vmul.f32 %v2884, %v2884
      %v3115 = vmul.f32 %v2885, %v2885
      %v3116 = vmul.f32 %v2886, %v2886
      %v3117 = vmul.f32 %v2887, %v2887
      %v3118 = vmul.f32 %v2888, %v2888
      %v3119 = vmul.f32 %v2889, %v2889
      %v3120 = vmul.f32 %v2890, %v2890
      %v3121 = vmul.f32 %v2891, %v2891
      %v3122 = vmul.f32 %v2892, %v2892
      %v3123 = vmul.f32 %v2893, %v2893
      %v3124 = vmul.f32 %v2894, %v2894
      %v3125 = vmul.f32 %v2895, %v2895
      %v3126 = vmul.f32 %v2896, %v2896
      %v3127 = vmul.f32 %v2897, %v2897
      %v3128 = vmul.f32 %v2898, %v2898
      %v3129 = vmul.f32 %v2899, %v2899
      %v3130 = vmul.f32 %v2900, %v2900
      %v3131 = vmul.f32 %v2901, %v2901
      %v3132 = vmul.f32 %v2902, %v2902
      %v3133 = vmul.f32 %v2903, %v2903
      %v3134 = vmul.f32 %v2904, %v2904
      %v3135 = vadd.f32 %v3103, %v3104
      %v3136 = vadd.f32 %v3135, %v3105
      %v3137 = vadd.f32 %v3136, %v3106
      %v3138 = vadd.f32 %v3137, %v3107
      %v3139 = vadd.f32 %v3138, %v3108
      %v3140 = vadd.f32 %v3139, %v3109
      %v3141 = vadd.f32 %v3140, %v3110
      %v3142 = vadd.f32 %v3141, %v3111
      %v3143 = vadd.f32 %v3142, %v3112
      %v3144 = vadd.f32 %v3143, %v3113
      %v3145 = vadd.f32 %v3144, %v3114
      %v3146 = vadd.f32 %v3145, %v3115
      %v3147 = vadd.f32 %v3146, %v3116
      %v3148 = vadd.f32 %v3147, %v3117
      %v3149 = vadd.f32 %v3148, %v3118
      %v3150 = vadd.f32 %v3149, %v3119
      %v3151 = vadd.f32 %v3150, %v3120
      %v3152 = vadd.f32 %v3151, %v3121
      %v3153 = vadd.f32 %v3152, %v3122
      %v3154 = vadd.f32 %v3153, %v3123
      %v3155 = vadd.f32 %v3154, %v3124
      %v3156 = vadd.f32 %v3155, %v3125
      %v3157 = vadd.f32 %v3156, %v3126
      %v3158 = vadd.f32 %v3157, %v3127
      %v3159 = vadd.f32 %v3158, %v3128
      %v3160 = vadd.f32 %v3159, %v3129
      %v3161 = vadd.f32 %v3160, %v3130
      %v3162 = vadd.f32 %v3161, %v3131
      %v3163 = vadd.f32 %v3162, %v3132
      %v3164 = vadd.f32 %v3163, %v3133
      %v3165 = vadd.f32 %v3164, %v3134
      %v3166 = vrot.slane %v3165, 4
      %v3167 = vadd.f32 %v3165, %v3166
      %v3168 = vrot.slane %v3167, 2
      %v3169 = vadd.f32 %v3167, %v3168
      %v3170 = vrot.slane %v3169, 1
      %v3171 = vadd.f32 %v3169, %v3170
      %v3172 = vadd.f32 %v3171, 0.0
      %vm3173 = vcmask 1040384
      %v3174 = vsel %vm3173, %v3102, %v3172
      %vm3175 = vcmask 1041408
      %v3176 = vsel %vm3175, %v3174, 0.0
      %3177 = vst [vmem:[%s208] sm:$0xff] %v3176
      %p3178 = scmp.lt.s32.totalorder %s16, 1
      %s3179 = scalar_select %p3178, %s16, 1
      %s3180 = smul.addr %s3179, 32
      %s3181 = smul.addr %s3180, 4
      %s3182 = scalar_lea.vmem %s3, %s3181
      %p3183 = scmp.lt.s32.totalorder %s16, 1
      %s3184 = scalar_select %p3183, %s16, 1
      %s3185 = smul.addr %s3184, 8
      %s3186 = scalar_lea.vmem %s4, %s3185
      // Predicated region
      $region33: #{unet_conv_block.3} parent=31 // pred_check
        %p3187 = pneg %p102
      $region34: #{unet_conv_block.3} parent=31 // pred_check_branch
        %3189 = sbr.rel (%p3187) target = $region36
      $region35: #{unet_conv_block.3} parent=31 // pred_region
        _
      $region36: #{unet_conv_block.3} parent=31 // pred_fallthru
        _
      // Predicated region
      $region37: #{unet_conv_block.3} parent=31 // pred_check
        %p3190 = pneg %p128
      $region38: #{unet_conv_block.3} parent=31 // pred_check_branch
        %3192 = sbr.rel (%p3190) target = $region40
      $region39: #{unet_conv_block.3} parent=31 // pred_region
        _
      $region40: #{unet_conv_block.3} parent=31 // pred_fallthru
        _
    $region32: #{unet_conv_block.3} parent=5 // pred_fallthru
      _
    %p3193 = scmp.le.s32.totalorder 2, %s11
    // Predicated region
    $region41: #{unet_conv_block.3} parent=5 // pred_check
      %p3194 = pneg %p3193
    $region42: #{unet_conv_block.3} parent=5 // pred_check_branch
      %3196 = sbr.rel (%p3194) target = $region44
    $region43: #{unet_conv_block.3} parent=5 // pred_region
      %s3197 = ssub.s32 %s11, 2
      // Predicated region
      $region45: #{unet_conv_block.3} parent=43 // pred_check
        %p3198 = pneg %p108
      $region46: #{unet_conv_block.3} parent=43 // pred_check_branch
        %3200 = sbr.rel (%p3198) target = $region48
      $region47: #{unet_conv_block.3} parent=43 // pred_region
        %p3201 = scmp.lt.s32.totalorder %s17, 1
        %s3202 = scalar_select %p3201, %s17, 1
        %s3203 = smul.addr %s3202, 32
        %s3204 = smul.addr %s3203, 4
        %s3205 = scalar_lea.vmem %s3, %s3204
      $region48: #{unet_conv_block.3} parent=43 // pred_fallthru
        _
      // Predicated region
      $region49: #{unet_conv_block.3} parent=43 // pred_check
        %p3206 = pneg %p134
      $region50: #{unet_conv_block.3} parent=43 // pred_check_branch
        %3208 = sbr.rel (%p3206) target = $region52
      $region51: #{unet_conv_block.3} parent=43 // pred_region
        %p3209 = scmp.lt.s32.totalorder %s17, 1
        %s3210 = scalar_select %p3209, %s17, 1
        %s3211 = smul.addr %s3210, 8
        %s3212 = scalar_lea.vmem %s4, %s3211
      $region52: #{unet_conv_block.3} parent=43 // pred_fallthru
        _
    $region44: #{unet_conv_block.3} parent=5 // pred_fallthru
      _
  $region6: #{unet_conv_block.3} parent=0 // loop_footer
    %s15 = sadd.s32 1, %s11
  $region7: #{unet_conv_block.3} parent=0 // loop_footer_branch
    %10 = sbr.rel target = $region3
  $region8: #{unet_conv_block.3} parent=0 // loop_exit
    _

</llo_original>
